<compile_context>
chip_gen: v5e
topology: v5e:2x2
jax: 0.10.0
libtpu: 0.0.40
codegen_flags: <defaults>
</compile_context>

<pallas_src>
import jax
import jax.numpy as jnp
from jax.experimental import pallas as pl
from jax.experimental.pallas import tpu as pltpu

INPUT_DIM = 784
HIDDEN_DIM = 400
LATENT_DIM = 20
LATENT_PAD = 128           # latent lanes padded to one full 128-lane tile
HEAD_DIM = 2 * LATENT_PAD  # fused mu|logvar head width (mu @ 0:20, logvar @ 128:148)
OUT_PAD = 896              # 784 -> 7*128 lane-dense recon output
TILE_B_MAX = 256           # batch rows per grid step (256 for v6e/v7x MXU)


def _round_up(x, m):
    return (x + m - 1) // m * m


def _vae_kernel(x_ref, w1_ref, b1_ref, wml_ref, bml_ref, w3_ref, b3_ref,
                w4_ref, b4_ref, eps_ref, recon_ref, ml_ref):
    # ---- encode: h = relu(x @ W1 + b1) ------------------------------------
    x = x_ref[...]                                              # bf16 [TB, 784]
    h = jnp.dot(x, w1_ref[...], preferred_element_type=jnp.float32) + b1_ref[...]
    h = jnp.maximum(h, 0.0)

    # ---- fused mu|logvar head (one matmul, lane-dense output) -------------
    ml = jnp.dot(h.astype(jnp.bfloat16), wml_ref[...],
                 preferred_element_type=jnp.float32) + bml_ref[...]
    mu_p = ml[:, :LATENT_PAD]           # mu in cols 0:20, zeros elsewhere
    lv_p = ml[:, LATENT_PAD:]           # logvar in cols 0:20 of this tile

    # ---- reparameterize: z = mu + eps * exp(0.5 * logvar) -----------------
    # padding lanes: mu=0, eps=0 -> z stays 0 there.
    z = mu_p + eps_ref[...] * jnp.exp(0.5 * lv_p)               # f32 [TB, 128]

    # ---- decode: sigmoid(relu(z @ W3 + b3) @ W4 + b4) ----------------------
    h2 = jnp.dot(z.astype(jnp.bfloat16), w3_ref[...],
                 preferred_element_type=jnp.float32) + b3_ref[...]
    h2 = jnp.maximum(h2, 0.0)
    logits = jnp.dot(h2.astype(jnp.bfloat16), w4_ref[...],
                     preferred_element_type=jnp.float32) + b4_ref[...]
    # sigmoid via EUP exp + EUP approx reciprocal (keeps VPU free)
    recon_ref[...] = pl.reciprocal(1.0 + jnp.exp(-logits), approx=True)

    ml_ref[...] = ml


def init_params(key, input_dim=INPUT_DIM, hidden_dim=HIDDEN_DIM,
                latent_dim=LATENT_DIM):
    """Deterministic init mimicking nn.Linear default (U[-1/sqrt(fan_in), ...])."""
    def linear(k, fan_in, fan_out):
        kw, kb = jax.random.split(k)
        bound = 1.0 / (fan_in ** 0.5)
        w = jax.random.uniform(kw, (fan_in, fan_out), jnp.float32, -bound, bound)
        b = jax.random.uniform(kb, (1, fan_out), jnp.float32, -bound, bound)
        return w, b

    k1, k2, k3, k4, k5 = jax.random.split(key, 5)
    params = {}
    params["w1"], params["b1"] = linear(k1, input_dim, hidden_dim)
    params["wmu"], params["bmu"] = linear(k2, hidden_dim, latent_dim)
    params["wlv"], params["blv"] = linear(k3, hidden_dim, latent_dim)
    params["w3"], params["b3"] = linear(k4, latent_dim, hidden_dim)
    params["w4"], params["b4"] = linear(k5, hidden_dim, input_dim)
    return params


def prepare_params(params):
    """Pack fp32 nn.Linear-style params into the padded/fused bf16 kernel layout.

    Do this once outside the kernel (and ideally once per training run)."""
    f32, bf16 = jnp.float32, jnp.bfloat16

    w1 = params["w1"].astype(bf16)                                    # [784, 400]
    b1 = params["b1"].astype(f32).reshape(1, HIDDEN_DIM)

    # fused mu|logvar head: mu -> cols [0:20], logvar -> cols [128:148]
    wml = jnp.zeros((HIDDEN_DIM, HEAD_DIM), f32)
    wml = wml.at[:, :LATENT_DIM].set(params["wmu"])
    wml = wml.at[:, LATENT_PAD:LATENT_PAD + LATENT_DIM].set(params["wlv"])
    bml = jnp.zeros((1, HEAD_DIM), f32)
    bml = bml.at[:, :LATENT_DIM].set(params["bmu"].reshape(1, -1))
    bml = bml.at[:, LATENT_PAD:LATENT_PAD + LATENT_DIM].set(params["blv"].reshape(1, -1))

    # decoder input layer: latent rows padded 20 -> 128 with zeros
    w3 = jnp.zeros((LATENT_PAD, HIDDEN_DIM), f32).at[:LATENT_DIM].set(params["w3"])
    b3 = params["b3"].astype(f32).reshape(1, HIDDEN_DIM)

    # output layer: 784 -> 896 lane-dense output columns (zero padded)
    w4 = jnp.zeros((HIDDEN_DIM, OUT_PAD), f32).at[:, :INPUT_DIM].set(params["w4"])
    b4 = jnp.zeros((1, OUT_PAD), f32).at[:, :INPUT_DIM].set(params["b4"].reshape(1, -1))

    return {"w1": w1, "b1": b1,
            "wml": wml.astype(bf16), "bml": bml,
            "w3": w3.astype(bf16), "b3": b3,
            "w4": w4.astype(bf16), "b4": b4}


def vae_forward(x, kparams, eps):
    """x: any shape flattening to (-1, 784) (e.g. NCHW (B,1,28,28)).
    kparams: output of prepare_params().
    eps: (B, LATENT_DIM) standard-normal noise (the randn_like draw, explicit).
    Returns (recon, mu, logvar) in float32."""
    x2d = x.reshape(-1, INPUT_DIM)
    batch = x2d.shape[0]

    tile_b = min(TILE_B_MAX, _round_up(max(batch, 1), 8))
    b_pad = _round_up(batch, tile_b)

    # pad batch + lanes; matmul inputs in bf16, elementwise inputs in f32
    xb = jnp.zeros((b_pad, INPUT_DIM), jnp.bfloat16)
    xb = xb.at[:batch].set(x2d.astype(jnp.bfloat16))
    eps_p = jnp.zeros((b_pad, LATENT_PAD), jnp.float32)
    eps_p = eps_p.at[:batch, :LATENT_DIM].set(eps.astype(jnp.float32))

    row = lambda b: (b, 0)     # batch-streamed blocks
    const = lambda b: (0, 0)   # VMEM-resident weights (same block every step)

    flops = 2 * b_pad * (INPUT_DIM * HIDDEN_DIM + HIDDEN_DIM * HEAD_DIM
                         + LATENT_PAD * HIDDEN_DIM + HIDDEN_DIM * OUT_PAD)
    transcendentals = b_pad * (LATENT_PAD + 2 * OUT_PAD)
    weight_bytes = sum(int(v.size) * (2 if v.dtype == jnp.bfloat16 else 4)
                       for v in kparams.values())
    bytes_accessed = (weight_bytes + xb.size * 2 + eps_p.size * 4
                      + b_pad * OUT_PAD * 4 + b_pad * HEAD_DIM * 4)

    recon_p, ml = pl.pallas_call(
        _vae_kernel,
        out_shape=(
            jax.ShapeDtypeStruct((b_pad, OUT_PAD), jnp.float32),
            jax.ShapeDtypeStruct((b_pad, HEAD_DIM), jnp.float32),
        ),
        grid=(b_pad // tile_b,),
        in_specs=[
            pl.BlockSpec((tile_b, INPUT_DIM), row),          # x
            pl.BlockSpec((INPUT_DIM, HIDDEN_DIM), const),    # w1
            pl.BlockSpec((1, HIDDEN_DIM), const),            # b1
            pl.BlockSpec((HIDDEN_DIM, HEAD_DIM), const),     # wml (fused mu|logvar)
            pl.BlockSpec((1, HEAD_DIM), const),              # bml
            pl.BlockSpec((LATENT_PAD, HIDDEN_DIM), const),   # w3 (latent-padded)
            pl.BlockSpec((1, HIDDEN_DIM), const),            # b3
            pl.BlockSpec((HIDDEN_DIM, OUT_PAD), const),      # w4 (lane-padded)
            pl.BlockSpec((1, OUT_PAD), const),               # b4
            pl.BlockSpec((tile_b, LATENT_PAD), row),         # eps
        ],
        out_specs=(
            pl.BlockSpec((tile_b, OUT_PAD), row),            # recon (lane-dense)
            pl.BlockSpec((tile_b, HEAD_DIM), row),           # mu|logvar (lane-dense)
        ),
        compiler_params=pltpu.CompilerParams(
            dimension_semantics=("parallel",)),
        cost_estimate=pl.CostEstimate(flops=flops,
                                      transcendentals=transcendentals,
                                      bytes_accessed=bytes_accessed),
    )(xb, kparams["w1"], kparams["b1"], kparams["wml"], kparams["bml"],
      kparams["w3"], kparams["b3"], kparams["w4"], kparams["b4"], eps_p)

    recon = recon_p[:batch, :INPUT_DIM]
    mu = ml[:batch, :LATENT_DIM]
    logvar = ml[:batch, LATENT_PAD:LATENT_PAD + LATENT_DIM]
    return recon, mu, logvar


def _reference_forward(x, params, eps):
    """Plain-JAX fp32 reference of the PyTorch forward (for sanity checking)."""
    x2d = x.reshape(-1, INPUT_DIM).astype(jnp.float32)
    h = jnp.maximum(x2d @ params["w1"] + params["b1"], 0.0)
    mu = h @ params["wmu"] + params["bmu"]
    logvar = h @ params["wlv"] + params["blv"]
    z = mu + eps * jnp.exp(0.5 * logvar)
    h2 = jnp.maximum(z @ params["w3"] + params["b3"], 0.0)
    recon = jax.nn.sigmoid(h2 @ params["w4"] + params["b4"])
    return recon, mu, logvar


if __name__ == "__main__":
    key = jax.random.PRNGKey(0)
    k_params, k_x, k_eps = jax.random.split(key, 3)

    batch = 8
    # NCHW image input, flattened inside the wrapper (x.view(-1, 784)).
    x = jax.random.normal(k_x, (batch, 1, 28, 28), dtype=jnp.float32)
    # eps is the randn_like draw of reparameterize(), made explicit/deterministic.
    eps = jax.random.normal(k_eps, (batch, LATENT_DIM), dtype=jnp.float32)

    params = init_params(k_params)
    kparams = prepare_params(params)

    recon, mu, logvar = vae_forward(x, kparams, eps)
    jax.block_until_ready((recon, mu, logvar))

    # correctness vs. fp32 reference (tolerance relaxed for bf16 matmuls +
    # approx reciprocal in the sigmoid, per review guidance)
    r_ref, mu_ref, lv_ref = _reference_forward(x, params, eps)
    assert recon.shape == (batch, INPUT_DIM)
    assert mu.shape == (batch, LATENT_DIM)
    assert logvar.shape == (batch, LATENT_DIM)
    assert jnp.allclose(mu, mu_ref, atol=5e-2, rtol=5e-2)
    assert jnp.allclose(logvar, lv_ref, atol=5e-2, rtol=5e-2)
    assert jnp.allclose(recon, r_ref, atol=5e-2, rtol=5e-2)

    print("KERNEL_OK")
</pallas_src>

<mosaic_0001>
module attributes {stable_mosaic.version = 11 : i64} {
  func.func @_vae_kernel(%arg0: i32, %arg1: memref<8x784xbf16, #tpu.memory_space<vmem>>, %arg2: memref<784x400xbf16, #tpu.memory_space<vmem>>, %arg3: memref<1x400xf32, #tpu.memory_space<vmem>>, %arg4: memref<400x256xbf16, #tpu.memory_space<vmem>>, %arg5: memref<1x256xf32, #tpu.memory_space<vmem>>, %arg6: memref<128x400xbf16, #tpu.memory_space<vmem>>, %arg7: memref<1x400xf32, #tpu.memory_space<vmem>>, %arg8: memref<400x896xbf16, #tpu.memory_space<vmem>>, %arg9: memref<1x896xf32, #tpu.memory_space<vmem>>, %arg10: memref<8x128xf32, #tpu.memory_space<vmem>>, %arg11: memref<8x896xf32, #tpu.memory_space<vmem>>, %arg12: memref<8x256xf32, #tpu.memory_space<vmem>>) attributes {dimension_semantics = [#tpu.dimension_semantics<parallel>], iteration_bounds = array<i64: 1>, scalar_prefetch = 0 : i64, scratch_operands = 0 : i64, tpu.core_type = #tpu.core_type<tc>, window_params = [{transform_indices = @transform_0, window_bounds = array<i64: 8, 784>}, {pipeline_mode = #tpu.pipeline_mode<synchronous>, transform_indices = @transform_1, window_bounds = array<i64: 784, 400>}, {pipeline_mode = #tpu.pipeline_mode<synchronous>, transform_indices = @transform_2, window_bounds = array<i64: 1, 400>}, {pipeline_mode = #tpu.pipeline_mode<synchronous>, transform_indices = @transform_3, window_bounds = array<i64: 400, 256>}, {pipeline_mode = #tpu.pipeline_mode<synchronous>, transform_indices = @transform_4, window_bounds = array<i64: 1, 256>}, {pipeline_mode = #tpu.pipeline_mode<synchronous>, transform_indices = @transform_5, window_bounds = array<i64: 128, 400>}, {pipeline_mode = #tpu.pipeline_mode<synchronous>, transform_indices = @transform_6, window_bounds = array<i64: 1, 400>}, {pipeline_mode = #tpu.pipeline_mode<synchronous>, transform_indices = @transform_7, window_bounds = array<i64: 400, 896>}, {pipeline_mode = #tpu.pipeline_mode<synchronous>, transform_indices = @transform_8, window_bounds = array<i64: 1, 896>}, {transform_indices = @transform_9, window_bounds = array<i64: 8, 128>}, {transform_indices = @transform_10, window_bounds = array<i64: 8, 896>}, {transform_indices = @transform_11, window_bounds = array<i64: 8, 256>}]} {
    %c0 = arith.constant 0 : index
    %c0_0 = arith.constant 0 : index
    %0 = vector.load %arg1[%c0, %c0_0] : memref<8x784xbf16, #tpu.memory_space<vmem>>, vector<8x784xbf16>
    %c0_1 = arith.constant 0 : index
    %c0_2 = arith.constant 0 : index
    %1 = vector.load %arg2[%c0_1, %c0_2] : memref<784x400xbf16, #tpu.memory_space<vmem>>, vector<784x400xbf16>
    %cst = arith.constant dense<0.000000e+00> : vector<8x400xf32>
    %2 = tpu.matmul %0, %1, %cst {dimension_numbers = #tpu.dot_dimension_numbers<[1], [0], [0], [1], [0, 0, 1, 1], [], []>} : vector<8x784xbf16>, vector<784x400xbf16>, vector<8x400xf32> -> vector<8x400xf32>
    %c0_3 = arith.constant 0 : index
    %c0_4 = arith.constant 0 : index
    %3 = vector.load %arg3[%c0_3, %c0_4] : memref<1x400xf32, #tpu.memory_space<vmem>>, vector<1x400xf32>
    %4 = vector.broadcast %3 : vector<1x400xf32> to vector<8x400xf32>
    %5 = arith.addf %2, %4 : vector<8x400xf32>
    %cst_5 = arith.constant 0.000000e+00 : f32
    %6 = vector.broadcast %cst_5 : f32 to vector<8x400xf32>
    %7 = arith.maximumf %5, %6 : vector<8x400xf32>
    %8 = arith.truncf %7 : vector<8x400xf32> to vector<8x400xbf16>
    %c0_6 = arith.constant 0 : index
    %c0_7 = arith.constant 0 : index
    %9 = vector.load %arg4[%c0_6, %c0_7] : memref<400x256xbf16, #tpu.memory_space<vmem>>, vector<400x256xbf16>
    %cst_8 = arith.constant dense<0.000000e+00> : vector<8x256xf32>
    %10 = tpu.matmul %8, %9, %cst_8 {dimension_numbers = #tpu.dot_dimension_numbers<[1], [0], [0], [1], [0, 0, 1, 1], [], []>} : vector<8x400xbf16>, vector<400x256xbf16>, vector<8x256xf32> -> vector<8x256xf32>
    %c0_9 = arith.constant 0 : index
    %c0_10 = arith.constant 0 : index
    %11 = vector.load %arg5[%c0_9, %c0_10] : memref<1x256xf32, #tpu.memory_space<vmem>>, vector<1x256xf32>
    %12 = vector.broadcast %11 : vector<1x256xf32> to vector<8x256xf32>
    %13 = arith.addf %10, %12 : vector<8x256xf32>
    %14 = vector.extract_strided_slice %13 {offsets = [0, 0], sizes = [8, 128], strides = [1, 1]} : vector<8x256xf32> to vector<8x128xf32>
    %15 = vector.extract_strided_slice %13 {offsets = [0, 128], sizes = [8, 128], strides = [1, 1]} : vector<8x256xf32> to vector<8x128xf32>
    %c0_11 = arith.constant 0 : index
    %c0_12 = arith.constant 0 : index
    %16 = vector.load %arg10[%c0_11, %c0_12] : memref<8x128xf32, #tpu.memory_space<vmem>>, vector<8x128xf32>
    %cst_13 = arith.constant 5.000000e-01 : f32
    %17 = vector.broadcast %cst_13 : f32 to vector<8x128xf32>
    %18 = arith.mulf %17, %15 : vector<8x128xf32>
    %19 = math.exp %18 : vector<8x128xf32>
    %20 = arith.mulf %16, %19 : vector<8x128xf32>
    %21 = arith.addf %14, %20 : vector<8x128xf32>
    %22 = arith.truncf %21 : vector<8x128xf32> to vector<8x128xbf16>
    %c0_14 = arith.constant 0 : index
    %c0_15 = arith.constant 0 : index
    %23 = vector.load %arg6[%c0_14, %c0_15] : memref<128x400xbf16, #tpu.memory_space<vmem>>, vector<128x400xbf16>
    %cst_16 = arith.constant dense<0.000000e+00> : vector<8x400xf32>
    %24 = tpu.matmul %22, %23, %cst_16 {dimension_numbers = #tpu.dot_dimension_numbers<[1], [0], [0], [1], [0, 0, 1, 1], [], []>} : vector<8x128xbf16>, vector<128x400xbf16>, vector<8x400xf32> -> vector<8x400xf32>
    %c0_17 = arith.constant 0 : index
    %c0_18 = arith.constant 0 : index
    %25 = vector.load %arg7[%c0_17, %c0_18] : memref<1x400xf32, #tpu.memory_space<vmem>>, vector<1x400xf32>
    %26 = vector.broadcast %25 : vector<1x400xf32> to vector<8x400xf32>
    %27 = arith.addf %24, %26 : vector<8x400xf32>
    %cst_19 = arith.constant 0.000000e+00 : f32
    %28 = vector.broadcast %cst_19 : f32 to vector<8x400xf32>
    %29 = arith.maximumf %27, %28 : vector<8x400xf32>
    %30 = arith.truncf %29 : vector<8x400xf32> to vector<8x400xbf16>
    %c0_20 = arith.constant 0 : index
    %c0_21 = arith.constant 0 : index
    %31 = vector.load %arg8[%c0_20, %c0_21] : memref<400x896xbf16, #tpu.memory_space<vmem>>, vector<400x896xbf16>
    %cst_22 = arith.constant dense<0.000000e+00> : vector<8x896xf32>
    %32 = tpu.matmul %30, %31, %cst_22 {dimension_numbers = #tpu.dot_dimension_numbers<[1], [0], [0], [1], [0, 0, 1, 1], [], []>} : vector<8x400xbf16>, vector<400x896xbf16>, vector<8x896xf32> -> vector<8x896xf32>
    %c0_23 = arith.constant 0 : index
    %c0_24 = arith.constant 0 : index
    %33 = vector.load %arg9[%c0_23, %c0_24] : memref<1x896xf32, #tpu.memory_space<vmem>>, vector<1x896xf32>
    %34 = vector.broadcast %33 : vector<1x896xf32> to vector<8x896xf32>
    %35 = arith.addf %32, %34 : vector<8x896xf32>
    %cst_25 = arith.constant 0.000000e+00 : f32
    %36 = vector.broadcast %cst_25 : f32 to vector<8x896xf32>
    %37 = arith.subf %36, %35 : vector<8x896xf32>
    %38 = math.exp %37 : vector<8x896xf32>
    %cst_26 = arith.constant 1.000000e+00 : f32
    %39 = vector.broadcast %cst_26 : f32 to vector<8x896xf32>
    %40 = arith.addf %39, %38 : vector<8x896xf32>
    %41 = tpu.reciprocal %40 {approx = true} : vector<8x896xf32> -> vector<8x896xf32>
    %c0_27 = arith.constant 0 : index
    %c0_28 = arith.constant 0 : index
    %42 = vector.load %arg11[%c0_27, %c0_28] : memref<8x896xf32, #tpu.memory_space<vmem>>, vector<8x896xf32>
    tpu.vector_store %arg11[%c0_27, %c0_28], %41 {strides = array<i32>} : memref<8x896xf32, #tpu.memory_space<vmem>>, vector<8x896xf32>,
    %c0_29 = arith.constant 0 : index
    %c0_30 = arith.constant 0 : index
    %43 = vector.load %arg12[%c0_29, %c0_30] : memref<8x256xf32, #tpu.memory_space<vmem>>, vector<8x256xf32>
    tpu.vector_store %arg12[%c0_29, %c0_30], %13 {strides = array<i32>} : memref<8x256xf32, #tpu.memory_space<vmem>>, vector<8x256xf32>,
    return
  }
  func.func @transform_0(%arg0: i32) -> (i32, i32) {
    %c0_i32 = arith.constant 0 : i32
    %c0_i32_0 = arith.constant 0 : i32
    return %arg0, %c0_i32 : i32, i32
  }
  func.func @transform_1(%arg0: i32) -> (i32, i32) {
    %c0_i32 = arith.constant 0 : i32
    %c0_i32_0 = arith.constant 0 : i32
    %c0_i32_1 = arith.constant 0 : i32
    return %c0_i32, %c0_i32_0 : i32, i32
  }
  func.func @transform_2(%arg0: i32) -> (i32, i32) {
    %c0_i32 = arith.constant 0 : i32
    %c0_i32_0 = arith.constant 0 : i32
    %c0_i32_1 = arith.constant 0 : i32
    return %c0_i32, %c0_i32_0 : i32, i32
  }
  func.func @transform_3(%arg0: i32) -> (i32, i32) {
    %c0_i32 = arith.constant 0 : i32
    %c0_i32_0 = arith.constant 0 : i32
    %c0_i32_1 = arith.constant 0 : i32
    return %c0_i32, %c0_i32_0 : i32, i32
  }
  func.func @transform_4(%arg0: i32) -> (i32, i32) {
    %c0_i32 = arith.constant 0 : i32
    %c0_i32_0 = arith.constant 0 : i32
    %c0_i32_1 = arith.constant 0 : i32
    return %c0_i32, %c0_i32_0 : i32, i32
  }
  func.func @transform_5(%arg0: i32) -> (i32, i32) {
    %c0_i32 = arith.constant 0 : i32
    %c0_i32_0 = arith.constant 0 : i32
    %c0_i32_1 = arith.constant 0 : i32
    return %c0_i32, %c0_i32_0 : i32, i32
  }
  func.func @transform_6(%arg0: i32) -> (i32, i32) {
    %c0_i32 = arith.constant 0 : i32
    %c0_i32_0 = arith.constant 0 : i32
    %c0_i32_1 = arith.constant 0 : i32
    return %c0_i32, %c0_i32_0 : i32, i32
  }
  func.func @transform_7(%arg0: i32) -> (i32, i32) {
    %c0_i32 = arith.constant 0 : i32
    %c0_i32_0 = arith.constant 0 : i32
    %c0_i32_1 = arith.constant 0 : i32
    return %c0_i32, %c0_i32_0 : i32, i32
  }
  func.func @transform_8(%arg0: i32) -> (i32, i32) {
    %c0_i32 = arith.constant 0 : i32
    %c0_i32_0 = arith.constant 0 : i32
    %c0_i32_1 = arith.constant 0 : i32
    return %c0_i32, %c0_i32_0 : i32, i32
  }
  func.func @transform_9(%arg0: i32) -> (i32, i32) {
    %c0_i32 = arith.constant 0 : i32
    %c0_i32_0 = arith.constant 0 : i32
    return %arg0, %c0_i32 : i32, i32
  }
  func.func @transform_10(%arg0: i32) -> (i32, i32) {
    %c0_i32 = arith.constant 0 : i32
    %c0_i32_0 = arith.constant 0 : i32
    return %arg0, %c0_i32 : i32, i32
  }
  func.func @transform_11(%arg0: i32) -> (i32, i32) {
    %c0_i32 = arith.constant 0 : i32
    %c0_i32_0 = arith.constant 0 : i32
    return %arg0, %c0_i32 : i32, i32
  }
}

</mosaic_0001>

<llo_original>
// kernel: tpu_custom_call.1
$region0: #{tpu_custom_call.1}
  #allocation0 [shape = 'u32[]', space=smem, size = 0x4, offset = 0x4, fixed_abs, tag = 'smem constant byte address 0x4 - core index']
  #allocation1 [shape = 'u32[72,128]{1,0:T(1,128)}', space=vmem, size = 0x9000, scoped, tag = 'internal scratch']
  %s0 = inlined_call_operand.vmem [shape: bf16[8,784], index: 0, kind: input, shape index: {}]
  %s1 = inlined_call_operand.vmem [shape: bf16[784,400], index: 1, kind: input, shape index: {}]
  %s2 = inlined_call_operand.vmem [shape: f32[1,400], index: 2, kind: input, shape index: {}]
  %s3 = inlined_call_operand.vmem [shape: bf16[400,256], index: 3, kind: input, shape index: {}]
  %s4 = inlined_call_operand.vmem [shape: f32[1,256], index: 4, kind: input, shape index: {}]
  %s5 = inlined_call_operand.vmem [shape: bf16[128,400], index: 5, kind: input, shape index: {}]
  %s6 = inlined_call_operand.vmem [shape: f32[1,400], index: 6, kind: input, shape index: {}]
  %s7 = inlined_call_operand.vmem [shape: bf16[400,896], index: 7, kind: input, shape index: {}]
  %s8 = inlined_call_operand.vmem [shape: f32[1,896], index: 8, kind: input, shape index: {}]
  %s9 = inlined_call_operand.vmem [shape: f32[8,128], index: 9, kind: input, shape index: {}]
  %s10 = inlined_call_operand.hbm [shape: f32[8,896], index: 10, kind: output, shape index: {0}]
  %s11 = inlined_call_operand.hbm [shape: f32[8,256], index: 11, kind: output, shape index: {1}]
  %12 = xla_tuple %s10, %s11
  %s13 = sld [smem:[#allocation0]]
  $region58: #{tpu_custom_call.1} parent=0
    _
  %s15 = ssub.s32 1, %s13
  %s16 = scalar_select 0, %s15, %s13
  $region1: #{tpu_custom_call.1} parent=0
    #allocation2 [shape = 'u8[28672]{0}', space=vmem, size = 0x7000, scoped, tag = 'output window, operand 0, single buffered']
    #allocation3 [shape = 's32[1]{0}', space=sflag, size = 0x4, scoped, tag = 'scoped memory for tpu_custom_call.1']
    #allocation4 [shape = 'u8[8192]{0}', space=vmem, size = 0x2000, scoped, tag = 'output window, operand 1, single buffered']
    #allocation5 [shape = 's32[1]{0}', space=sflag, size = 0x4, scoped, tag = 'scoped memory for tpu_custom_call.1']
    %17 = vsyncpa [#allocation3], 0
    %18 = vsyncpa [#allocation5], 0
    // Predicated region
    $region2: #{tpu_custom_call.1} parent=1 // pred_check
      _
    $region3: #{tpu_custom_call.1} parent=1 // pred_check_branch
      %20 = sbr.rel (0) target = $region5
    $region4: #{tpu_custom_call.1} parent=1 // pred_region
      _
    $region5: #{tpu_custom_call.1} parent=1 // pred_fallthru
      _
    // Predicated region
    $region6: #{tpu_custom_call.1} parent=1 // pred_check
      _
    $region7: #{tpu_custom_call.1} parent=1 // pred_check_branch
      %22 = sbr.rel (0) target = $region9
    $region8: #{tpu_custom_call.1} parent=1 // pred_region
      _
    $region9: #{tpu_custom_call.1} parent=1 // pred_fallthru
      _
    // Predicated region
    $region10: #{tpu_custom_call.1} parent=1 // pred_check
      _
    $region11: #{tpu_custom_call.1} parent=1 // pred_check_branch
      %24 = sbr.rel (0) target = $region13
    $region12: #{tpu_custom_call.1} parent=1 // pred_region
      _
    $region13: #{tpu_custom_call.1} parent=1 // pred_fallthru
      _
    // Predicated region
    $region14: #{tpu_custom_call.1} parent=1 // pred_check
      _
    $region15: #{tpu_custom_call.1} parent=1 // pred_check_branch
      %26 = sbr.rel (0) target = $region17
    $region16: #{tpu_custom_call.1} parent=1 // pred_region
      _
    $region17: #{tpu_custom_call.1} parent=1 // pred_fallthru
      _
    // Predicated region
    $region18: #{tpu_custom_call.1} parent=1 // pred_check
      _
    $region19: #{tpu_custom_call.1} parent=1 // pred_check_branch
      %28 = sbr.rel (0) target = $region21
    $region20: #{tpu_custom_call.1} parent=1 // pred_region
      _
    $region21: #{tpu_custom_call.1} parent=1 // pred_fallthru
      _
    // Predicated region
    $region22: #{tpu_custom_call.1} parent=1 // pred_check
      _
    $region23: #{tpu_custom_call.1} parent=1 // pred_check_branch
      %30 = sbr.rel (0) target = $region25
    $region24: #{tpu_custom_call.1} parent=1 // pred_region
      _
    $region25: #{tpu_custom_call.1} parent=1 // pred_fallthru
      _
    // Predicated region
    $region26: #{tpu_custom_call.1} parent=1 // pred_check
      _
    $region27: #{tpu_custom_call.1} parent=1 // pred_check_branch
      %32 = sbr.rel (0) target = $region29
    $region28: #{tpu_custom_call.1} parent=1 // pred_region
      _
    $region29: #{tpu_custom_call.1} parent=1 // pred_fallthru
      _
    // Predicated region
    $region30: #{tpu_custom_call.1} parent=1 // pred_check
      _
    $region31: #{tpu_custom_call.1} parent=1 // pred_check_branch
      %34 = sbr.rel (0) target = $region33
    $region32: #{tpu_custom_call.1} parent=1 // pred_region
      _
    $region33: #{tpu_custom_call.1} parent=1 // pred_fallthru
      _
    // Predicated region
    $region34: #{tpu_custom_call.1} parent=1 // pred_check
      _
    $region35: #{tpu_custom_call.1} parent=1 // pred_check_branch
      %36 = sbr.rel (0) target = $region37
    $region36: #{tpu_custom_call.1} parent=1 // pred_region
      _
    $region37: #{tpu_custom_call.1} parent=1 // pred_fallthru
      _
    // Predicated region
    $region38: #{tpu_custom_call.1} parent=1 // pred_check
      _
    $region39: #{tpu_custom_call.1} parent=1 // pred_check_branch
      %38 = sbr.rel (0) target = $region41
    $region40: #{tpu_custom_call.1} parent=1 // pred_region
      _
    $region41: #{tpu_custom_call.1} parent=1 // pred_fallthru
      _
    %v40 = vld [vmem:[%s0] sm:$0xff]
    %v41 = vld [vmem:[%s0 + $0x8] sm:$0xff]
    %v42 = vld [vmem:[%s0 + $0x10] sm:$0xff]
    %v43 = vld [vmem:[%s0 + $0x18] sm:$0xf]
    %v44 = vld [vmem:[%s1] sm:$0xff]
    %v45 = vld [vmem:[%s1 + $0x8] sm:$0xff]
    %v46 = vld [vmem:[%s1 + $0x10] sm:$0xff]
    %v47 = vld [vmem:[%s1 + $0x18] sm:$0xff]
    %v48 = vld [vmem:[%s1 + $0x20] sm:$0xff]
    %v49 = vld [vmem:[%s1 + $0x28] sm:$0xff]
    %v50 = vld [vmem:[%s1 + $0x30] sm:$0xff]
    %v51 = vld [vmem:[%s1 + $0x38] sm:$0xff]
    %v52 = vld [vmem:[%s1 + $0x40] sm:$0xff]
    %v53 = vld [vmem:[%s1 + $0x48] sm:$0xff]
    %v54 = vld [vmem:[%s1 + $0x50] sm:$0xff]
    %v55 = vld [vmem:[%s1 + $0x58] sm:$0xff]
    %v56 = vld [vmem:[%s1 + $0x60] sm:$0xff]
    %v57 = vld [vmem:[%s1 + $0x68] sm:$0xff]
    %v58 = vld [vmem:[%s1 + $0x70] sm:$0xff]
    %v59 = vld [vmem:[%s1 + $0x78] sm:$0xff]
    %v60 = vld [vmem:[%s1 + $0x80] sm:$0xff]
    %v61 = vld [vmem:[%s1 + $0x88] sm:$0xff]
    %v62 = vld [vmem:[%s1 + $0x90] sm:$0xff]
    %v63 = vld [vmem:[%s1 + $0x98] sm:$0xff]
    %v64 = vld [vmem:[%s1 + $0xa0] sm:$0xff]
    %v65 = vld [vmem:[%s1 + $0xa8] sm:$0xff]
    %v66 = vld [vmem:[%s1 + $0xb0] sm:$0xff]
    %v67 = vld [vmem:[%s1 + $0xb8] sm:$0xff]
    %v68 = vld [vmem:[%s1 + $0xc0] sm:$0xff]
    %v69 = vld [vmem:[%s1 + $0xc8] sm:$0xff]
    %v70 = vld [vmem:[%s1 + $0xd0] sm:$0xff]
    %v71 = vld [vmem:[%s1 + $0xd8] sm:$0xff]
    %v72 = vld [vmem:[%s1 + $0xe0] sm:$0xff]
    %v73 = vld [vmem:[%s1 + $0xe8] sm:$0xff]
    %v74 = vld [vmem:[%s1 + $0xf0] sm:$0xff]
    %v75 = vld [vmem:[%s1 + $0xf8] sm:$0xff]
    %v76 = vld [vmem:[%s1 + $0x100] sm:$0xff]
    %v77 = vld [vmem:[%s1 + $0x108] sm:$0xff]
    %v78 = vld [vmem:[%s1 + $0x110] sm:$0xff]
    %v79 = vld [vmem:[%s1 + $0x118] sm:$0xff]
    %v80 = vld [vmem:[%s1 + $0x120] sm:$0xff]
    %v81 = vld [vmem:[%s1 + $0x128] sm:$0xff]
    %v82 = vld [vmem:[%s1 + $0x130] sm:$0xff]
    %v83 = vld [vmem:[%s1 + $0x138] sm:$0xff]
    %v84 = vld [vmem:[%s1 + $0x140] sm:$0xff]
    %v85 = vld [vmem:[%s1 + $0x148] sm:$0xff]
    %v86 = vld [vmem:[%s1 + $0x150] sm:$0xff]
    %v87 = vld [vmem:[%s1 + $0x158] sm:$0xff]
    %v88 = vld [vmem:[%s1 + $0x160] sm:$0xff]
    %v89 = vld [vmem:[%s1 + $0x168] sm:$0xff]
    %v90 = vld [vmem:[%s1 + $0x170] sm:$0xff]
    %v91 = vld [vmem:[%s1 + $0x178] sm:$0xff]
    %v92 = vld [vmem:[%s1 + $0x180] sm:$0xff]
    %v93 = vld [vmem:[%s1 + $0x188] sm:$0xff]
    %v94 = vld [vmem:[%s1 + $0x190] sm:$0xff]
    %v95 = vld [vmem:[%s1 + $0x198] sm:$0xff]
    %v96 = vld [vmem:[%s1 + $0x1a0] sm:$0xff]
    %v97 = vld [vmem:[%s1 + $0x1a8] sm:$0xff]
    %v98 = vld [vmem:[%s1 + $0x1b0] sm:$0xff]
    %v99 = vld [vmem:[%s1 + $0x1b8] sm:$0xff]
    %v100 = vld [vmem:[%s1 + $0x1c0] sm:$0xff]
    %v101 = vld [vmem:[%s1 + $0x1c8] sm:$0xff]
    %v102 = vld [vmem:[%s1 + $0x1d0] sm:$0xff]
    %v103 = vld [vmem:[%s1 + $0x1d8] sm:$0xff]
    %v104 = vld [vmem:[%s1 + $0x1e0] sm:$0xff]
    %v105 = vld [vmem:[%s1 + $0x1e8] sm:$0xff]
    %v106 = vld [vmem:[%s1 + $0x1f0] sm:$0xff]
    %v107 = vld [vmem:[%s1 + $0x1f8] sm:$0xff]
    %v108 = vld [vmem:[%s1 + $0x200] sm:$0xff]
    %v109 = vld [vmem:[%s1 + $0x208] sm:$0xff]
    %v110 = vld [vmem:[%s1 + $0x210] sm:$0xff]
    %v111 = vld [vmem:[%s1 + $0x218] sm:$0xff]
    %v112 = vld [vmem:[%s1 + $0x220] sm:$0xff]
    %v113 = vld [vmem:[%s1 + $0x228] sm:$0xff]
    %v114 = vld [vmem:[%s1 + $0x230] sm:$0xff]
    %v115 = vld [vmem:[%s1 + $0x238] sm:$0xff]
    %v116 = vld [vmem:[%s1 + $0x240] sm:$0xff]
    %v117 = vld [vmem:[%s1 + $0x248] sm:$0xff]
    %v118 = vld [vmem:[%s1 + $0x250] sm:$0xff]
    %v119 = vld [vmem:[%s1 + $0x258] sm:$0xff]
    %v120 = vld [vmem:[%s1 + $0x260] sm:$0xff]
    %v121 = vld [vmem:[%s1 + $0x268] sm:$0xff]
    %v122 = vld [vmem:[%s1 + $0x270] sm:$0xff]
    %v123 = vld [vmem:[%s1 + $0x278] sm:$0xff]
    %v124 = vld [vmem:[%s1 + $0x280] sm:$0xff]
    %v125 = vld [vmem:[%s1 + $0x288] sm:$0xff]
    %v126 = vld [vmem:[%s1 + $0x290] sm:$0xff]
    %v127 = vld [vmem:[%s1 + $0x298] sm:$0xff]
    %v128 = vld [vmem:[%s1 + $0x2a0] sm:$0xff]
    %v129 = vld [vmem:[%s1 + $0x2a8] sm:$0xff]
    %v130 = vld [vmem:[%s1 + $0x2b0] sm:$0xff]
    %v131 = vld [vmem:[%s1 + $0x2b8] sm:$0xff]
    %v132 = vld [vmem:[%s1 + $0x2c0] sm:$0xff]
    %v133 = vld [vmem:[%s1 + $0x2c8] sm:$0xff]
    %v134 = vld [vmem:[%s1 + $0x2d0] sm:$0xff]
    %v135 = vld [vmem:[%s1 + $0x2d8] sm:$0xff]
    %v136 = vld [vmem:[%s1 + $0x2e0] sm:$0xff]
    %v137 = vld [vmem:[%s1 + $0x2e8] sm:$0xff]
    %v138 = vld [vmem:[%s1 + $0x2f0] sm:$0xff]
    %v139 = vld [vmem:[%s1 + $0x2f8] sm:$0xff]
    %v140 = vld [vmem:[%s1 + $0x300] sm:$0xff]
    %v141 = vld [vmem:[%s1 + $0x308] sm:$0xff]
    %v142 = vld [vmem:[%s1 + $0x310] sm:$0xff]
    %v143 = vld [vmem:[%s1 + $0x318] sm:$0xff]
    %v144 = vld [vmem:[%s1 + $0x320] sm:$0xff]
    %v145 = vld [vmem:[%s1 + $0x328] sm:$0xff]
    %v146 = vld [vmem:[%s1 + $0x330] sm:$0xff]
    %v147 = vld [vmem:[%s1 + $0x338] sm:$0xff]
    %v148 = vld [vmem:[%s1 + $0x340] sm:$0xff]
    %v149 = vld [vmem:[%s1 + $0x348] sm:$0xff]
    %v150 = vld [vmem:[%s1 + $0x350] sm:$0xff]
    %v151 = vld [vmem:[%s1 + $0x358] sm:$0xff]
    %v152 = vld [vmem:[%s1 + $0x360] sm:$0xff]
    %v153 = vld [vmem:[%s1 + $0x368] sm:$0xff]
    %v154 = vld [vmem:[%s1 + $0x370] sm:$0xff]
    %v155 = vld [vmem:[%s1 + $0x378] sm:$0xff]
    %v156 = vld [vmem:[%s1 + $0x380] sm:$0xff]
    %v157 = vld [vmem:[%s1 + $0x388] sm:$0xff]
    %v158 = vld [vmem:[%s1 + $0x390] sm:$0xff]
    %v159 = vld [vmem:[%s1 + $0x398] sm:$0xff]
    %v160 = vld [vmem:[%s1 + $0x3a0] sm:$0xff]
    %v161 = vld [vmem:[%s1 + $0x3a8] sm:$0xff]
    %v162 = vld [vmem:[%s1 + $0x3b0] sm:$0xff]
    %v163 = vld [vmem:[%s1 + $0x3b8] sm:$0xff]
    %v164 = vld [vmem:[%s1 + $0x3c0] sm:$0xff]
    %v165 = vld [vmem:[%s1 + $0x3c8] sm:$0xff]
    %v166 = vld [vmem:[%s1 + $0x3d0] sm:$0xff]
    %v167 = vld [vmem:[%s1 + $0x3d8] sm:$0xff]
    %v168 = vld [vmem:[%s1 + $0x3e0] sm:$0xff]
    %v169 = vld [vmem:[%s1 + $0x3e8] sm:$0xff]
    %v170 = vld [vmem:[%s1 + $0x3f0] sm:$0xff]
    %v171 = vld [vmem:[%s1 + $0x3f8] sm:$0xff]
    %v172 = vld [vmem:[%s1 + $0x400] sm:$0xff]
    %v173 = vld [vmem:[%s1 + $0x408] sm:$0xff]
    %v174 = vld [vmem:[%s1 + $0x410] sm:$0xff]
    %v175 = vld [vmem:[%s1 + $0x418] sm:$0xff]
    %v176 = vld [vmem:[%s1 + $0x420] sm:$0xff]
    %v177 = vld [vmem:[%s1 + $0x428] sm:$0xff]
    %v178 = vld [vmem:[%s1 + $0x430] sm:$0xff]
    %v179 = vld [vmem:[%s1 + $0x438] sm:$0xff]
    %v180 = vld [vmem:[%s1 + $0x440] sm:$0xff]
    %v181 = vld [vmem:[%s1 + $0x448] sm:$0xff]
    %v182 = vld [vmem:[%s1 + $0x450] sm:$0xff]
    %v183 = vld [vmem:[%s1 + $0x458] sm:$0xff]
    %v184 = vld [vmem:[%s1 + $0x460] sm:$0xff]
    %v185 = vld [vmem:[%s1 + $0x468] sm:$0xff]
    %v186 = vld [vmem:[%s1 + $0x470] sm:$0xff]
    %v187 = vld [vmem:[%s1 + $0x478] sm:$0xff]
    %v188 = vld [vmem:[%s1 + $0x480] sm:$0xff]
    %v189 = vld [vmem:[%s1 + $0x488] sm:$0xff]
    %v190 = vld [vmem:[%s1 + $0x490] sm:$0xff]
    %v191 = vld [vmem:[%s1 + $0x498] sm:$0xff]
    %v192 = vld [vmem:[%s1 + $0x4a0] sm:$0xff]
    %v193 = vld [vmem:[%s1 + $0x4a8] sm:$0xff]
    %v194 = vld [vmem:[%s1 + $0x4b0] sm:$0xff]
    %v195 = vld [vmem:[%s1 + $0x4b8] sm:$0xff]
    %v196 = vld [vmem:[%s1 + $0x4c0] sm:$0xff]
    %v197 = vld [vmem:[%s1 + $0x4c8] sm:$0xff]
    %v198 = vld [vmem:[%s1 + $0x4d0] sm:$0xff]
    %v199 = vld [vmem:[%s1 + $0x4d8] sm:$0xff]
    %v200 = vld [vmem:[%s1 + $0x4e0] sm:$0xff]
    %v201 = vld [vmem:[%s1 + $0x4e8] sm:$0xff]
    %v202 = vld [vmem:[%s1 + $0x4f0] sm:$0xff]
    %v203 = vld [vmem:[%s1 + $0x4f8] sm:$0xff]
    %v204 = vld [vmem:[%s1 + $0x500] sm:$0xff]
    %v205 = vld [vmem:[%s1 + $0x508] sm:$0xff]
    %v206 = vld [vmem:[%s1 + $0x510] sm:$0xff]
    %v207 = vld [vmem:[%s1 + $0x518] sm:$0xff]
    %v208 = vld [vmem:[%s1 + $0x520] sm:$0xff]
    %v209 = vld [vmem:[%s1 + $0x528] sm:$0xff]
    %v210 = vld [vmem:[%s1 + $0x530] sm:$0xff]
    %v211 = vld [vmem:[%s1 + $0x538] sm:$0xff]
    %v212 = vld [vmem:[%s1 + $0x540] sm:$0xff]
    %v213 = vld [vmem:[%s1 + $0x548] sm:$0xff]
    %v214 = vld [vmem:[%s1 + $0x550] sm:$0xff]
    %v215 = vld [vmem:[%s1 + $0x558] sm:$0xff]
    %v216 = vld [vmem:[%s1 + $0x560] sm:$0xff]
    %v217 = vld [vmem:[%s1 + $0x568] sm:$0xff]
    %v218 = vld [vmem:[%s1 + $0x570] sm:$0xff]
    %v219 = vld [vmem:[%s1 + $0x578] sm:$0xff]
    %v220 = vld [vmem:[%s1 + $0x580] sm:$0xff]
    %v221 = vld [vmem:[%s1 + $0x588] sm:$0xff]
    %v222 = vld [vmem:[%s1 + $0x590] sm:$0xff]
    %v223 = vld [vmem:[%s1 + $0x598] sm:$0xff]
    %v224 = vld [vmem:[%s1 + $0x5a0] sm:$0xff]
    %v225 = vld [vmem:[%s1 + $0x5a8] sm:$0xff]
    %v226 = vld [vmem:[%s1 + $0x5b0] sm:$0xff]
    %v227 = vld [vmem:[%s1 + $0x5b8] sm:$0xff]
    %v228 = vld [vmem:[%s1 + $0x5c0] sm:$0xff]
    %v229 = vld [vmem:[%s1 + $0x5c8] sm:$0xff]
    %v230 = vld [vmem:[%s1 + $0x5d0] sm:$0xff]
    %v231 = vld [vmem:[%s1 + $0x5d8] sm:$0xff]
    %v232 = vld [vmem:[%s1 + $0x5e0] sm:$0xff]
    %v233 = vld [vmem:[%s1 + $0x5e8] sm:$0xff]
    %v234 = vld [vmem:[%s1 + $0x5f0] sm:$0xff]
    %v235 = vld [vmem:[%s1 + $0x5f8] sm:$0xff]
    %v236 = vld [vmem:[%s1 + $0x600] sm:$0xff]
    %v237 = vld [vmem:[%s1 + $0x608] sm:$0xff]
    %v238 = vld [vmem:[%s1 + $0x610] sm:$0xff]
    %v239 = vld [vmem:[%s1 + $0x618] sm:$0xff]
    %v240 = vld [vmem:[%s2] sm:$0xf]
    %v242 = vperm.slane %v240, 0
    %v243 = vperm.slane %v240, 1
    %v244 = vperm.slane %v240, 2
    %v245 = vperm.slane %v240, 3
    %v254 = vunpack.c.l.b16 %v40
    %v255 = vunpack.c.h.b16 %v40
    %v256 = vunpack.c.l.b16 %v41
    %v257 = vunpack.c.h.b16 %v41
    %v258 = vunpack.c.l.b16 %v42
    %v259 = vunpack.c.h.b16 %v42
    %v260 = vunpack.c.l.b16 %v43
    %v261 = vpack.c.b16 %v254, %v254
    %v262 = vpack.c.b16 %v255, %v255
    %v263 = vpack.c.b16 %v256, %v256
    %v264 = vpack.c.b16 %v257, %v257
    %v265 = vpack.c.b16 %v258, %v258
    %v266 = vpack.c.b16 %v259, %v259
    %v267 = vpack.c.b16 %v260, %v260
    %v470 = vunpack.c.l.b16 %v44
    %v471 = vunpack.c.h.b16 %v44
    %v472 = vunpack.c.l.b16 %v45
    %v473 = vunpack.c.h.b16 %v45
    %v474 = vunpack.c.l.b16 %v46
    %v475 = vunpack.c.h.b16 %v46
    %v476 = vunpack.c.l.b16 %v47
    %v477 = vunpack.c.h.b16 %v47
    %v478 = vunpack.c.l.b16 %v48
    %v479 = vunpack.c.h.b16 %v48
    %v480 = vunpack.c.l.b16 %v49
    %v481 = vunpack.c.h.b16 %v49
    %v482 = vunpack.c.l.b16 %v50
    %v483 = vunpack.c.h.b16 %v50
    %v484 = vunpack.c.l.b16 %v51
    %v485 = vunpack.c.h.b16 %v51
    %v486 = vunpack.c.l.b16 %v52
    %v487 = vunpack.c.h.b16 %v52
    %v488 = vunpack.c.l.b16 %v53
    %v489 = vunpack.c.h.b16 %v53
    %v490 = vunpack.c.l.b16 %v54
    %v491 = vunpack.c.h.b16 %v54
    %v492 = vunpack.c.l.b16 %v55
    %v493 = vunpack.c.h.b16 %v55
    %v494 = vunpack.c.l.b16 %v56
    %v495 = vunpack.c.h.b16 %v56
    %v496 = vunpack.c.l.b16 %v57
    %v497 = vunpack.c.h.b16 %v57
    %v498 = vunpack.c.l.b16 %v58
    %v499 = vunpack.c.h.b16 %v58
    %v500 = vunpack.c.l.b16 %v59
    %v501 = vunpack.c.h.b16 %v59
    %v502 = vunpack.c.l.b16 %v60
    %v503 = vunpack.c.h.b16 %v60
    %v504 = vunpack.c.l.b16 %v61
    %v505 = vunpack.c.h.b16 %v61
    %v506 = vunpack.c.l.b16 %v62
    %v507 = vunpack.c.h.b16 %v62
    %v508 = vunpack.c.l.b16 %v63
    %v509 = vunpack.c.h.b16 %v63
    %v510 = vunpack.c.l.b16 %v64
    %v511 = vunpack.c.h.b16 %v64
    %v512 = vunpack.c.l.b16 %v65
    %v513 = vunpack.c.h.b16 %v65
    %v514 = vunpack.c.l.b16 %v66
    %v515 = vunpack.c.h.b16 %v66
    %v516 = vunpack.c.l.b16 %v67
    %v517 = vunpack.c.h.b16 %v67
    %v518 = vunpack.c.l.b16 %v68
    %v519 = vunpack.c.h.b16 %v68
    %v520 = vunpack.c.l.b16 %v69
    %v521 = vunpack.c.h.b16 %v69
    %v522 = vunpack.c.l.b16 %v70
    %v523 = vunpack.c.h.b16 %v70
    %v524 = vunpack.c.l.b16 %v71
    %v525 = vunpack.c.h.b16 %v71
    %v526 = vunpack.c.l.b16 %v72
    %v527 = vunpack.c.h.b16 %v72
    %v528 = vunpack.c.l.b16 %v73
    %v529 = vunpack.c.h.b16 %v73
    %v530 = vunpack.c.l.b16 %v74
    %v531 = vunpack.c.h.b16 %v74
    %v532 = vunpack.c.l.b16 %v75
    %v533 = vunpack.c.h.b16 %v75
    %v534 = vunpack.c.l.b16 %v76
    %v535 = vunpack.c.h.b16 %v76
    %v536 = vunpack.c.l.b16 %v77
    %v537 = vunpack.c.h.b16 %v77
    %v538 = vunpack.c.l.b16 %v78
    %v539 = vunpack.c.h.b16 %v78
    %v540 = vunpack.c.l.b16 %v79
    %v541 = vunpack.c.h.b16 %v79
    %v542 = vunpack.c.l.b16 %v80
    %v543 = vunpack.c.h.b16 %v80
    %v544 = vunpack.c.l.b16 %v81
    %v545 = vunpack.c.h.b16 %v81
    %v546 = vunpack.c.l.b16 %v82
    %v547 = vunpack.c.h.b16 %v82
    %v548 = vunpack.c.l.b16 %v83
    %v549 = vunpack.c.h.b16 %v83
    %v550 = vunpack.c.l.b16 %v84
    %v551 = vunpack.c.h.b16 %v84
    %v552 = vunpack.c.l.b16 %v85
    %v553 = vunpack.c.h.b16 %v85
    %v554 = vunpack.c.l.b16 %v86
    %v555 = vunpack.c.h.b16 %v86
    %v556 = vunpack.c.l.b16 %v87
    %v557 = vunpack.c.h.b16 %v87
    %v558 = vunpack.c.l.b16 %v88
    %v559 = vunpack.c.h.b16 %v88
    %v560 = vunpack.c.l.b16 %v89
    %v561 = vunpack.c.h.b16 %v89
    %v562 = vunpack.c.l.b16 %v90
    %v563 = vunpack.c.h.b16 %v90
    %v564 = vunpack.c.l.b16 %v91
    %v565 = vunpack.c.h.b16 %v91
    %v566 = vunpack.c.l.b16 %v92
    %v567 = vunpack.c.h.b16 %v92
    %v568 = vunpack.c.l.b16 %v93
    %v569 = vunpack.c.h.b16 %v93
    %v570 = vunpack.c.l.b16 %v94
    %v571 = vunpack.c.h.b16 %v94
    %v572 = vunpack.c.l.b16 %v95
    %v573 = vunpack.c.h.b16 %v95
    %v574 = vunpack.c.l.b16 %v96
    %v575 = vunpack.c.h.b16 %v96
    %v576 = vunpack.c.l.b16 %v97
    %v577 = vunpack.c.h.b16 %v97
    %v578 = vunpack.c.l.b16 %v98
    %v579 = vunpack.c.h.b16 %v98
    %v580 = vunpack.c.l.b16 %v99
    %v581 = vunpack.c.h.b16 %v99
    %v582 = vunpack.c.l.b16 %v100
    %v583 = vunpack.c.h.b16 %v100
    %v584 = vunpack.c.l.b16 %v101
    %v585 = vunpack.c.h.b16 %v101
    %v586 = vunpack.c.l.b16 %v102
    %v587 = vunpack.c.h.b16 %v102
    %v588 = vunpack.c.l.b16 %v103
    %v589 = vunpack.c.h.b16 %v103
    %v590 = vunpack.c.l.b16 %v104
    %v591 = vunpack.c.h.b16 %v104
    %v592 = vunpack.c.l.b16 %v105
    %v593 = vunpack.c.h.b16 %v105
    %v594 = vunpack.c.l.b16 %v106
    %v595 = vunpack.c.h.b16 %v106
    %v596 = vunpack.c.l.b16 %v107
    %v597 = vunpack.c.h.b16 %v107
    %v598 = vunpack.c.l.b16 %v108
    %v599 = vunpack.c.h.b16 %v108
    %v600 = vunpack.c.l.b16 %v109
    %v601 = vunpack.c.h.b16 %v109
    %v602 = vunpack.c.l.b16 %v110
    %v603 = vunpack.c.h.b16 %v110
    %v604 = vunpack.c.l.b16 %v111
    %v605 = vunpack.c.h.b16 %v111
    %v606 = vunpack.c.l.b16 %v112
    %v607 = vunpack.c.h.b16 %v112
    %v608 = vunpack.c.l.b16 %v113
    %v609 = vunpack.c.h.b16 %v113
    %v610 = vunpack.c.l.b16 %v114
    %v611 = vunpack.c.h.b16 %v114
    %v612 = vunpack.c.l.b16 %v115
    %v613 = vunpack.c.h.b16 %v115
    %v614 = vunpack.c.l.b16 %v116
    %v615 = vunpack.c.h.b16 %v116
    %v616 = vunpack.c.l.b16 %v117
    %v617 = vunpack.c.h.b16 %v117
    %v618 = vunpack.c.l.b16 %v118
    %v619 = vunpack.c.h.b16 %v118
    %v620 = vunpack.c.l.b16 %v119
    %v621 = vunpack.c.h.b16 %v119
    %v622 = vunpack.c.l.b16 %v120
    %v623 = vunpack.c.h.b16 %v120
    %v624 = vunpack.c.l.b16 %v121
    %v625 = vunpack.c.h.b16 %v121
    %v626 = vunpack.c.l.b16 %v122
    %v627 = vunpack.c.h.b16 %v122
    %v628 = vunpack.c.l.b16 %v123
    %v629 = vunpack.c.h.b16 %v123
    %v630 = vunpack.c.l.b16 %v124
    %v631 = vunpack.c.h.b16 %v124
    %v632 = vunpack.c.l.b16 %v125
    %v633 = vunpack.c.h.b16 %v125
    %v634 = vunpack.c.l.b16 %v126
    %v635 = vunpack.c.h.b16 %v126
    %v636 = vunpack.c.l.b16 %v127
    %v637 = vunpack.c.h.b16 %v127
    %v638 = vunpack.c.l.b16 %v128
    %v639 = vunpack.c.h.b16 %v128
    %v640 = vunpack.c.l.b16 %v129
    %v641 = vunpack.c.h.b16 %v129
    %v642 = vunpack.c.l.b16 %v130
    %v643 = vunpack.c.h.b16 %v130
    %v644 = vunpack.c.l.b16 %v131
    %v645 = vunpack.c.h.b16 %v131
    %v646 = vunpack.c.l.b16 %v132
    %v647 = vunpack.c.h.b16 %v132
    %v648 = vunpack.c.l.b16 %v133
    %v649 = vunpack.c.h.b16 %v133
    %v650 = vunpack.c.l.b16 %v134
    %v651 = vunpack.c.h.b16 %v134
    %v652 = vunpack.c.l.b16 %v135
    %v653 = vunpack.c.h.b16 %v135
    %v654 = vunpack.c.l.b16 %v136
    %v655 = vunpack.c.h.b16 %v136
    %v656 = vunpack.c.l.b16 %v137
    %v657 = vunpack.c.h.b16 %v137
    %v658 = vunpack.c.l.b16 %v138
    %v659 = vunpack.c.h.b16 %v138
    %v660 = vunpack.c.l.b16 %v139
    %v661 = vunpack.c.h.b16 %v139
    %v662 = vunpack.c.l.b16 %v140
    %v663 = vunpack.c.h.b16 %v140
    %v664 = vunpack.c.l.b16 %v141
    %v665 = vunpack.c.h.b16 %v141
    %v666 = vunpack.c.l.b16 %v142
    %v667 = vunpack.c.h.b16 %v142
    %v668 = vunpack.c.l.b16 %v143
    %v669 = vunpack.c.h.b16 %v143
    %v670 = vunpack.c.l.b16 %v144
    %v671 = vunpack.c.h.b16 %v144
    %v672 = vunpack.c.l.b16 %v145
    %v673 = vunpack.c.h.b16 %v145
    %v674 = vunpack.c.l.b16 %v146
    %v675 = vunpack.c.h.b16 %v146
    %v676 = vunpack.c.l.b16 %v147
    %v677 = vunpack.c.h.b16 %v147
    %v678 = vunpack.c.l.b16 %v148
    %v679 = vunpack.c.h.b16 %v148
    %v680 = vunpack.c.l.b16 %v149
    %v681 = vunpack.c.h.b16 %v149
    %v682 = vunpack.c.l.b16 %v150
    %v683 = vunpack.c.h.b16 %v150
    %v684 = vunpack.c.l.b16 %v151
    %v685 = vunpack.c.h.b16 %v151
    %v686 = vunpack.c.l.b16 %v152
    %v687 = vunpack.c.h.b16 %v152
    %v688 = vunpack.c.l.b16 %v153
    %v689 = vunpack.c.h.b16 %v153
    %v690 = vunpack.c.l.b16 %v154
    %v691 = vunpack.c.h.b16 %v154
    %v692 = vunpack.c.l.b16 %v155
    %v693 = vunpack.c.h.b16 %v155
    %v694 = vunpack.c.l.b16 %v156
    %v695 = vunpack.c.h.b16 %v156
    %v696 = vunpack.c.l.b16 %v157
    %v697 = vunpack.c.h.b16 %v157
    %v698 = vunpack.c.l.b16 %v158
    %v699 = vunpack.c.h.b16 %v158
    %v700 = vunpack.c.l.b16 %v159
    %v701 = vunpack.c.h.b16 %v159
    %v702 = vunpack.c.l.b16 %v160
    %v703 = vunpack.c.h.b16 %v160
    %v704 = vunpack.c.l.b16 %v161
    %v705 = vunpack.c.h.b16 %v161
    %v706 = vunpack.c.l.b16 %v162
    %v707 = vunpack.c.h.b16 %v162
    %v708 = vunpack.c.l.b16 %v163
    %v709 = vunpack.c.h.b16 %v163
    %v710 = vunpack.c.l.b16 %v164
    %v711 = vunpack.c.h.b16 %v164
    %v712 = vunpack.c.l.b16 %v165
    %v713 = vunpack.c.h.b16 %v165
    %v714 = vunpack.c.l.b16 %v166
    %v715 = vunpack.c.h.b16 %v166
    %v716 = vunpack.c.l.b16 %v167
    %v717 = vunpack.c.h.b16 %v167
    %v718 = vunpack.c.l.b16 %v168
    %v719 = vunpack.c.h.b16 %v168
    %v720 = vunpack.c.l.b16 %v169
    %v721 = vunpack.c.h.b16 %v169
    %v722 = vunpack.c.l.b16 %v170
    %v723 = vunpack.c.h.b16 %v170
    %v724 = vunpack.c.l.b16 %v171
    %v725 = vunpack.c.h.b16 %v171
    %v726 = vunpack.c.l.b16 %v172
    %v727 = vunpack.c.h.b16 %v172
    %v728 = vunpack.c.l.b16 %v173
    %v729 = vunpack.c.h.b16 %v173
    %v730 = vunpack.c.l.b16 %v174
    %v731 = vunpack.c.h.b16 %v174
    %v732 = vunpack.c.l.b16 %v175
    %v733 = vunpack.c.h.b16 %v175
    %v734 = vunpack.c.l.b16 %v176
    %v735 = vunpack.c.h.b16 %v176
    %v736 = vunpack.c.l.b16 %v177
    %v737 = vunpack.c.h.b16 %v177
    %v738 = vunpack.c.l.b16 %v178
    %v739 = vunpack.c.h.b16 %v178
    %v740 = vunpack.c.l.b16 %v179
    %v741 = vunpack.c.h.b16 %v179
    %v742 = vunpack.c.l.b16 %v180
    %v743 = vunpack.c.h.b16 %v180
    %v744 = vunpack.c.l.b16 %v181
    %v745 = vunpack.c.h.b16 %v181
    %v746 = vunpack.c.l.b16 %v182
    %v747 = vunpack.c.h.b16 %v182
    %v748 = vunpack.c.l.b16 %v183
    %v749 = vunpack.c.h.b16 %v183
    %v750 = vunpack.c.l.b16 %v184
    %v751 = vunpack.c.h.b16 %v184
    %v752 = vunpack.c.l.b16 %v185
    %v753 = vunpack.c.h.b16 %v185
    %v754 = vunpack.c.l.b16 %v186
    %v755 = vunpack.c.h.b16 %v186
    %v756 = vunpack.c.l.b16 %v187
    %v757 = vunpack.c.h.b16 %v187
    %v758 = vunpack.c.l.b16 %v188
    %v759 = vunpack.c.h.b16 %v188
    %v760 = vunpack.c.l.b16 %v189
    %v761 = vunpack.c.h.b16 %v189
    %v762 = vunpack.c.l.b16 %v190
    %v763 = vunpack.c.h.b16 %v190
    %v764 = vunpack.c.l.b16 %v191
    %v765 = vunpack.c.h.b16 %v191
    %v766 = vunpack.c.l.b16 %v192
    %v767 = vunpack.c.h.b16 %v192
    %v768 = vunpack.c.l.b16 %v193
    %v769 = vunpack.c.h.b16 %v193
    %v770 = vunpack.c.l.b16 %v194
    %v771 = vunpack.c.h.b16 %v194
    %v772 = vunpack.c.l.b16 %v195
    %v773 = vunpack.c.h.b16 %v195
    %v774 = vunpack.c.l.b16 %v196
    %v775 = vunpack.c.h.b16 %v196
    %v776 = vunpack.c.l.b16 %v197
    %v777 = vunpack.c.h.b16 %v197
    %v778 = vunpack.c.l.b16 %v198
    %v779 = vunpack.c.h.b16 %v198
    %v780 = vunpack.c.l.b16 %v199
    %v781 = vunpack.c.h.b16 %v199
    %v782 = vunpack.c.l.b16 %v200
    %v783 = vunpack.c.h.b16 %v200
    %v784 = vunpack.c.l.b16 %v201
    %v785 = vunpack.c.h.b16 %v201
    %v786 = vunpack.c.l.b16 %v202
    %v787 = vunpack.c.h.b16 %v202
    %v788 = vunpack.c.l.b16 %v203
    %v789 = vunpack.c.h.b16 %v203
    %v790 = vunpack.c.l.b16 %v204
    %v791 = vunpack.c.h.b16 %v204
    %v792 = vunpack.c.l.b16 %v205
    %v793 = vunpack.c.h.b16 %v205
    %v794 = vunpack.c.l.b16 %v206
    %v795 = vunpack.c.h.b16 %v206
    %v796 = vunpack.c.l.b16 %v207
    %v797 = vunpack.c.h.b16 %v207
    %v798 = vunpack.c.l.b16 %v208
    %v799 = vunpack.c.h.b16 %v208
    %v800 = vunpack.c.l.b16 %v209
    %v801 = vunpack.c.h.b16 %v209
    %v802 = vunpack.c.l.b16 %v210
    %v803 = vunpack.c.h.b16 %v210
    %v804 = vunpack.c.l.b16 %v211
    %v805 = vunpack.c.h.b16 %v211
    %v806 = vunpack.c.l.b16 %v212
    %v807 = vunpack.c.h.b16 %v212
    %v808 = vunpack.c.l.b16 %v213
    %v809 = vunpack.c.h.b16 %v213
    %v810 = vunpack.c.l.b16 %v214
    %v811 = vunpack.c.h.b16 %v214
    %v812 = vunpack.c.l.b16 %v215
    %v813 = vunpack.c.h.b16 %v215
    %v814 = vunpack.c.l.b16 %v216
    %v815 = vunpack.c.h.b16 %v216
    %v816 = vunpack.c.l.b16 %v217
    %v817 = vunpack.c.h.b16 %v217
    %v818 = vunpack.c.l.b16 %v218
    %v819 = vunpack.c.h.b16 %v218
    %v820 = vunpack.c.l.b16 %v219
    %v821 = vunpack.c.h.b16 %v219
    %v822 = vunpack.c.l.b16 %v220
    %v823 = vunpack.c.h.b16 %v220
    %v824 = vunpack.c.l.b16 %v221
    %v825 = vunpack.c.h.b16 %v221
    %v826 = vunpack.c.l.b16 %v222
    %v827 = vunpack.c.h.b16 %v222
    %v828 = vunpack.c.l.b16 %v223
    %v829 = vunpack.c.h.b16 %v223
    %v830 = vunpack.c.l.b16 %v224
    %v831 = vunpack.c.h.b16 %v224
    %v832 = vunpack.c.l.b16 %v225
    %v833 = vunpack.c.h.b16 %v225
    %v834 = vunpack.c.l.b16 %v226
    %v835 = vunpack.c.h.b16 %v226
    %v836 = vunpack.c.l.b16 %v227
    %v837 = vunpack.c.h.b16 %v227
    %v838 = vunpack.c.l.b16 %v228
    %v839 = vunpack.c.h.b16 %v228
    %v840 = vunpack.c.l.b16 %v229
    %v841 = vunpack.c.h.b16 %v229
    %v842 = vunpack.c.l.b16 %v230
    %v843 = vunpack.c.h.b16 %v230
    %v844 = vunpack.c.l.b16 %v231
    %v845 = vunpack.c.h.b16 %v231
    %v846 = vunpack.c.l.b16 %v232
    %v847 = vunpack.c.h.b16 %v232
    %v848 = vunpack.c.l.b16 %v233
    %v849 = vunpack.c.h.b16 %v233
    %v850 = vunpack.c.l.b16 %v234
    %v851 = vunpack.c.h.b16 %v234
    %v852 = vunpack.c.l.b16 %v235
    %v853 = vunpack.c.h.b16 %v235
    %v854 = vunpack.c.l.b16 %v236
    %v855 = vunpack.c.h.b16 %v236
    %v856 = vunpack.c.l.b16 %v237
    %v857 = vunpack.c.h.b16 %v237
    %v858 = vunpack.c.l.b16 %v238
    %v859 = vunpack.c.h.b16 %v238
    %v860 = vunpack.c.l.b16 %v239
    %v861 = vunpack.c.h.b16 %v239
    %v862 = vpack.c.b16 %v474, %v470
    %v863 = vpack.c.b16 %v475, %v471
    %v864 = vpack.c.b16 %v476, %v472
    %v865 = vpack.c.b16 %v477, %v473
    %v866 = vpack.c.b16 %v482, %v478
    %v867 = vpack.c.b16 %v483, %v479
    %v868 = vpack.c.b16 %v484, %v480
    %v869 = vpack.c.b16 %v485, %v481
    %v870 = vpack.c.b16 %v490, %v486
    %v871 = vpack.c.b16 %v491, %v487
    %v872 = vpack.c.b16 %v492, %v488
    %v873 = vpack.c.b16 %v493, %v489
    %v874 = vpack.c.b16 %v498, %v494
    %v875 = vpack.c.b16 %v499, %v495
    %v876 = vpack.c.b16 %v500, %v496
    %v877 = vpack.c.b16 %v501, %v497
    %v878 = vpack.c.b16 %v506, %v502
    %v879 = vpack.c.b16 %v507, %v503
    %v880 = vpack.c.b16 %v508, %v504
    %v881 = vpack.c.b16 %v509, %v505
    %v882 = vpack.c.b16 %v514, %v510
    %v883 = vpack.c.b16 %v515, %v511
    %v884 = vpack.c.b16 %v516, %v512
    %v885 = vpack.c.b16 %v517, %v513
    %v886 = vpack.c.b16 %v522, %v518
    %v887 = vpack.c.b16 %v523, %v519
    %v888 = vpack.c.b16 %v524, %v520
    %v889 = vpack.c.b16 %v525, %v521
    %v890 = vpack.c.b16 %v530, %v526
    %v891 = vpack.c.b16 %v531, %v527
    %v892 = vpack.c.b16 %v532, %v528
    %v893 = vpack.c.b16 %v533, %v529
    %v894 = vpack.c.b16 %v538, %v534
    %v895 = vpack.c.b16 %v539, %v535
    %v896 = vpack.c.b16 %v540, %v536
    %v897 = vpack.c.b16 %v541, %v537
    %v898 = vpack.c.b16 %v546, %v542
    %v899 = vpack.c.b16 %v547, %v543
    %v900 = vpack.c.b16 %v548, %v544
    %v901 = vpack.c.b16 %v549, %v545
    %v902 = vpack.c.b16 %v554, %v550
    %v903 = vpack.c.b16 %v555, %v551
    %v904 = vpack.c.b16 %v556, %v552
    %v905 = vpack.c.b16 %v557, %v553
    %v906 = vpack.c.b16 %v562, %v558
    %v907 = vpack.c.b16 %v563, %v559
    %v908 = vpack.c.b16 %v564, %v560
    %v909 = vpack.c.b16 %v565, %v561
    %v910 = vpack.c.b16 %v570, %v566
    %v911 = vpack.c.b16 %v571, %v567
    %v912 = vpack.c.b16 %v572, %v568
    %v913 = vpack.c.b16 %v573, %v569
    %v914 = vpack.c.b16 %v578, %v574
    %v915 = vpack.c.b16 %v579, %v575
    %v916 = vpack.c.b16 %v580, %v576
    %v917 = vpack.c.b16 %v581, %v577
    %v918 = vpack.c.b16 %v586, %v582
    %v919 = vpack.c.b16 %v587, %v583
    %v920 = vpack.c.b16 %v588, %v584
    %v921 = vpack.c.b16 %v589, %v585
    %v922 = vpack.c.b16 %v594, %v590
    %v923 = vpack.c.b16 %v595, %v591
    %v924 = vpack.c.b16 %v596, %v592
    %v925 = vpack.c.b16 %v597, %v593
    %v926 = vpack.c.b16 %v602, %v598
    %v927 = vpack.c.b16 %v603, %v599
    %v928 = vpack.c.b16 %v604, %v600
    %v929 = vpack.c.b16 %v605, %v601
    %v930 = vpack.c.b16 %v610, %v606
    %v931 = vpack.c.b16 %v611, %v607
    %v932 = vpack.c.b16 %v612, %v608
    %v933 = vpack.c.b16 %v613, %v609
    %v934 = vpack.c.b16 %v618, %v614
    %v935 = vpack.c.b16 %v619, %v615
    %v936 = vpack.c.b16 %v620, %v616
    %v937 = vpack.c.b16 %v621, %v617
    %v938 = vpack.c.b16 %v626, %v622
    %v939 = vpack.c.b16 %v627, %v623
    %v940 = vpack.c.b16 %v628, %v624
    %v941 = vpack.c.b16 %v629, %v625
    %v942 = vpack.c.b16 %v634, %v630
    %v943 = vpack.c.b16 %v635, %v631
    %v944 = vpack.c.b16 %v636, %v632
    %v945 = vpack.c.b16 %v637, %v633
    %v946 = vpack.c.b16 %v642, %v638
    %v947 = vpack.c.b16 %v643, %v639
    %v948 = vpack.c.b16 %v644, %v640
    %v949 = vpack.c.b16 %v645, %v641
    %v950 = vpack.c.b16 %v650, %v646
    %v951 = vpack.c.b16 %v651, %v647
    %v952 = vpack.c.b16 %v652, %v648
    %v953 = vpack.c.b16 %v653, %v649
    %v954 = vpack.c.b16 %v658, %v654
    %v955 = vpack.c.b16 %v659, %v655
    %v956 = vpack.c.b16 %v660, %v656
    %v957 = vpack.c.b16 %v661, %v657
    %v958 = vpack.c.b16 %v666, %v662
    %v959 = vpack.c.b16 %v667, %v663
    %v960 = vpack.c.b16 %v668, %v664
    %v961 = vpack.c.b16 %v669, %v665
    %v962 = vpack.c.b16 %v674, %v670
    %v963 = vpack.c.b16 %v675, %v671
    %v964 = vpack.c.b16 %v676, %v672
    %v965 = vpack.c.b16 %v677, %v673
    %v966 = vpack.c.b16 %v682, %v678
    %v967 = vpack.c.b16 %v683, %v679
    %v968 = vpack.c.b16 %v684, %v680
    %v969 = vpack.c.b16 %v685, %v681
    %v970 = vpack.c.b16 %v690, %v686
    %v971 = vpack.c.b16 %v691, %v687
    %v972 = vpack.c.b16 %v692, %v688
    %v973 = vpack.c.b16 %v693, %v689
    %v974 = vpack.c.b16 %v698, %v694
    %v975 = vpack.c.b16 %v699, %v695
    %v976 = vpack.c.b16 %v700, %v696
    %v977 = vpack.c.b16 %v701, %v697
    %v978 = vpack.c.b16 %v706, %v702
    %v979 = vpack.c.b16 %v707, %v703
    %v980 = vpack.c.b16 %v708, %v704
    %v981 = vpack.c.b16 %v709, %v705
    %v982 = vpack.c.b16 %v714, %v710
    %v983 = vpack.c.b16 %v715, %v711
    %v984 = vpack.c.b16 %v716, %v712
    %v985 = vpack.c.b16 %v717, %v713
    %v986 = vpack.c.b16 %v722, %v718
    %v987 = vpack.c.b16 %v723, %v719
    %v988 = vpack.c.b16 %v724, %v720
    %v989 = vpack.c.b16 %v725, %v721
    %v990 = vpack.c.b16 %v730, %v726
    %v991 = vpack.c.b16 %v731, %v727
    %v992 = vpack.c.b16 %v732, %v728
    %v993 = vpack.c.b16 %v733, %v729
    %v994 = vpack.c.b16 %v738, %v734
    %v995 = vpack.c.b16 %v739, %v735
    %v996 = vpack.c.b16 %v740, %v736
    %v997 = vpack.c.b16 %v741, %v737
    %v998 = vpack.c.b16 %v746, %v742
    %v999 = vpack.c.b16 %v747, %v743
    %v1000 = vpack.c.b16 %v748, %v744
    %v1001 = vpack.c.b16 %v749, %v745
    %v1002 = vpack.c.b16 %v754, %v750
    %v1003 = vpack.c.b16 %v755, %v751
    %v1004 = vpack.c.b16 %v756, %v752
    %v1005 = vpack.c.b16 %v757, %v753
    %v1006 = vpack.c.b16 %v762, %v758
    %v1007 = vpack.c.b16 %v763, %v759
    %v1008 = vpack.c.b16 %v764, %v760
    %v1009 = vpack.c.b16 %v765, %v761
    %v1010 = vpack.c.b16 %v770, %v766
    %v1011 = vpack.c.b16 %v771, %v767
    %v1012 = vpack.c.b16 %v772, %v768
    %v1013 = vpack.c.b16 %v773, %v769
    %v1014 = vpack.c.b16 %v778, %v774
    %v1015 = vpack.c.b16 %v779, %v775
    %v1016 = vpack.c.b16 %v780, %v776
    %v1017 = vpack.c.b16 %v781, %v777
    %v1018 = vpack.c.b16 %v786, %v782
    %v1019 = vpack.c.b16 %v787, %v783
    %v1020 = vpack.c.b16 %v788, %v784
    %v1021 = vpack.c.b16 %v789, %v785
    %v1022 = vpack.c.b16 %v794, %v790
    %v1023 = vpack.c.b16 %v795, %v791
    %v1024 = vpack.c.b16 %v796, %v792
    %v1025 = vpack.c.b16 %v797, %v793
    %v1026 = vpack.c.b16 %v802, %v798
    %v1027 = vpack.c.b16 %v803, %v799
    %v1028 = vpack.c.b16 %v804, %v800
    %v1029 = vpack.c.b16 %v805, %v801
    %v1030 = vpack.c.b16 %v810, %v806
    %v1031 = vpack.c.b16 %v811, %v807
    %v1032 = vpack.c.b16 %v812, %v808
    %v1033 = vpack.c.b16 %v813, %v809
    %v1034 = vpack.c.b16 %v818, %v814
    %v1035 = vpack.c.b16 %v819, %v815
    %v1036 = vpack.c.b16 %v820, %v816
    %v1037 = vpack.c.b16 %v821, %v817
    %v1038 = vpack.c.b16 %v826, %v822
    %v1039 = vpack.c.b16 %v827, %v823
    %v1040 = vpack.c.b16 %v828, %v824
    %v1041 = vpack.c.b16 %v829, %v825
    %v1042 = vpack.c.b16 %v834, %v830
    %v1043 = vpack.c.b16 %v835, %v831
    %v1044 = vpack.c.b16 %v836, %v832
    %v1045 = vpack.c.b16 %v837, %v833
    %v1046 = vpack.c.b16 %v842, %v838
    %v1047 = vpack.c.b16 %v843, %v839
    %v1048 = vpack.c.b16 %v844, %v840
    %v1049 = vpack.c.b16 %v845, %v841
    %v1050 = vpack.c.b16 %v850, %v846
    %v1051 = vpack.c.b16 %v851, %v847
    %v1052 = vpack.c.b16 %v852, %v848
    %v1053 = vpack.c.b16 %v853, %v849
    %v1054 = vpack.c.b16 %v858, %v854
    %v1055 = vpack.c.b16 %v859, %v855
    %v1056 = vpack.c.b16 %v860, %v856
    %v1057 = vpack.c.b16 %v861, %v857
    %vm1254 = vcmask 130048
    %v1256 = vsel %vm1254, %v267, 0
    %1258 = vmatpush.bf16.msra.mxu0 %v890
    %1259 = vmatpush.bf16.msra.mxu0 %v886
    %1260 = vmatpush.bf16.msra.mxu0 %v882
    %1261 = vmatpush.bf16.msra.mxu0 %v878
    %1262 = vmatpush.bf16.msra.mxu0 %v874
    %1263 = vmatpush.bf16.msra.mxu0 %v870
    %1264 = vmatpush.bf16.msra.mxu0 %v866
    %1265 = vmatpush.bf16.msra.mxu0 %v862
    %1266 = vmatmul.bf16.gmra.mxu0 %v261
    %v1267 = vpop.f32.mrf.mxu0
    %v1268 = vadd.f32 %v242, %v1267
    %v1269 = vpop.f32.mrf.mxu0
    %1270 = vdwg.mxu0
    %1271 = vmatpush.bf16.msra.mxu0 %v922
    %1272 = vmatpush.bf16.msra.mxu0 %v918
    %1273 = vmatpush.bf16.msra.mxu0 %v914
    %1274 = vmatpush.bf16.msra.mxu0 %v910
    %1275 = vmatpush.bf16.msra.mxu0 %v906
    %1276 = vmatpush.bf16.msra.mxu0 %v902
    %1277 = vmatpush.bf16.msra.mxu0 %v898
    %1278 = vmatpush.bf16.msra.mxu0 %v894
    %1279 = vmatmul.bf16.gmra.mxu0 %v262
    %v1280 = vpop.f32.mrf.mxu0
    %v1281 = vadd.f32 %v1268, %v1280
    %v1282 = vpop.f32.mrf.mxu0
    %1283 = vdwg.mxu0
    %1284 = vmatpush.bf16.msra.mxu0 %v954
    %1285 = vmatpush.bf16.msra.mxu0 %v950
    %1286 = vmatpush.bf16.msra.mxu0 %v946
    %1287 = vmatpush.bf16.msra.mxu0 %v942
    %1288 = vmatpush.bf16.msra.mxu0 %v938
    %1289 = vmatpush.bf16.msra.mxu0 %v934
    %1290 = vmatpush.bf16.msra.mxu0 %v930
    %1291 = vmatpush.bf16.msra.mxu0 %v926
    %1292 = vmatmul.bf16.gmra.mxu0 %v263
    %v1293 = vpop.f32.mrf.mxu0
    %v1294 = vadd.f32 %v1281, %v1293
    %v1295 = vpop.f32.mrf.mxu0
    %1296 = vdwg.mxu0
    %1297 = vmatpush.bf16.msra.mxu0 %v986
    %1298 = vmatpush.bf16.msra.mxu0 %v982
    %1299 = vmatpush.bf16.msra.mxu0 %v978
    %1300 = vmatpush.bf16.msra.mxu0 %v974
    %1301 = vmatpush.bf16.msra.mxu0 %v970
    %1302 = vmatpush.bf16.msra.mxu0 %v966
    %1303 = vmatpush.bf16.msra.mxu0 %v962
    %1304 = vmatpush.bf16.msra.mxu0 %v958
    %1305 = vmatmul.bf16.gmra.mxu0 %v264
    %v1306 = vpop.f32.mrf.mxu0
    %v1307 = vadd.f32 %v1294, %v1306
    %v1308 = vpop.f32.mrf.mxu0
    %1309 = vdwg.mxu0
    %1310 = vmatpush.bf16.msra.mxu0 %v1018
    %1311 = vmatpush.bf16.msra.mxu0 %v1014
    %1312 = vmatpush.bf16.msra.mxu0 %v1010
    %1313 = vmatpush.bf16.msra.mxu0 %v1006
    %1314 = vmatpush.bf16.msra.mxu0 %v1002
    %1315 = vmatpush.bf16.msra.mxu0 %v998
    %1316 = vmatpush.bf16.msra.mxu0 %v994
    %1317 = vmatpush.bf16.msra.mxu0 %v990
    %1318 = vmatmul.bf16.gmra.mxu0 %v265
    %v1319 = vpop.f32.mrf.mxu0
    %v1320 = vadd.f32 %v1307, %v1319
    %v1321 = vpop.f32.mrf.mxu0
    %1322 = vdwg.mxu0
    %1323 = vmatpush.bf16.msra.mxu0 %v1050
    %1324 = vmatpush.bf16.msra.mxu0 %v1046
    %1325 = vmatpush.bf16.msra.mxu0 %v1042
    %1326 = vmatpush.bf16.msra.mxu0 %v1038
    %1327 = vmatpush.bf16.msra.mxu0 %v1034
    %1328 = vmatpush.bf16.msra.mxu0 %v1030
    %1329 = vmatpush.bf16.msra.mxu0 %v1026
    %1330 = vmatpush.bf16.msra.mxu0 %v1022
    %1331 = vmatmul.bf16.gmra.mxu0 %v266
    %v1332 = vpop.f32.mrf.mxu0
    %v1333 = vadd.f32 %v1320, %v1332
    %v1334 = vpop.f32.mrf.mxu0
    %1335 = vdwg.mxu0
    %1336 = vmatpush.bf16.msra.mxu0 0
    %1337 = vmatpush.bf16.msra.mxu0 0
    %1338 = vmatpush.bf16.msra.mxu0 0
    %1339 = vmatpush.bf16.msra.mxu0 0
    %1340 = vmatpush.bf16.msra.mxu0 0
    %1341 = vmatpush.bf16.msra.mxu0 0
    %1342 = vmatpush.bf16.msra.mxu0 0
    %1343 = vmatpush.bf16.msra.mxu0 %v1054
    %1344 = vmatmul.bf16.gmra.mxu0 %v1256
    %v1345 = vpop.f32.mrf.mxu0
    %v1346 = vadd.f32 %v1333, %v1345
    %v1347 = vpop.f32.mrf.mxu0
    %1348 = vdwg.mxu0
    %1349 = vmatpush.bf16.msra.mxu0 %v891
    %1350 = vmatpush.bf16.msra.mxu0 %v887
    %1351 = vmatpush.bf16.msra.mxu0 %v883
    %1352 = vmatpush.bf16.msra.mxu0 %v879
    %1353 = vmatpush.bf16.msra.mxu0 %v875
    %1354 = vmatpush.bf16.msra.mxu0 %v871
    %1355 = vmatpush.bf16.msra.mxu0 %v867
    %1356 = vmatpush.bf16.msra.mxu0 %v863
    %1357 = vmatmul.bf16.gmra.mxu0 %v261
    %v1358 = vpop.f32.mrf.mxu0
    %v1359 = vadd.f32 %v243, %v1358
    %v1360 = vpop.f32.mrf.mxu0
    %1361 = vdwg.mxu0
    %1362 = vmatpush.bf16.msra.mxu0 %v923
    %1363 = vmatpush.bf16.msra.mxu0 %v919
    %1364 = vmatpush.bf16.msra.mxu0 %v915
    %1365 = vmatpush.bf16.msra.mxu0 %v911
    %1366 = vmatpush.bf16.msra.mxu0 %v907
    %1367 = vmatpush.bf16.msra.mxu0 %v903
    %1368 = vmatpush.bf16.msra.mxu0 %v899
    %1369 = vmatpush.bf16.msra.mxu0 %v895
    %1370 = vmatmul.bf16.gmra.mxu0 %v262
    %v1371 = vpop.f32.mrf.mxu0
    %v1372 = vadd.f32 %v1359, %v1371
    %v1373 = vpop.f32.mrf.mxu0
    %1374 = vdwg.mxu0
    %1375 = vmatpush.bf16.msra.mxu0 %v955
    %1376 = vmatpush.bf16.msra.mxu0 %v951
    %1377 = vmatpush.bf16.msra.mxu0 %v947
    %1378 = vmatpush.bf16.msra.mxu0 %v943
    %1379 = vmatpush.bf16.msra.mxu0 %v939
    %1380 = vmatpush.bf16.msra.mxu0 %v935
    %1381 = vmatpush.bf16.msra.mxu0 %v931
    %1382 = vmatpush.bf16.msra.mxu0 %v927
    %1383 = vmatmul.bf16.gmra.mxu0 %v263
    %v1384 = vpop.f32.mrf.mxu0
    %v1385 = vadd.f32 %v1372, %v1384
    %v1386 = vpop.f32.mrf.mxu0
    %1387 = vdwg.mxu0
    %1388 = vmatpush.bf16.msra.mxu0 %v987
    %1389 = vmatpush.bf16.msra.mxu0 %v983
    %1390 = vmatpush.bf16.msra.mxu0 %v979
    %1391 = vmatpush.bf16.msra.mxu0 %v975
    %1392 = vmatpush.bf16.msra.mxu0 %v971
    %1393 = vmatpush.bf16.msra.mxu0 %v967
    %1394 = vmatpush.bf16.msra.mxu0 %v963
    %1395 = vmatpush.bf16.msra.mxu0 %v959
    %1396 = vmatmul.bf16.gmra.mxu0 %v264
    %v1397 = vpop.f32.mrf.mxu0
    %v1398 = vadd.f32 %v1385, %v1397
    %v1399 = vpop.f32.mrf.mxu0
    %1400 = vdwg.mxu0
    %1401 = vmatpush.bf16.msra.mxu0 %v1019
    %1402 = vmatpush.bf16.msra.mxu0 %v1015
    %1403 = vmatpush.bf16.msra.mxu0 %v1011
    %1404 = vmatpush.bf16.msra.mxu0 %v1007
    %1405 = vmatpush.bf16.msra.mxu0 %v1003
    %1406 = vmatpush.bf16.msra.mxu0 %v999
    %1407 = vmatpush.bf16.msra.mxu0 %v995
    %1408 = vmatpush.bf16.msra.mxu0 %v991
    %1409 = vmatmul.bf16.gmra.mxu0 %v265
    %v1410 = vpop.f32.mrf.mxu0
    %v1411 = vadd.f32 %v1398, %v1410
    %v1412 = vpop.f32.mrf.mxu0
    %1413 = vdwg.mxu0
    %1414 = vmatpush.bf16.msra.mxu0 %v1051
    %1415 = vmatpush.bf16.msra.mxu0 %v1047
    %1416 = vmatpush.bf16.msra.mxu0 %v1043
    %1417 = vmatpush.bf16.msra.mxu0 %v1039
    %1418 = vmatpush.bf16.msra.mxu0 %v1035
    %1419 = vmatpush.bf16.msra.mxu0 %v1031
    %1420 = vmatpush.bf16.msra.mxu0 %v1027
    %1421 = vmatpush.bf16.msra.mxu0 %v1023
    %1422 = vmatmul.bf16.gmra.mxu0 %v266
    %v1423 = vpop.f32.mrf.mxu0
    %v1424 = vadd.f32 %v1411, %v1423
    %v1425 = vpop.f32.mrf.mxu0
    %1426 = vdwg.mxu0
    %1427 = vmatpush.bf16.msra.mxu0 0
    %1428 = vmatpush.bf16.msra.mxu0 0
    %1429 = vmatpush.bf16.msra.mxu0 0
    %1430 = vmatpush.bf16.msra.mxu0 0
    %1431 = vmatpush.bf16.msra.mxu0 0
    %1432 = vmatpush.bf16.msra.mxu0 0
    %1433 = vmatpush.bf16.msra.mxu0 0
    %1434 = vmatpush.bf16.msra.mxu0 %v1055
    %1435 = vmatmul.bf16.gmra.mxu0 %v1256
    %v1436 = vpop.f32.mrf.mxu0
    %v1437 = vadd.f32 %v1424, %v1436
    %v1438 = vpop.f32.mrf.mxu0
    %1439 = vdwg.mxu0
    %1440 = vmatpush.bf16.msra.mxu0 %v892
    %1441 = vmatpush.bf16.msra.mxu0 %v888
    %1442 = vmatpush.bf16.msra.mxu0 %v884
    %1443 = vmatpush.bf16.msra.mxu0 %v880
    %1444 = vmatpush.bf16.msra.mxu0 %v876
    %1445 = vmatpush.bf16.msra.mxu0 %v872
    %1446 = vmatpush.bf16.msra.mxu0 %v868
    %1447 = vmatpush.bf16.msra.mxu0 %v864
    %1448 = vmatmul.bf16.gmra.mxu0 %v261
    %v1449 = vpop.f32.mrf.mxu0
    %v1450 = vadd.f32 %v244, %v1449
    %v1451 = vpop.f32.mrf.mxu0
    %1452 = vdwg.mxu0
    %1453 = vmatpush.bf16.msra.mxu0 %v924
    %1454 = vmatpush.bf16.msra.mxu0 %v920
    %1455 = vmatpush.bf16.msra.mxu0 %v916
    %1456 = vmatpush.bf16.msra.mxu0 %v912
    %1457 = vmatpush.bf16.msra.mxu0 %v908
    %1458 = vmatpush.bf16.msra.mxu0 %v904
    %1459 = vmatpush.bf16.msra.mxu0 %v900
    %1460 = vmatpush.bf16.msra.mxu0 %v896
    %1461 = vmatmul.bf16.gmra.mxu0 %v262
    %v1462 = vpop.f32.mrf.mxu0
    %v1463 = vadd.f32 %v1450, %v1462
    %v1464 = vpop.f32.mrf.mxu0
    %1465 = vdwg.mxu0
    %1466 = vmatpush.bf16.msra.mxu0 %v956
    %1467 = vmatpush.bf16.msra.mxu0 %v952
    %1468 = vmatpush.bf16.msra.mxu0 %v948
    %1469 = vmatpush.bf16.msra.mxu0 %v944
    %1470 = vmatpush.bf16.msra.mxu0 %v940
    %1471 = vmatpush.bf16.msra.mxu0 %v936
    %1472 = vmatpush.bf16.msra.mxu0 %v932
    %1473 = vmatpush.bf16.msra.mxu0 %v928
    %1474 = vmatmul.bf16.gmra.mxu0 %v263
    %v1475 = vpop.f32.mrf.mxu0
    %v1476 = vadd.f32 %v1463, %v1475
    %v1477 = vpop.f32.mrf.mxu0
    %1478 = vdwg.mxu0
    %1479 = vmatpush.bf16.msra.mxu0 %v988
    %1480 = vmatpush.bf16.msra.mxu0 %v984
    %1481 = vmatpush.bf16.msra.mxu0 %v980
    %1482 = vmatpush.bf16.msra.mxu0 %v976
    %1483 = vmatpush.bf16.msra.mxu0 %v972
    %1484 = vmatpush.bf16.msra.mxu0 %v968
    %1485 = vmatpush.bf16.msra.mxu0 %v964
    %1486 = vmatpush.bf16.msra.mxu0 %v960
    %1487 = vmatmul.bf16.gmra.mxu0 %v264
    %v1488 = vpop.f32.mrf.mxu0
    %v1489 = vadd.f32 %v1476, %v1488
    %v1490 = vpop.f32.mrf.mxu0
    %1491 = vdwg.mxu0
    %1492 = vmatpush.bf16.msra.mxu0 %v1020
    %1493 = vmatpush.bf16.msra.mxu0 %v1016
    %1494 = vmatpush.bf16.msra.mxu0 %v1012
    %1495 = vmatpush.bf16.msra.mxu0 %v1008
    %1496 = vmatpush.bf16.msra.mxu0 %v1004
    %1497 = vmatpush.bf16.msra.mxu0 %v1000
    %1498 = vmatpush.bf16.msra.mxu0 %v996
    %1499 = vmatpush.bf16.msra.mxu0 %v992
    %1500 = vmatmul.bf16.gmra.mxu0 %v265
    %v1501 = vpop.f32.mrf.mxu0
    %v1502 = vadd.f32 %v1489, %v1501
    %v1503 = vpop.f32.mrf.mxu0
    %1504 = vdwg.mxu0
    %1505 = vmatpush.bf16.msra.mxu0 %v1052
    %1506 = vmatpush.bf16.msra.mxu0 %v1048
    %1507 = vmatpush.bf16.msra.mxu0 %v1044
    %1508 = vmatpush.bf16.msra.mxu0 %v1040
    %1509 = vmatpush.bf16.msra.mxu0 %v1036
    %1510 = vmatpush.bf16.msra.mxu0 %v1032
    %1511 = vmatpush.bf16.msra.mxu0 %v1028
    %1512 = vmatpush.bf16.msra.mxu0 %v1024
    %1513 = vmatmul.bf16.gmra.mxu0 %v266
    %v1514 = vpop.f32.mrf.mxu0
    %v1515 = vadd.f32 %v1502, %v1514
    %v1516 = vpop.f32.mrf.mxu0
    %1517 = vdwg.mxu0
    %1518 = vmatpush.bf16.msra.mxu0 0
    %1519 = vmatpush.bf16.msra.mxu0 0
    %1520 = vmatpush.bf16.msra.mxu0 0
    %1521 = vmatpush.bf16.msra.mxu0 0
    %1522 = vmatpush.bf16.msra.mxu0 0
    %1523 = vmatpush.bf16.msra.mxu0 0
    %1524 = vmatpush.bf16.msra.mxu0 0
    %1525 = vmatpush.bf16.msra.mxu0 %v1056
    %1526 = vmatmul.bf16.gmra.mxu0 %v1256
    %v1527 = vpop.f32.mrf.mxu0
    %v1528 = vadd.f32 %v1515, %v1527
    %v1529 = vpop.f32.mrf.mxu0
    %1530 = vdwg.mxu0
    %1531 = vmatpush.bf16.msra.mxu0 %v893
    %1532 = vmatpush.bf16.msra.mxu0 %v889
    %1533 = vmatpush.bf16.msra.mxu0 %v885
    %1534 = vmatpush.bf16.msra.mxu0 %v881
    %1535 = vmatpush.bf16.msra.mxu0 %v877
    %1536 = vmatpush.bf16.msra.mxu0 %v873
    %1537 = vmatpush.bf16.msra.mxu0 %v869
    %1538 = vmatpush.bf16.msra.mxu0 %v865
    %1539 = vmatmul.bf16.gmra.mxu0 %v261
    %v1540 = vpop.f32.mrf.mxu0
    %v1541 = vadd.f32 %v245, %v1540
    %v1542 = vpop.f32.mrf.mxu0
    %1543 = vdwg.mxu0
    %1544 = vmatpush.bf16.msra.mxu0 %v925
    %1545 = vmatpush.bf16.msra.mxu0 %v921
    %1546 = vmatpush.bf16.msra.mxu0 %v917
    %1547 = vmatpush.bf16.msra.mxu0 %v913
    %1548 = vmatpush.bf16.msra.mxu0 %v909
    %1549 = vmatpush.bf16.msra.mxu0 %v905
    %1550 = vmatpush.bf16.msra.mxu0 %v901
    %1551 = vmatpush.bf16.msra.mxu0 %v897
    %1552 = vmatmul.bf16.gmra.mxu0 %v262
    %v1553 = vpop.f32.mrf.mxu0
    %v1554 = vadd.f32 %v1541, %v1553
    %v1555 = vpop.f32.mrf.mxu0
    %1556 = vdwg.mxu0
    %1557 = vmatpush.bf16.msra.mxu0 %v957
    %1558 = vmatpush.bf16.msra.mxu0 %v953
    %1559 = vmatpush.bf16.msra.mxu0 %v949
    %1560 = vmatpush.bf16.msra.mxu0 %v945
    %1561 = vmatpush.bf16.msra.mxu0 %v941
    %1562 = vmatpush.bf16.msra.mxu0 %v937
    %1563 = vmatpush.bf16.msra.mxu0 %v933
    %1564 = vmatpush.bf16.msra.mxu0 %v929
    %1565 = vmatmul.bf16.gmra.mxu0 %v263
    %v1566 = vpop.f32.mrf.mxu0
    %v1567 = vadd.f32 %v1554, %v1566
    %v1568 = vpop.f32.mrf.mxu0
    %1569 = vdwg.mxu0
    %1570 = vmatpush.bf16.msra.mxu0 %v989
    %1571 = vmatpush.bf16.msra.mxu0 %v985
    %1572 = vmatpush.bf16.msra.mxu0 %v981
    %1573 = vmatpush.bf16.msra.mxu0 %v977
    %1574 = vmatpush.bf16.msra.mxu0 %v973
    %1575 = vmatpush.bf16.msra.mxu0 %v969
    %1576 = vmatpush.bf16.msra.mxu0 %v965
    %1577 = vmatpush.bf16.msra.mxu0 %v961
    %1578 = vmatmul.bf16.gmra.mxu0 %v264
    %v1579 = vpop.f32.mrf.mxu0
    %v1580 = vadd.f32 %v1567, %v1579
    %v1581 = vpop.f32.mrf.mxu0
    %1582 = vdwg.mxu0
    %1583 = vmatpush.bf16.msra.mxu0 %v1021
    %1584 = vmatpush.bf16.msra.mxu0 %v1017
    %1585 = vmatpush.bf16.msra.mxu0 %v1013
    %1586 = vmatpush.bf16.msra.mxu0 %v1009
    %1587 = vmatpush.bf16.msra.mxu0 %v1005
    %1588 = vmatpush.bf16.msra.mxu0 %v1001
    %1589 = vmatpush.bf16.msra.mxu0 %v997
    %1590 = vmatpush.bf16.msra.mxu0 %v993
    %1591 = vmatmul.bf16.gmra.mxu0 %v265
    %v1592 = vpop.f32.mrf.mxu0
    %v1593 = vadd.f32 %v1580, %v1592
    %v1594 = vpop.f32.mrf.mxu0
    %1595 = vdwg.mxu0
    %1596 = vmatpush.bf16.msra.mxu0 %v1053
    %1597 = vmatpush.bf16.msra.mxu0 %v1049
    %1598 = vmatpush.bf16.msra.mxu0 %v1045
    %1599 = vmatpush.bf16.msra.mxu0 %v1041
    %1600 = vmatpush.bf16.msra.mxu0 %v1037
    %1601 = vmatpush.bf16.msra.mxu0 %v1033
    %1602 = vmatpush.bf16.msra.mxu0 %v1029
    %1603 = vmatpush.bf16.msra.mxu0 %v1025
    %1604 = vmatmul.bf16.gmra.mxu0 %v266
    %v1605 = vpop.f32.mrf.mxu0
    %v1606 = vadd.f32 %v1593, %v1605
    %v1607 = vpop.f32.mrf.mxu0
    %1608 = vdwg.mxu0
    %1609 = vmatpush.bf16.msra.mxu0 0
    %1610 = vmatpush.bf16.msra.mxu0 0
    %1611 = vmatpush.bf16.msra.mxu0 0
    %1612 = vmatpush.bf16.msra.mxu0 0
    %1613 = vmatpush.bf16.msra.mxu0 0
    %1614 = vmatpush.bf16.msra.mxu0 0
    %1615 = vmatpush.bf16.msra.mxu0 0
    %1616 = vmatpush.bf16.msra.mxu0 %v1057
    %1617 = vmatmul.bf16.gmra.mxu0 %v1256
    %v1618 = vpop.f32.mrf.mxu0
    %v1619 = vadd.f32 %v1606, %v1618
    %v1620 = vpop.f32.mrf.mxu0
    %1621 = vdwg.mxu0
    %v1622 = vmax.f32 %v1346, 0.0
    %v1623 = vmax.f32 %v1437, 0.0
    %v1624 = vmax.f32 %v1528, 0.0
    %v1625 = vmax.f32 %v1619, 0.0
    %v1626 = vpack.c.bf16 %v1622, %v1622
    %v1627 = vpack.c.bf16 %v1623, %v1623
    %v1628 = vpack.c.bf16 %v1624, %v1624
    %v1629 = vpack.c.bf16 %v1625, %v1625
    %v1630 = vld [vmem:[%s3] sm:$0xff]
    %v1631 = vld [vmem:[%s3 + $0x8] sm:$0xff]
    %v1632 = vld [vmem:[%s3 + $0x10] sm:$0xff]
    %v1633 = vld [vmem:[%s3 + $0x18] sm:$0xff]
    %v1634 = vld [vmem:[%s3 + $0x20] sm:$0xff]
    %v1635 = vld [vmem:[%s3 + $0x28] sm:$0xff]
    %v1636 = vld [vmem:[%s3 + $0x30] sm:$0xff]
    %v1637 = vld [vmem:[%s3 + $0x38] sm:$0xff]
    %v1638 = vld [vmem:[%s3 + $0x40] sm:$0xff]
    %v1639 = vld [vmem:[%s3 + $0x48] sm:$0xff]
    %v1640 = vld [vmem:[%s3 + $0x50] sm:$0xff]
    %v1641 = vld [vmem:[%s3 + $0x58] sm:$0xff]
    %v1642 = vld [vmem:[%s3 + $0x60] sm:$0xff]
    %v1643 = vld [vmem:[%s3 + $0x68] sm:$0xff]
    %v1644 = vld [vmem:[%s3 + $0x70] sm:$0xff]
    %v1645 = vld [vmem:[%s3 + $0x78] sm:$0xff]
    %v1646 = vld [vmem:[%s3 + $0x80] sm:$0xff]
    %v1647 = vld [vmem:[%s3 + $0x88] sm:$0xff]
    %v1648 = vld [vmem:[%s3 + $0x90] sm:$0xff]
    %v1649 = vld [vmem:[%s3 + $0x98] sm:$0xff]
    %v1650 = vld [vmem:[%s3 + $0xa0] sm:$0xff]
    %v1651 = vld [vmem:[%s3 + $0xa8] sm:$0xff]
    %v1652 = vld [vmem:[%s3 + $0xb0] sm:$0xff]
    %v1653 = vld [vmem:[%s3 + $0xb8] sm:$0xff]
    %v1654 = vld [vmem:[%s3 + $0xc0] sm:$0xff]
    %v1655 = vld [vmem:[%s3 + $0xc8] sm:$0xff]
    %v1656 = vld [vmem:[%s3 + $0xd0] sm:$0xff]
    %v1657 = vld [vmem:[%s3 + $0xd8] sm:$0xff]
    %v1658 = vld [vmem:[%s3 + $0xe0] sm:$0xff]
    %v1659 = vld [vmem:[%s3 + $0xe8] sm:$0xff]
    %v1660 = vld [vmem:[%s3 + $0xf0] sm:$0xff]
    %v1661 = vld [vmem:[%s3 + $0xf8] sm:$0xff]
    %v1662 = vld [vmem:[%s3 + $0x100] sm:$0xff]
    %v1663 = vld [vmem:[%s3 + $0x108] sm:$0xff]
    %v1664 = vld [vmem:[%s3 + $0x110] sm:$0xff]
    %v1665 = vld [vmem:[%s3 + $0x118] sm:$0xff]
    %v1666 = vld [vmem:[%s3 + $0x120] sm:$0xff]
    %v1667 = vld [vmem:[%s3 + $0x128] sm:$0xff]
    %v1668 = vld [vmem:[%s3 + $0x130] sm:$0xff]
    %v1669 = vld [vmem:[%s3 + $0x138] sm:$0xff]
    %v1670 = vld [vmem:[%s3 + $0x140] sm:$0xff]
    %v1671 = vld [vmem:[%s3 + $0x148] sm:$0xff]
    %v1672 = vld [vmem:[%s3 + $0x150] sm:$0xff]
    %v1673 = vld [vmem:[%s3 + $0x158] sm:$0xff]
    %v1674 = vld [vmem:[%s3 + $0x160] sm:$0xff]
    %v1675 = vld [vmem:[%s3 + $0x168] sm:$0xff]
    %v1676 = vld [vmem:[%s3 + $0x170] sm:$0xff]
    %v1677 = vld [vmem:[%s3 + $0x178] sm:$0xff]
    %v1678 = vld [vmem:[%s3 + $0x180] sm:$0xff]
    %v1679 = vld [vmem:[%s3 + $0x188] sm:$0xff]
    %v1680 = vld [vmem:[%s4] sm:$0x3]
    %v1682 = vperm.slane %v1680, 0
    %v1683 = vperm.slane %v1680, 1
    %v1736 = vunpack.c.l.b16 %v1630
    %v1737 = vunpack.c.h.b16 %v1630
    %v1738 = vunpack.c.l.b16 %v1631
    %v1739 = vunpack.c.h.b16 %v1631
    %v1740 = vunpack.c.l.b16 %v1632
    %v1741 = vunpack.c.h.b16 %v1632
    %v1742 = vunpack.c.l.b16 %v1633
    %v1743 = vunpack.c.h.b16 %v1633
    %v1744 = vunpack.c.l.b16 %v1634
    %v1745 = vunpack.c.h.b16 %v1634
    %v1746 = vunpack.c.l.b16 %v1635
    %v1747 = vunpack.c.h.b16 %v1635
    %v1748 = vunpack.c.l.b16 %v1636
    %v1749 = vunpack.c.h.b16 %v1636
    %v1750 = vunpack.c.l.b16 %v1637
    %v1751 = vunpack.c.h.b16 %v1637
    %v1752 = vunpack.c.l.b16 %v1638
    %v1753 = vunpack.c.h.b16 %v1638
    %v1754 = vunpack.c.l.b16 %v1639
    %v1755 = vunpack.c.h.b16 %v1639
    %v1756 = vunpack.c.l.b16 %v1640
    %v1757 = vunpack.c.h.b16 %v1640
    %v1758 = vunpack.c.l.b16 %v1641
    %v1759 = vunpack.c.h.b16 %v1641
    %v1760 = vunpack.c.l.b16 %v1642
    %v1761 = vunpack.c.h.b16 %v1642
    %v1762 = vunpack.c.l.b16 %v1643
    %v1763 = vunpack.c.h.b16 %v1643
    %v1764 = vunpack.c.l.b16 %v1644
    %v1765 = vunpack.c.h.b16 %v1644
    %v1766 = vunpack.c.l.b16 %v1645
    %v1767 = vunpack.c.h.b16 %v1645
    %v1768 = vunpack.c.l.b16 %v1646
    %v1769 = vunpack.c.h.b16 %v1646
    %v1770 = vunpack.c.l.b16 %v1647
    %v1771 = vunpack.c.h.b16 %v1647
    %v1772 = vunpack.c.l.b16 %v1648
    %v1773 = vunpack.c.h.b16 %v1648
    %v1774 = vunpack.c.l.b16 %v1649
    %v1775 = vunpack.c.h.b16 %v1649
    %v1776 = vunpack.c.l.b16 %v1650
    %v1777 = vunpack.c.h.b16 %v1650
    %v1778 = vunpack.c.l.b16 %v1651
    %v1779 = vunpack.c.h.b16 %v1651
    %v1780 = vunpack.c.l.b16 %v1652
    %v1781 = vunpack.c.h.b16 %v1652
    %v1782 = vunpack.c.l.b16 %v1653
    %v1783 = vunpack.c.h.b16 %v1653
    %v1784 = vunpack.c.l.b16 %v1654
    %v1785 = vunpack.c.h.b16 %v1654
    %v1786 = vunpack.c.l.b16 %v1655
    %v1787 = vunpack.c.h.b16 %v1655
    %v1788 = vunpack.c.l.b16 %v1656
    %v1789 = vunpack.c.h.b16 %v1656
    %v1790 = vunpack.c.l.b16 %v1657
    %v1791 = vunpack.c.h.b16 %v1657
    %v1792 = vunpack.c.l.b16 %v1658
    %v1793 = vunpack.c.h.b16 %v1658
    %v1794 = vunpack.c.l.b16 %v1659
    %v1795 = vunpack.c.h.b16 %v1659
    %v1796 = vunpack.c.l.b16 %v1660
    %v1797 = vunpack.c.h.b16 %v1660
    %v1798 = vunpack.c.l.b16 %v1661
    %v1799 = vunpack.c.h.b16 %v1661
    %v1800 = vunpack.c.l.b16 %v1662
    %v1801 = vunpack.c.h.b16 %v1662
    %v1802 = vunpack.c.l.b16 %v1663
    %v1803 = vunpack.c.h.b16 %v1663
    %v1804 = vunpack.c.l.b16 %v1664
    %v1805 = vunpack.c.h.b16 %v1664
    %v1806 = vunpack.c.l.b16 %v1665
    %v1807 = vunpack.c.h.b16 %v1665
    %v1808 = vunpack.c.l.b16 %v1666
    %v1809 = vunpack.c.h.b16 %v1666
    %v1810 = vunpack.c.l.b16 %v1667
    %v1811 = vunpack.c.h.b16 %v1667
    %v1812 = vunpack.c.l.b16 %v1668
    %v1813 = vunpack.c.h.b16 %v1668
    %v1814 = vunpack.c.l.b16 %v1669
    %v1815 = vunpack.c.h.b16 %v1669
    %v1816 = vunpack.c.l.b16 %v1670
    %v1817 = vunpack.c.h.b16 %v1670
    %v1818 = vunpack.c.l.b16 %v1671
    %v1819 = vunpack.c.h.b16 %v1671
    %v1820 = vunpack.c.l.b16 %v1672
    %v1821 = vunpack.c.h.b16 %v1672
    %v1822 = vunpack.c.l.b16 %v1673
    %v1823 = vunpack.c.h.b16 %v1673
    %v1824 = vunpack.c.l.b16 %v1674
    %v1825 = vunpack.c.h.b16 %v1674
    %v1826 = vunpack.c.l.b16 %v1675
    %v1827 = vunpack.c.h.b16 %v1675
    %v1828 = vunpack.c.l.b16 %v1676
    %v1829 = vunpack.c.h.b16 %v1676
    %v1830 = vunpack.c.l.b16 %v1677
    %v1831 = vunpack.c.h.b16 %v1677
    %v1832 = vunpack.c.l.b16 %v1678
    %v1833 = vunpack.c.h.b16 %v1678
    %v1834 = vunpack.c.l.b16 %v1679
    %v1835 = vunpack.c.h.b16 %v1679
    %v1836 = vpack.c.b16 %v1738, %v1736
    %v1837 = vpack.c.b16 %v1739, %v1737
    %v1838 = vpack.c.b16 %v1742, %v1740
    %v1839 = vpack.c.b16 %v1743, %v1741
    %v1840 = vpack.c.b16 %v1746, %v1744
    %v1841 = vpack.c.b16 %v1747, %v1745
    %v1842 = vpack.c.b16 %v1750, %v1748
    %v1843 = vpack.c.b16 %v1751, %v1749
    %v1844 = vpack.c.b16 %v1754, %v1752
    %v1845 = vpack.c.b16 %v1755, %v1753
    %v1846 = vpack.c.b16 %v1758, %v1756
    %v1847 = vpack.c.b16 %v1759, %v1757
    %v1848 = vpack.c.b16 %v1762, %v1760
    %v1849 = vpack.c.b16 %v1763, %v1761
    %v1850 = vpack.c.b16 %v1766, %v1764
    %v1851 = vpack.c.b16 %v1767, %v1765
    %v1852 = vpack.c.b16 %v1770, %v1768
    %v1853 = vpack.c.b16 %v1771, %v1769
    %v1854 = vpack.c.b16 %v1774, %v1772
    %v1855 = vpack.c.b16 %v1775, %v1773
    %v1856 = vpack.c.b16 %v1778, %v1776
    %v1857 = vpack.c.b16 %v1779, %v1777
    %v1858 = vpack.c.b16 %v1782, %v1780
    %v1859 = vpack.c.b16 %v1783, %v1781
    %v1860 = vpack.c.b16 %v1786, %v1784
    %v1861 = vpack.c.b16 %v1787, %v1785
    %v1862 = vpack.c.b16 %v1790, %v1788
    %v1863 = vpack.c.b16 %v1791, %v1789
    %v1864 = vpack.c.b16 %v1794, %v1792
    %v1865 = vpack.c.b16 %v1795, %v1793
    %v1866 = vpack.c.b16 %v1798, %v1796
    %v1867 = vpack.c.b16 %v1799, %v1797
    %v1868 = vpack.c.b16 %v1802, %v1800
    %v1869 = vpack.c.b16 %v1803, %v1801
    %v1870 = vpack.c.b16 %v1806, %v1804
    %v1871 = vpack.c.b16 %v1807, %v1805
    %v1872 = vpack.c.b16 %v1810, %v1808
    %v1873 = vpack.c.b16 %v1811, %v1809
    %v1874 = vpack.c.b16 %v1814, %v1812
    %v1875 = vpack.c.b16 %v1815, %v1813
    %v1876 = vpack.c.b16 %v1818, %v1816
    %v1877 = vpack.c.b16 %v1819, %v1817
    %v1878 = vpack.c.b16 %v1822, %v1820
    %v1879 = vpack.c.b16 %v1823, %v1821
    %v1880 = vpack.c.b16 %v1826, %v1824
    %v1881 = vpack.c.b16 %v1827, %v1825
    %v1882 = vpack.c.b16 %v1830, %v1828
    %v1883 = vpack.c.b16 %v1831, %v1829
    %v1884 = vpack.c.b16 %v1834, %v1832
    %v1885 = vpack.c.b16 %v1835, %v1833
    %v1937 = vsel %vm1254, %v1629, 0
    %1939 = vmatpush.bf16.msra.mxu0 %v1850
    %1940 = vmatpush.bf16.msra.mxu0 %v1848
    %1941 = vmatpush.bf16.msra.mxu0 %v1846
    %1942 = vmatpush.bf16.msra.mxu0 %v1844
    %1943 = vmatpush.bf16.msra.mxu0 %v1842
    %1944 = vmatpush.bf16.msra.mxu0 %v1840
    %1945 = vmatpush.bf16.msra.mxu0 %v1838
    %1946 = vmatpush.bf16.msra.mxu0 %v1836
    %1947 = vmatmul.bf16.gmra.mxu0 %v1626
    %v1948 = vpop.f32.mrf.mxu0
    %v1949 = vadd.f32 %v1682, %v1948
    %v1950 = vpop.f32.mrf.mxu0
    %1951 = vdwg.mxu0
    %1952 = vmatpush.bf16.msra.mxu0 %v1866
    %1953 = vmatpush.bf16.msra.mxu0 %v1864
    %1954 = vmatpush.bf16.msra.mxu0 %v1862
    %1955 = vmatpush.bf16.msra.mxu0 %v1860
    %1956 = vmatpush.bf16.msra.mxu0 %v1858
    %1957 = vmatpush.bf16.msra.mxu0 %v1856
    %1958 = vmatpush.bf16.msra.mxu0 %v1854
    %1959 = vmatpush.bf16.msra.mxu0 %v1852
    %1960 = vmatmul.bf16.gmra.mxu0 %v1627
    %v1961 = vpop.f32.mrf.mxu0
    %v1962 = vadd.f32 %v1949, %v1961
    %v1963 = vpop.f32.mrf.mxu0
    %1964 = vdwg.mxu0
    %1965 = vmatpush.bf16.msra.mxu0 %v1882
    %1966 = vmatpush.bf16.msra.mxu0 %v1880
    %1967 = vmatpush.bf16.msra.mxu0 %v1878
    %1968 = vmatpush.bf16.msra.mxu0 %v1876
    %1969 = vmatpush.bf16.msra.mxu0 %v1874
    %1970 = vmatpush.bf16.msra.mxu0 %v1872
    %1971 = vmatpush.bf16.msra.mxu0 %v1870
    %1972 = vmatpush.bf16.msra.mxu0 %v1868
    %1973 = vmatmul.bf16.gmra.mxu0 %v1628
    %v1974 = vpop.f32.mrf.mxu0
    %v1975 = vadd.f32 %v1962, %v1974
    %v1976 = vpop.f32.mrf.mxu0
    %1977 = vdwg.mxu0
    %1978 = vmatpush.bf16.msra.mxu0 0
    %1979 = vmatpush.bf16.msra.mxu0 0
    %1980 = vmatpush.bf16.msra.mxu0 0
    %1981 = vmatpush.bf16.msra.mxu0 0
    %1982 = vmatpush.bf16.msra.mxu0 0
    %1983 = vmatpush.bf16.msra.mxu0 0
    %1984 = vmatpush.bf16.msra.mxu0 0
    %1985 = vmatpush.bf16.msra.mxu0 %v1884
    %1986 = vmatmul.bf16.gmra.mxu0 %v1937
    %v1987 = vpop.f32.mrf.mxu0
    %v1988 = vadd.f32 %v1975, %v1987
    %v1989 = vpop.f32.mrf.mxu0
    %1990 = vdwg.mxu0
    %1991 = vmatpush.bf16.msra.mxu0 %v1851
    %1992 = vmatpush.bf16.msra.mxu0 %v1849
    %1993 = vmatpush.bf16.msra.mxu0 %v1847
    %1994 = vmatpush.bf16.msra.mxu0 %v1845
    %1995 = vmatpush.bf16.msra.mxu0 %v1843
    %1996 = vmatpush.bf16.msra.mxu0 %v1841
    %1997 = vmatpush.bf16.msra.mxu0 %v1839
    %1998 = vmatpush.bf16.msra.mxu0 %v1837
    %1999 = vmatmul.bf16.gmra.mxu0 %v1626
    %v2000 = vpop.f32.mrf.mxu0
    %v2001 = vadd.f32 %v1683, %v2000
    %v2002 = vpop.f32.mrf.mxu0
    %2003 = vdwg.mxu0
    %2004 = vmatpush.bf16.msra.mxu0 %v1867
    %2005 = vmatpush.bf16.msra.mxu0 %v1865
    %2006 = vmatpush.bf16.msra.mxu0 %v1863
    %2007 = vmatpush.bf16.msra.mxu0 %v1861
    %2008 = vmatpush.bf16.msra.mxu0 %v1859
    %2009 = vmatpush.bf16.msra.mxu0 %v1857
    %2010 = vmatpush.bf16.msra.mxu0 %v1855
    %2011 = vmatpush.bf16.msra.mxu0 %v1853
    %2012 = vmatmul.bf16.gmra.mxu0 %v1627
    %v2013 = vpop.f32.mrf.mxu0
    %v2014 = vadd.f32 %v2001, %v2013
    %v2015 = vpop.f32.mrf.mxu0
    %2016 = vdwg.mxu0
    %2017 = vmatpush.bf16.msra.mxu0 %v1883
    %2018 = vmatpush.bf16.msra.mxu0 %v1881
    %2019 = vmatpush.bf16.msra.mxu0 %v1879
    %2020 = vmatpush.bf16.msra.mxu0 %v1877
    %2021 = vmatpush.bf16.msra.mxu0 %v1875
    %2022 = vmatpush.bf16.msra.mxu0 %v1873
    %2023 = vmatpush.bf16.msra.mxu0 %v1871
    %2024 = vmatpush.bf16.msra.mxu0 %v1869
    %2025 = vmatmul.bf16.gmra.mxu0 %v1628
    %v2026 = vpop.f32.mrf.mxu0
    %v2027 = vadd.f32 %v2014, %v2026
    %v2028 = vpop.f32.mrf.mxu0
    %2029 = vdwg.mxu0
    %2030 = vmatpush.bf16.msra.mxu0 0
    %2031 = vmatpush.bf16.msra.mxu0 0
    %2032 = vmatpush.bf16.msra.mxu0 0
    %2033 = vmatpush.bf16.msra.mxu0 0
    %2034 = vmatpush.bf16.msra.mxu0 0
    %2035 = vmatpush.bf16.msra.mxu0 0
    %2036 = vmatpush.bf16.msra.mxu0 0
    %2037 = vmatpush.bf16.msra.mxu0 %v1885
    %2038 = vmatmul.bf16.gmra.mxu0 %v1937
    %v2039 = vpop.f32.mrf.mxu0
    %v2040 = vadd.f32 %v2027, %v2039
    %v2041 = vpop.f32.mrf.mxu0
    %2042 = vdwg.mxu0
    %v2043 = vld [vmem:[%s9] sm:$0xff]
    %v2044 = vmul.f32 %v2040, 0.5
    %v2045 = vmul.f32 %v2044, 1.442695
    %v2046 = vpow.pop %v2045
    %v2047 = vmul.f32 %v2043, %v2046
    %v2048 = vadd.f32 %v1988, %v2047
    %v2049 = vpack.c.bf16 %v2048, %v2048
    %v2050 = vld [vmem:[%s5] sm:$0xff]
    %v2051 = vld [vmem:[%s5 + $0x8] sm:$0xff]
    %v2052 = vld [vmem:[%s5 + $0x10] sm:$0xff]
    %v2053 = vld [vmem:[%s5 + $0x18] sm:$0xff]
    %v2054 = vld [vmem:[%s5 + $0x20] sm:$0xff]
    %v2055 = vld [vmem:[%s5 + $0x28] sm:$0xff]
    %v2056 = vld [vmem:[%s5 + $0x30] sm:$0xff]
    %v2057 = vld [vmem:[%s5 + $0x38] sm:$0xff]
    %v2058 = vld [vmem:[%s5 + $0x40] sm:$0xff]
    %v2059 = vld [vmem:[%s5 + $0x48] sm:$0xff]
    %v2060 = vld [vmem:[%s5 + $0x50] sm:$0xff]
    %v2061 = vld [vmem:[%s5 + $0x58] sm:$0xff]
    %v2062 = vld [vmem:[%s5 + $0x60] sm:$0xff]
    %v2063 = vld [vmem:[%s5 + $0x68] sm:$0xff]
    %v2064 = vld [vmem:[%s5 + $0x70] sm:$0xff]
    %v2065 = vld [vmem:[%s5 + $0x78] sm:$0xff]
    %v2066 = vld [vmem:[%s5 + $0x80] sm:$0xff]
    %v2067 = vld [vmem:[%s5 + $0x88] sm:$0xff]
    %v2068 = vld [vmem:[%s5 + $0x90] sm:$0xff]
    %v2069 = vld [vmem:[%s5 + $0x98] sm:$0xff]
    %v2070 = vld [vmem:[%s5 + $0xa0] sm:$0xff]
    %v2071 = vld [vmem:[%s5 + $0xa8] sm:$0xff]
    %v2072 = vld [vmem:[%s5 + $0xb0] sm:$0xff]
    %v2073 = vld [vmem:[%s5 + $0xb8] sm:$0xff]
    %v2074 = vld [vmem:[%s5 + $0xc0] sm:$0xff]
    %v2075 = vld [vmem:[%s5 + $0xc8] sm:$0xff]
    %v2076 = vld [vmem:[%s5 + $0xd0] sm:$0xff]
    %v2077 = vld [vmem:[%s5 + $0xd8] sm:$0xff]
    %v2078 = vld [vmem:[%s5 + $0xe0] sm:$0xff]
    %v2079 = vld [vmem:[%s5 + $0xe8] sm:$0xff]
    %v2080 = vld [vmem:[%s5 + $0xf0] sm:$0xff]
    %v2081 = vld [vmem:[%s5 + $0xf8] sm:$0xff]
    %v2082 = vld [vmem:[%s6] sm:$0xf]
    %v2084 = vperm.slane %v2082, 0
    %v2085 = vperm.slane %v2082, 1
    %v2086 = vperm.slane %v2082, 2
    %v2087 = vperm.slane %v2082, 3
    %v2124 = vunpack.c.l.b16 %v2050
    %v2125 = vunpack.c.h.b16 %v2050
    %v2126 = vunpack.c.l.b16 %v2051
    %v2127 = vunpack.c.h.b16 %v2051
    %v2128 = vunpack.c.l.b16 %v2052
    %v2129 = vunpack.c.h.b16 %v2052
    %v2130 = vunpack.c.l.b16 %v2053
    %v2131 = vunpack.c.h.b16 %v2053
    %v2132 = vunpack.c.l.b16 %v2054
    %v2133 = vunpack.c.h.b16 %v2054
    %v2134 = vunpack.c.l.b16 %v2055
    %v2135 = vunpack.c.h.b16 %v2055
    %v2136 = vunpack.c.l.b16 %v2056
    %v2137 = vunpack.c.h.b16 %v2056
    %v2138 = vunpack.c.l.b16 %v2057
    %v2139 = vunpack.c.h.b16 %v2057
    %v2140 = vunpack.c.l.b16 %v2058
    %v2141 = vunpack.c.h.b16 %v2058
    %v2142 = vunpack.c.l.b16 %v2059
    %v2143 = vunpack.c.h.b16 %v2059
    %v2144 = vunpack.c.l.b16 %v2060
    %v2145 = vunpack.c.h.b16 %v2060
    %v2146 = vunpack.c.l.b16 %v2061
    %v2147 = vunpack.c.h.b16 %v2061
    %v2148 = vunpack.c.l.b16 %v2062
    %v2149 = vunpack.c.h.b16 %v2062
    %v2150 = vunpack.c.l.b16 %v2063
    %v2151 = vunpack.c.h.b16 %v2063
    %v2152 = vunpack.c.l.b16 %v2064
    %v2153 = vunpack.c.h.b16 %v2064
    %v2154 = vunpack.c.l.b16 %v2065
    %v2155 = vunpack.c.h.b16 %v2065
    %v2156 = vunpack.c.l.b16 %v2066
    %v2157 = vunpack.c.h.b16 %v2066
    %v2158 = vunpack.c.l.b16 %v2067
    %v2159 = vunpack.c.h.b16 %v2067
    %v2160 = vunpack.c.l.b16 %v2068
    %v2161 = vunpack.c.h.b16 %v2068
    %v2162 = vunpack.c.l.b16 %v2069
    %v2163 = vunpack.c.h.b16 %v2069
    %v2164 = vunpack.c.l.b16 %v2070
    %v2165 = vunpack.c.h.b16 %v2070
    %v2166 = vunpack.c.l.b16 %v2071
    %v2167 = vunpack.c.h.b16 %v2071
    %v2168 = vunpack.c.l.b16 %v2072
    %v2169 = vunpack.c.h.b16 %v2072
    %v2170 = vunpack.c.l.b16 %v2073
    %v2171 = vunpack.c.h.b16 %v2073
    %v2172 = vunpack.c.l.b16 %v2074
    %v2173 = vunpack.c.h.b16 %v2074
    %v2174 = vunpack.c.l.b16 %v2075
    %v2175 = vunpack.c.h.b16 %v2075
    %v2176 = vunpack.c.l.b16 %v2076
    %v2177 = vunpack.c.h.b16 %v2076
    %v2178 = vunpack.c.l.b16 %v2077
    %v2179 = vunpack.c.h.b16 %v2077
    %v2180 = vunpack.c.l.b16 %v2078
    %v2181 = vunpack.c.h.b16 %v2078
    %v2182 = vunpack.c.l.b16 %v2079
    %v2183 = vunpack.c.h.b16 %v2079
    %v2184 = vunpack.c.l.b16 %v2080
    %v2185 = vunpack.c.h.b16 %v2080
    %v2186 = vunpack.c.l.b16 %v2081
    %v2187 = vunpack.c.h.b16 %v2081
    %v2188 = vpack.c.b16 %v2128, %v2124
    %v2189 = vpack.c.b16 %v2129, %v2125
    %v2190 = vpack.c.b16 %v2130, %v2126
    %v2191 = vpack.c.b16 %v2131, %v2127
    %v2192 = vpack.c.b16 %v2136, %v2132
    %v2193 = vpack.c.b16 %v2137, %v2133
    %v2194 = vpack.c.b16 %v2138, %v2134
    %v2195 = vpack.c.b16 %v2139, %v2135
    %v2196 = vpack.c.b16 %v2144, %v2140
    %v2197 = vpack.c.b16 %v2145, %v2141
    %v2198 = vpack.c.b16 %v2146, %v2142
    %v2199 = vpack.c.b16 %v2147, %v2143
    %v2200 = vpack.c.b16 %v2152, %v2148
    %v2201 = vpack.c.b16 %v2153, %v2149
    %v2202 = vpack.c.b16 %v2154, %v2150
    %v2203 = vpack.c.b16 %v2155, %v2151
    %v2204 = vpack.c.b16 %v2160, %v2156
    %v2205 = vpack.c.b16 %v2161, %v2157
    %v2206 = vpack.c.b16 %v2162, %v2158
    %v2207 = vpack.c.b16 %v2163, %v2159
    %v2208 = vpack.c.b16 %v2168, %v2164
    %v2209 = vpack.c.b16 %v2169, %v2165
    %v2210 = vpack.c.b16 %v2170, %v2166
    %v2211 = vpack.c.b16 %v2171, %v2167
    %v2212 = vpack.c.b16 %v2176, %v2172
    %v2213 = vpack.c.b16 %v2177, %v2173
    %v2214 = vpack.c.b16 %v2178, %v2174
    %v2215 = vpack.c.b16 %v2179, %v2175
    %v2216 = vpack.c.b16 %v2184, %v2180
    %v2217 = vpack.c.b16 %v2185, %v2181
    %v2218 = vpack.c.b16 %v2186, %v2182
    %v2219 = vpack.c.b16 %v2187, %v2183
    %2252 = vmatpush.bf16.msra.mxu0 %v2216
    %2253 = vmatpush.bf16.msra.mxu0 %v2212
    %2254 = vmatpush.bf16.msra.mxu0 %v2208
    %2255 = vmatpush.bf16.msra.mxu0 %v2204
    %2256 = vmatpush.bf16.msra.mxu0 %v2200
    %2257 = vmatpush.bf16.msra.mxu0 %v2196
    %2258 = vmatpush.bf16.msra.mxu0 %v2192
    %2259 = vmatpush.bf16.msra.mxu0 %v2188
    %2260 = vmatmul.bf16.gmra.mxu0 %v2049
    %v2261 = vpop.f32.mrf.mxu0
    %v2262 = vadd.f32 %v2084, %v2261
    %v2263 = vpop.f32.mrf.mxu0
    %2264 = vdwg.mxu0
    %2265 = vmatpush.bf16.msra.mxu0 %v2217
    %2266 = vmatpush.bf16.msra.mxu0 %v2213
    %2267 = vmatpush.bf16.msra.mxu0 %v2209
    %2268 = vmatpush.bf16.msra.mxu0 %v2205
    %2269 = vmatpush.bf16.msra.mxu0 %v2201
    %2270 = vmatpush.bf16.msra.mxu0 %v2197
    %2271 = vmatpush.bf16.msra.mxu0 %v2193
    %2272 = vmatpush.bf16.msra.mxu0 %v2189
    %2273 = vmatmul.bf16.gmra.mxu0 %v2049
    %v2274 = vpop.f32.mrf.mxu0
    %v2275 = vadd.f32 %v2085, %v2274
    %v2276 = vpop.f32.mrf.mxu0
    %2277 = vdwg.mxu0
    %2278 = vmatpush.bf16.msra.mxu0 %v2218
    %2279 = vmatpush.bf16.msra.mxu0 %v2214
    %2280 = vmatpush.bf16.msra.mxu0 %v2210
    %2281 = vmatpush.bf16.msra.mxu0 %v2206
    %2282 = vmatpush.bf16.msra.mxu0 %v2202
    %2283 = vmatpush.bf16.msra.mxu0 %v2198
    %2284 = vmatpush.bf16.msra.mxu0 %v2194
    %2285 = vmatpush.bf16.msra.mxu0 %v2190
    %2286 = vmatmul.bf16.gmra.mxu0 %v2049
    %v2287 = vpop.f32.mrf.mxu0
    %v2288 = vadd.f32 %v2086, %v2287
    %v2289 = vpop.f32.mrf.mxu0
    %2290 = vdwg.mxu0
    %2291 = vmatpush.bf16.msra.mxu0 %v2219
    %2292 = vmatpush.bf16.msra.mxu0 %v2215
    %2293 = vmatpush.bf16.msra.mxu0 %v2211
    %2294 = vmatpush.bf16.msra.mxu0 %v2207
    %2295 = vmatpush.bf16.msra.mxu0 %v2203
    %2296 = vmatpush.bf16.msra.mxu0 %v2199
    %2297 = vmatpush.bf16.msra.mxu0 %v2195
    %2298 = vmatpush.bf16.msra.mxu0 %v2191
    %2299 = vmatmul.bf16.gmra.mxu0 %v2049
    %v2300 = vpop.f32.mrf.mxu0
    %v2301 = vadd.f32 %v2087, %v2300
    %v2302 = vpop.f32.mrf.mxu0
    %2303 = vdwg.mxu0
    %v2304 = vmax.f32 %v2262, 0.0
    %v2305 = vmax.f32 %v2275, 0.0
    %v2306 = vmax.f32 %v2288, 0.0
    %v2307 = vmax.f32 %v2301, 0.0
    %v2308 = vpack.c.bf16 %v2304, %v2304
    %v2309 = vpack.c.bf16 %v2305, %v2305
    %v2310 = vpack.c.bf16 %v2306, %v2306
    %v2311 = vpack.c.bf16 %v2307, %v2307
    %v2312 = vld [vmem:[%s7] sm:$0xff]
    %v2313 = vld [vmem:[%s7 + $0x8] sm:$0xff]
    %v2314 = vld [vmem:[%s7 + $0x10] sm:$0xff]
    %v2315 = vld [vmem:[%s7 + $0x18] sm:$0xf]
    %v2316 = vld [vmem:[%s7 + $0x1c] sm:$0xff]
    %v2317 = vld [vmem:[%s7 + $0x24] sm:$0xff]
    %v2318 = vld [vmem:[%s7 + $0x2c] sm:$0xff]
    %v2319 = vld [vmem:[%s7 + $0x34] sm:$0xf]
    %v2320 = vld [vmem:[%s7 + $0x38] sm:$0xff]
    %v2321 = vld [vmem:[%s7 + $0x40] sm:$0xff]
    %v2322 = vld [vmem:[%s7 + $0x48] sm:$0xff]
    %v2323 = vld [vmem:[%s7 + $0x50] sm:$0xf]
    %v2324 = vld [vmem:[%s7 + $0x54] sm:$0xff]
    %v2325 = vld [vmem:[%s7 + $0x5c] sm:$0xff]
    %v2326 = vld [vmem:[%s7 + $0x64] sm:$0xff]
    %v2327 = vld [vmem:[%s7 + $0x6c] sm:$0xf]
    %v2328 = vld [vmem:[%s7 + $0x70] sm:$0xff]
    %v2329 = vld [vmem:[%s7 + $0x78] sm:$0xff]
    %v2330 = vld [vmem:[%s7 + $0x80] sm:$0xff]
    %v2331 = vld [vmem:[%s7 + $0x88] sm:$0xf]
    %v2332 = vld [vmem:[%s7 + $0x8c] sm:$0xff]
    %v2333 = vld [vmem:[%s7 + $0x94] sm:$0xff]
    %v2334 = vld [vmem:[%s7 + $0x9c] sm:$0xff]
    %v2335 = vld [vmem:[%s7 + $0xa4] sm:$0xf]
    %v2336 = vld [vmem:[%s7 + $0xa8] sm:$0xff]
    %v2337 = vld [vmem:[%s7 + $0xb0] sm:$0xff]
    %v2338 = vld [vmem:[%s7 + $0xb8] sm:$0xff]
    %v2339 = vld [vmem:[%s7 + $0xc0] sm:$0xf]
    %v2340 = vld [vmem:[%s7 + $0xc4] sm:$0xff]
    %v2341 = vld [vmem:[%s7 + $0xcc] sm:$0xff]
    %v2342 = vld [vmem:[%s7 + $0xd4] sm:$0xff]
    %v2343 = vld [vmem:[%s7 + $0xdc] sm:$0xf]
    %v2344 = vld [vmem:[%s7 + $0xe0] sm:$0xff]
    %v2345 = vld [vmem:[%s7 + $0xe8] sm:$0xff]
    %v2346 = vld [vmem:[%s7 + $0xf0] sm:$0xff]
    %v2347 = vld [vmem:[%s7 + $0xf8] sm:$0xf]
    %v2348 = vld [vmem:[%s7 + $0xfc] sm:$0xff]
    %v2349 = vld [vmem:[%s7 + $0x104] sm:$0xff]
    %v2350 = vld [vmem:[%s7 + $0x10c] sm:$0xff]
    %v2351 = vld [vmem:[%s7 + $0x114] sm:$0xf]
    %v2352 = vld [vmem:[%s7 + $0x118] sm:$0xff]
    %v2353 = vld [vmem:[%s7 + $0x120] sm:$0xff]
    %v2354 = vld [vmem:[%s7 + $0x128] sm:$0xff]
    %v2355 = vld [vmem:[%s7 + $0x130] sm:$0xf]
    %v2356 = vld [vmem:[%s7 + $0x134] sm:$0xff]
    %v2357 = vld [vmem:[%s7 + $0x13c] sm:$0xff]
    %v2358 = vld [vmem:[%s7 + $0x144] sm:$0xff]
    %v2359 = vld [vmem:[%s7 + $0x14c] sm:$0xf]
    %v2360 = vld [vmem:[%s7 + $0x150] sm:$0xff]
    %v2361 = vld [vmem:[%s7 + $0x158] sm:$0xff]
    %v2362 = vld [vmem:[%s7 + $0x160] sm:$0xff]
    %v2363 = vld [vmem:[%s7 + $0x168] sm:$0xf]
    %v2364 = vld [vmem:[%s7 + $0x16c] sm:$0xff]
    %v2365 = vld [vmem:[%s7 + $0x174] sm:$0xff]
    %v2366 = vld [vmem:[%s7 + $0x17c] sm:$0xff]
    %v2367 = vld [vmem:[%s7 + $0x184] sm:$0xf]
    %v2368 = vld [vmem:[%s7 + $0x188] sm:$0xff]
    %v2369 = vld [vmem:[%s7 + $0x190] sm:$0xff]
    %v2370 = vld [vmem:[%s7 + $0x198] sm:$0xff]
    %v2371 = vld [vmem:[%s7 + $0x1a0] sm:$0xf]
    %v2372 = vld [vmem:[%s7 + $0x1a4] sm:$0xff]
    %v2373 = vld [vmem:[%s7 + $0x1ac] sm:$0xff]
    %v2374 = vld [vmem:[%s7 + $0x1b4] sm:$0xff]
    %v2375 = vld [vmem:[%s7 + $0x1bc] sm:$0xf]
    %v2376 = vld [vmem:[%s7 + $0x1c0] sm:$0xff]
    %v2377 = vld [vmem:[%s7 + $0x1c8] sm:$0xff]
    %v2378 = vld [vmem:[%s7 + $0x1d0] sm:$0xff]
    %v2379 = vld [vmem:[%s7 + $0x1d8] sm:$0xf]
    %v2380 = vld [vmem:[%s7 + $0x1dc] sm:$0xff]
    %v2381 = vld [vmem:[%s7 + $0x1e4] sm:$0xff]
    %v2382 = vld [vmem:[%s7 + $0x1ec] sm:$0xff]
    %v2383 = vld [vmem:[%s7 + $0x1f4] sm:$0xf]
    %v2384 = vld [vmem:[%s7 + $0x1f8] sm:$0xff]
    %v2385 = vld [vmem:[%s7 + $0x200] sm:$0xff]
    %v2386 = vld [vmem:[%s7 + $0x208] sm:$0xff]
    %v2387 = vld [vmem:[%s7 + $0x210] sm:$0xf]
    %v2388 = vld [vmem:[%s7 + $0x214] sm:$0xff]
    %v2389 = vld [vmem:[%s7 + $0x21c] sm:$0xff]
    %v2390 = vld [vmem:[%s7 + $0x224] sm:$0xff]
    %v2391 = vld [vmem:[%s7 + $0x22c] sm:$0xf]
    %v2392 = vld [vmem:[%s7 + $0x230] sm:$0xff]
    %v2393 = vld [vmem:[%s7 + $0x238] sm:$0xff]
    %v2394 = vld [vmem:[%s7 + $0x240] sm:$0xff]
    %v2395 = vld [vmem:[%s7 + $0x248] sm:$0xf]
    %v2396 = vld [vmem:[%s7 + $0x24c] sm:$0xff]
    %v2397 = vld [vmem:[%s7 + $0x254] sm:$0xff]
    %v2398 = vld [vmem:[%s7 + $0x25c] sm:$0xff]
    %v2399 = vld [vmem:[%s7 + $0x264] sm:$0xf]
    %v2400 = vld [vmem:[%s7 + $0x268] sm:$0xff]
    %v2401 = vld [vmem:[%s7 + $0x270] sm:$0xff]
    %v2402 = vld [vmem:[%s7 + $0x278] sm:$0xff]
    %v2403 = vld [vmem:[%s7 + $0x280] sm:$0xf]
    %v2404 = vld [vmem:[%s7 + $0x284] sm:$0xff]
    %v2405 = vld [vmem:[%s7 + $0x28c] sm:$0xff]
    %v2406 = vld [vmem:[%s7 + $0x294] sm:$0xff]
    %v2407 = vld [vmem:[%s7 + $0x29c] sm:$0xf]
    %v2408 = vld [vmem:[%s7 + $0x2a0] sm:$0xff]
    %v2409 = vld [vmem:[%s7 + $0x2a8] sm:$0xff]
    %v2410 = vld [vmem:[%s7 + $0x2b0] sm:$0xff]
    %v2411 = vld [vmem:[%s7 + $0x2b8] sm:$0xf]
    %v2412 = vld [vmem:[%s7 + $0x2bc] sm:$0xff]
    %v2413 = vld [vmem:[%s7 + $0x2c4] sm:$0xff]
    %v2414 = vld [vmem:[%s7 + $0x2cc] sm:$0xff]
    %v2415 = vld [vmem:[%s7 + $0x2d4] sm:$0xf]
    %v2416 = vld [vmem:[%s7 + $0x2d8] sm:$0xff]
    %v2417 = vld [vmem:[%s7 + $0x2e0] sm:$0xff]
    %v2418 = vld [vmem:[%s7 + $0x2e8] sm:$0xff]
    %v2419 = vld [vmem:[%s7 + $0x2f0] sm:$0xf]
    %v2420 = vld [vmem:[%s7 + $0x2f4] sm:$0xff]
    %v2421 = vld [vmem:[%s7 + $0x2fc] sm:$0xff]
    %v2422 = vld [vmem:[%s7 + $0x304] sm:$0xff]
    %v2423 = vld [vmem:[%s7 + $0x30c] sm:$0xf]
    %v2424 = vld [vmem:[%s7 + $0x310] sm:$0xff]
    %v2425 = vld [vmem:[%s7 + $0x318] sm:$0xff]
    %v2426 = vld [vmem:[%s7 + $0x320] sm:$0xff]
    %v2427 = vld [vmem:[%s7 + $0x328] sm:$0xf]
    %v2428 = vld [vmem:[%s7 + $0x32c] sm:$0xff]
    %v2429 = vld [vmem:[%s7 + $0x334] sm:$0xff]
    %v2430 = vld [vmem:[%s7 + $0x33c] sm:$0xff]
    %v2431 = vld [vmem:[%s7 + $0x344] sm:$0xf]
    %v2432 = vld [vmem:[%s7 + $0x348] sm:$0xff]
    %v2433 = vld [vmem:[%s7 + $0x350] sm:$0xff]
    %v2434 = vld [vmem:[%s7 + $0x358] sm:$0xff]
    %v2435 = vld [vmem:[%s7 + $0x360] sm:$0xf]
    %v2436 = vld [vmem:[%s7 + $0x364] sm:$0xff]
    %v2437 = vld [vmem:[%s7 + $0x36c] sm:$0xff]
    %v2438 = vld [vmem:[%s7 + $0x374] sm:$0xff]
    %v2439 = vld [vmem:[%s7 + $0x37c] sm:$0xf]
    %v2440 = vld [vmem:[%s7 + $0x380] sm:$0xff]
    %v2441 = vld [vmem:[%s7 + $0x388] sm:$0xff]
    %v2442 = vld [vmem:[%s7 + $0x390] sm:$0xff]
    %v2443 = vld [vmem:[%s7 + $0x398] sm:$0xf]
    %v2444 = vld [vmem:[%s7 + $0x39c] sm:$0xff]
    %v2445 = vld [vmem:[%s7 + $0x3a4] sm:$0xff]
    %v2446 = vld [vmem:[%s7 + $0x3ac] sm:$0xff]
    %v2447 = vld [vmem:[%s7 + $0x3b4] sm:$0xf]
    %v2448 = vld [vmem:[%s7 + $0x3b8] sm:$0xff]
    %v2449 = vld [vmem:[%s7 + $0x3c0] sm:$0xff]
    %v2450 = vld [vmem:[%s7 + $0x3c8] sm:$0xff]
    %v2451 = vld [vmem:[%s7 + $0x3d0] sm:$0xf]
    %v2452 = vld [vmem:[%s7 + $0x3d4] sm:$0xff]
    %v2453 = vld [vmem:[%s7 + $0x3dc] sm:$0xff]
    %v2454 = vld [vmem:[%s7 + $0x3e4] sm:$0xff]
    %v2455 = vld [vmem:[%s7 + $0x3ec] sm:$0xf]
    %v2456 = vld [vmem:[%s7 + $0x3f0] sm:$0xff]
    %v2457 = vld [vmem:[%s7 + $0x3f8] sm:$0xff]
    %v2458 = vld [vmem:[%s7 + $0x400] sm:$0xff]
    %v2459 = vld [vmem:[%s7 + $0x408] sm:$0xf]
    %v2460 = vld [vmem:[%s7 + $0x40c] sm:$0xff]
    %v2461 = vld [vmem:[%s7 + $0x414] sm:$0xff]
    %v2462 = vld [vmem:[%s7 + $0x41c] sm:$0xff]
    %v2463 = vld [vmem:[%s7 + $0x424] sm:$0xf]
    %v2464 = vld [vmem:[%s7 + $0x428] sm:$0xff]
    %v2465 = vld [vmem:[%s7 + $0x430] sm:$0xff]
    %v2466 = vld [vmem:[%s7 + $0x438] sm:$0xff]
    %v2467 = vld [vmem:[%s7 + $0x440] sm:$0xf]
    %v2468 = vld [vmem:[%s7 + $0x444] sm:$0xff]
    %v2469 = vld [vmem:[%s7 + $0x44c] sm:$0xff]
    %v2470 = vld [vmem:[%s7 + $0x454] sm:$0xff]
    %v2471 = vld [vmem:[%s7 + $0x45c] sm:$0xf]
    %v2472 = vld [vmem:[%s7 + $0x460] sm:$0xff]
    %v2473 = vld [vmem:[%s7 + $0x468] sm:$0xff]
    %v2474 = vld [vmem:[%s7 + $0x470] sm:$0xff]
    %v2475 = vld [vmem:[%s7 + $0x478] sm:$0xf]
    %v2476 = vld [vmem:[%s7 + $0x47c] sm:$0xff]
    %v2477 = vld [vmem:[%s7 + $0x484] sm:$0xff]
    %v2478 = vld [vmem:[%s7 + $0x48c] sm:$0xff]
    %v2479 = vld [vmem:[%s7 + $0x494] sm:$0xf]
    %v2480 = vld [vmem:[%s7 + $0x498] sm:$0xff]
    %v2481 = vld [vmem:[%s7 + $0x4a0] sm:$0xff]
    %v2482 = vld [vmem:[%s7 + $0x4a8] sm:$0xff]
    %v2483 = vld [vmem:[%s7 + $0x4b0] sm:$0xf]
    %v2484 = vld [vmem:[%s7 + $0x4b4] sm:$0xff]
    %v2485 = vld [vmem:[%s7 + $0x4bc] sm:$0xff]
    %v2486 = vld [vmem:[%s7 + $0x4c4] sm:$0xff]
    %v2487 = vld [vmem:[%s7 + $0x4cc] sm:$0xf]
    %v2488 = vld [vmem:[%s7 + $0x4d0] sm:$0xff]
    %v2489 = vld [vmem:[%s7 + $0x4d8] sm:$0xff]
    %v2490 = vld [vmem:[%s7 + $0x4e0] sm:$0xff]
    %v2491 = vld [vmem:[%s7 + $0x4e8] sm:$0xf]
    %v2492 = vld [vmem:[%s7 + $0x4ec] sm:$0xff]
    %v2493 = vld [vmem:[%s7 + $0x4f4] sm:$0xff]
    %v2494 = vld [vmem:[%s7 + $0x4fc] sm:$0xff]
    %v2495 = vld [vmem:[%s7 + $0x504] sm:$0xf]
    %v2496 = vld [vmem:[%s7 + $0x508] sm:$0xff]
    %v2497 = vld [vmem:[%s7 + $0x510] sm:$0xff]
    %v2498 = vld [vmem:[%s7 + $0x518] sm:$0xff]
    %v2499 = vld [vmem:[%s7 + $0x520] sm:$0xf]
    %v2500 = vld [vmem:[%s7 + $0x524] sm:$0xff]
    %v2501 = vld [vmem:[%s7 + $0x52c] sm:$0xff]
    %v2502 = vld [vmem:[%s7 + $0x534] sm:$0xff]
    %v2503 = vld [vmem:[%s7 + $0x53c] sm:$0xf]
    %v2504 = vld [vmem:[%s7 + $0x540] sm:$0xff]
    %v2505 = vld [vmem:[%s7 + $0x548] sm:$0xff]
    %v2506 = vld [vmem:[%s7 + $0x550] sm:$0xff]
    %v2507 = vld [vmem:[%s7 + $0x558] sm:$0xf]
    %v2508 = vld [vmem:[%s7 + $0x55c] sm:$0xff]
    %v2509 = vld [vmem:[%s7 + $0x564] sm:$0xff]
    %v2510 = vld [vmem:[%s7 + $0x56c] sm:$0xff]
    %v2511 = vld [vmem:[%s7 + $0x574] sm:$0xf]
    %v2512 = vld [vmem:[%s8] sm:$0xff]
    %v2514 = vperm.slane %v2512, 0
    %v2515 = vperm.slane %v2512, 1
    %v2516 = vperm.slane %v2512, 2
    %v2517 = vperm.slane %v2512, 3
    %v2518 = vperm.slane %v2512, 4
    %v2519 = vperm.slane %v2512, 5
    %v2520 = vperm.slane %v2512, 6
    %v2728 = vunpack.c.l.b16 %v2312
    %v2729 = vunpack.c.h.b16 %v2312
    %v2730 = vunpack.c.l.b16 %v2313
    %v2731 = vunpack.c.h.b16 %v2313
    %v2732 = vunpack.c.l.b16 %v2314
    %v2733 = vunpack.c.h.b16 %v2314
    %v2734 = vunpack.c.l.b16 %v2315
    %v2735 = vunpack.c.l.b16 %v2316
    %v2736 = vunpack.c.h.b16 %v2316
    %v2737 = vunpack.c.l.b16 %v2317
    %v2738 = vunpack.c.h.b16 %v2317
    %v2739 = vunpack.c.l.b16 %v2318
    %v2740 = vunpack.c.h.b16 %v2318
    %v2741 = vunpack.c.l.b16 %v2319
    %v2742 = vunpack.c.l.b16 %v2320
    %v2743 = vunpack.c.h.b16 %v2320
    %v2744 = vunpack.c.l.b16 %v2321
    %v2745 = vunpack.c.h.b16 %v2321
    %v2746 = vunpack.c.l.b16 %v2322
    %v2747 = vunpack.c.h.b16 %v2322
    %v2748 = vunpack.c.l.b16 %v2323
    %v2749 = vunpack.c.l.b16 %v2324
    %v2750 = vunpack.c.h.b16 %v2324
    %v2751 = vunpack.c.l.b16 %v2325
    %v2752 = vunpack.c.h.b16 %v2325
    %v2753 = vunpack.c.l.b16 %v2326
    %v2754 = vunpack.c.h.b16 %v2326
    %v2755 = vunpack.c.l.b16 %v2327
    %v2756 = vunpack.c.l.b16 %v2328
    %v2757 = vunpack.c.h.b16 %v2328
    %v2758 = vunpack.c.l.b16 %v2329
    %v2759 = vunpack.c.h.b16 %v2329
    %v2760 = vunpack.c.l.b16 %v2330
    %v2761 = vunpack.c.h.b16 %v2330
    %v2762 = vunpack.c.l.b16 %v2331
    %v2763 = vunpack.c.l.b16 %v2332
    %v2764 = vunpack.c.h.b16 %v2332
    %v2765 = vunpack.c.l.b16 %v2333
    %v2766 = vunpack.c.h.b16 %v2333
    %v2767 = vunpack.c.l.b16 %v2334
    %v2768 = vunpack.c.h.b16 %v2334
    %v2769 = vunpack.c.l.b16 %v2335
    %v2770 = vunpack.c.l.b16 %v2336
    %v2771 = vunpack.c.h.b16 %v2336
    %v2772 = vunpack.c.l.b16 %v2337
    %v2773 = vunpack.c.h.b16 %v2337
    %v2774 = vunpack.c.l.b16 %v2338
    %v2775 = vunpack.c.h.b16 %v2338
    %v2776 = vunpack.c.l.b16 %v2339
    %v2777 = vunpack.c.l.b16 %v2340
    %v2778 = vunpack.c.h.b16 %v2340
    %v2779 = vunpack.c.l.b16 %v2341
    %v2780 = vunpack.c.h.b16 %v2341
    %v2781 = vunpack.c.l.b16 %v2342
    %v2782 = vunpack.c.h.b16 %v2342
    %v2783 = vunpack.c.l.b16 %v2343
    %v2784 = vunpack.c.l.b16 %v2344
    %v2785 = vunpack.c.h.b16 %v2344
    %v2786 = vunpack.c.l.b16 %v2345
    %v2787 = vunpack.c.h.b16 %v2345
    %v2788 = vunpack.c.l.b16 %v2346
    %v2789 = vunpack.c.h.b16 %v2346
    %v2790 = vunpack.c.l.b16 %v2347
    %v2791 = vunpack.c.l.b16 %v2348
    %v2792 = vunpack.c.h.b16 %v2348
    %v2793 = vunpack.c.l.b16 %v2349
    %v2794 = vunpack.c.h.b16 %v2349
    %v2795 = vunpack.c.l.b16 %v2350
    %v2796 = vunpack.c.h.b16 %v2350
    %v2797 = vunpack.c.l.b16 %v2351
    %v2798 = vunpack.c.l.b16 %v2352
    %v2799 = vunpack.c.h.b16 %v2352
    %v2800 = vunpack.c.l.b16 %v2353
    %v2801 = vunpack.c.h.b16 %v2353
    %v2802 = vunpack.c.l.b16 %v2354
    %v2803 = vunpack.c.h.b16 %v2354
    %v2804 = vunpack.c.l.b16 %v2355
    %v2805 = vunpack.c.l.b16 %v2356
    %v2806 = vunpack.c.h.b16 %v2356
    %v2807 = vunpack.c.l.b16 %v2357
    %v2808 = vunpack.c.h.b16 %v2357
    %v2809 = vunpack.c.l.b16 %v2358
    %v2810 = vunpack.c.h.b16 %v2358
    %v2811 = vunpack.c.l.b16 %v2359
    %v2812 = vunpack.c.l.b16 %v2360
    %v2813 = vunpack.c.h.b16 %v2360
    %v2814 = vunpack.c.l.b16 %v2361
    %v2815 = vunpack.c.h.b16 %v2361
    %v2816 = vunpack.c.l.b16 %v2362
    %v2817 = vunpack.c.h.b16 %v2362
    %v2818 = vunpack.c.l.b16 %v2363
    %v2819 = vunpack.c.l.b16 %v2364
    %v2820 = vunpack.c.h.b16 %v2364
    %v2821 = vunpack.c.l.b16 %v2365
    %v2822 = vunpack.c.h.b16 %v2365
    %v2823 = vunpack.c.l.b16 %v2366
    %v2824 = vunpack.c.h.b16 %v2366
    %v2825 = vunpack.c.l.b16 %v2367
    %v2826 = vunpack.c.l.b16 %v2368
    %v2827 = vunpack.c.h.b16 %v2368
    %v2828 = vunpack.c.l.b16 %v2369
    %v2829 = vunpack.c.h.b16 %v2369
    %v2830 = vunpack.c.l.b16 %v2370
    %v2831 = vunpack.c.h.b16 %v2370
    %v2832 = vunpack.c.l.b16 %v2371
    %v2833 = vunpack.c.l.b16 %v2372
    %v2834 = vunpack.c.h.b16 %v2372
    %v2835 = vunpack.c.l.b16 %v2373
    %v2836 = vunpack.c.h.b16 %v2373
    %v2837 = vunpack.c.l.b16 %v2374
    %v2838 = vunpack.c.h.b16 %v2374
    %v2839 = vunpack.c.l.b16 %v2375
    %v2840 = vunpack.c.l.b16 %v2376
    %v2841 = vunpack.c.h.b16 %v2376
    %v2842 = vunpack.c.l.b16 %v2377
    %v2843 = vunpack.c.h.b16 %v2377
    %v2844 = vunpack.c.l.b16 %v2378
    %v2845 = vunpack.c.h.b16 %v2378
    %v2846 = vunpack.c.l.b16 %v2379
    %v2847 = vunpack.c.l.b16 %v2380
    %v2848 = vunpack.c.h.b16 %v2380
    %v2849 = vunpack.c.l.b16 %v2381
    %v2850 = vunpack.c.h.b16 %v2381
    %v2851 = vunpack.c.l.b16 %v2382
    %v2852 = vunpack.c.h.b16 %v2382
    %v2853 = vunpack.c.l.b16 %v2383
    %v2854 = vunpack.c.l.b16 %v2384
    %v2855 = vunpack.c.h.b16 %v2384
    %v2856 = vunpack.c.l.b16 %v2385
    %v2857 = vunpack.c.h.b16 %v2385
    %v2858 = vunpack.c.l.b16 %v2386
    %v2859 = vunpack.c.h.b16 %v2386
    %v2860 = vunpack.c.l.b16 %v2387
    %v2861 = vunpack.c.l.b16 %v2388
    %v2862 = vunpack.c.h.b16 %v2388
    %v2863 = vunpack.c.l.b16 %v2389
    %v2864 = vunpack.c.h.b16 %v2389
    %v2865 = vunpack.c.l.b16 %v2390
    %v2866 = vunpack.c.h.b16 %v2390
    %v2867 = vunpack.c.l.b16 %v2391
    %v2868 = vunpack.c.l.b16 %v2392
    %v2869 = vunpack.c.h.b16 %v2392
    %v2870 = vunpack.c.l.b16 %v2393
    %v2871 = vunpack.c.h.b16 %v2393
    %v2872 = vunpack.c.l.b16 %v2394
    %v2873 = vunpack.c.h.b16 %v2394
    %v2874 = vunpack.c.l.b16 %v2395
    %v2875 = vunpack.c.l.b16 %v2396
    %v2876 = vunpack.c.h.b16 %v2396
    %v2877 = vunpack.c.l.b16 %v2397
    %v2878 = vunpack.c.h.b16 %v2397
    %v2879 = vunpack.c.l.b16 %v2398
    %v2880 = vunpack.c.h.b16 %v2398
    %v2881 = vunpack.c.l.b16 %v2399
    %v2882 = vunpack.c.l.b16 %v2400
    %v2883 = vunpack.c.h.b16 %v2400
    %v2884 = vunpack.c.l.b16 %v2401
    %v2885 = vunpack.c.h.b16 %v2401
    %v2886 = vunpack.c.l.b16 %v2402
    %v2887 = vunpack.c.h.b16 %v2402
    %v2888 = vunpack.c.l.b16 %v2403
    %v2889 = vunpack.c.l.b16 %v2404
    %v2890 = vunpack.c.h.b16 %v2404
    %v2891 = vunpack.c.l.b16 %v2405
    %v2892 = vunpack.c.h.b16 %v2405
    %v2893 = vunpack.c.l.b16 %v2406
    %v2894 = vunpack.c.h.b16 %v2406
    %v2895 = vunpack.c.l.b16 %v2407
    %v2896 = vunpack.c.l.b16 %v2408
    %v2897 = vunpack.c.h.b16 %v2408
    %v2898 = vunpack.c.l.b16 %v2409
    %v2899 = vunpack.c.h.b16 %v2409
    %v2900 = vunpack.c.l.b16 %v2410
    %v2901 = vunpack.c.h.b16 %v2410
    %v2902 = vunpack.c.l.b16 %v2411
    %v2903 = vunpack.c.l.b16 %v2412
    %v2904 = vunpack.c.h.b16 %v2412
    %v2905 = vunpack.c.l.b16 %v2413
    %v2906 = vunpack.c.h.b16 %v2413
    %v2907 = vunpack.c.l.b16 %v2414
    %v2908 = vunpack.c.h.b16 %v2414
    %v2909 = vunpack.c.l.b16 %v2415
    %v2910 = vunpack.c.l.b16 %v2416
    %v2911 = vunpack.c.h.b16 %v2416
    %v2912 = vunpack.c.l.b16 %v2417
    %v2913 = vunpack.c.h.b16 %v2417
    %v2914 = vunpack.c.l.b16 %v2418
    %v2915 = vunpack.c.h.b16 %v2418
    %v2916 = vunpack.c.l.b16 %v2419
    %v2917 = vunpack.c.l.b16 %v2420
    %v2918 = vunpack.c.h.b16 %v2420
    %v2919 = vunpack.c.l.b16 %v2421
    %v2920 = vunpack.c.h.b16 %v2421
    %v2921 = vunpack.c.l.b16 %v2422
    %v2922 = vunpack.c.h.b16 %v2422
    %v2923 = vunpack.c.l.b16 %v2423
    %v2924 = vunpack.c.l.b16 %v2424
    %v2925 = vunpack.c.h.b16 %v2424
    %v2926 = vunpack.c.l.b16 %v2425
    %v2927 = vunpack.c.h.b16 %v2425
    %v2928 = vunpack.c.l.b16 %v2426
    %v2929 = vunpack.c.h.b16 %v2426
    %v2930 = vunpack.c.l.b16 %v2427
    %v2931 = vunpack.c.l.b16 %v2428
    %v2932 = vunpack.c.h.b16 %v2428
    %v2933 = vunpack.c.l.b16 %v2429
    %v2934 = vunpack.c.h.b16 %v2429
    %v2935 = vunpack.c.l.b16 %v2430
    %v2936 = vunpack.c.h.b16 %v2430
    %v2937 = vunpack.c.l.b16 %v2431
    %v2938 = vunpack.c.l.b16 %v2432
    %v2939 = vunpack.c.h.b16 %v2432
    %v2940 = vunpack.c.l.b16 %v2433
    %v2941 = vunpack.c.h.b16 %v2433
    %v2942 = vunpack.c.l.b16 %v2434
    %v2943 = vunpack.c.h.b16 %v2434
    %v2944 = vunpack.c.l.b16 %v2435
    %v2945 = vunpack.c.l.b16 %v2436
    %v2946 = vunpack.c.h.b16 %v2436
    %v2947 = vunpack.c.l.b16 %v2437
    %v2948 = vunpack.c.h.b16 %v2437
    %v2949 = vunpack.c.l.b16 %v2438
    %v2950 = vunpack.c.h.b16 %v2438
    %v2951 = vunpack.c.l.b16 %v2439
    %v2952 = vunpack.c.l.b16 %v2440
    %v2953 = vunpack.c.h.b16 %v2440
    %v2954 = vunpack.c.l.b16 %v2441
    %v2955 = vunpack.c.h.b16 %v2441
    %v2956 = vunpack.c.l.b16 %v2442
    %v2957 = vunpack.c.h.b16 %v2442
    %v2958 = vunpack.c.l.b16 %v2443
    %v2959 = vunpack.c.l.b16 %v2444
    %v2960 = vunpack.c.h.b16 %v2444
    %v2961 = vunpack.c.l.b16 %v2445
    %v2962 = vunpack.c.h.b16 %v2445
    %v2963 = vunpack.c.l.b16 %v2446
    %v2964 = vunpack.c.h.b16 %v2446
    %v2965 = vunpack.c.l.b16 %v2447
    %v2966 = vunpack.c.l.b16 %v2448
    %v2967 = vunpack.c.h.b16 %v2448
    %v2968 = vunpack.c.l.b16 %v2449
    %v2969 = vunpack.c.h.b16 %v2449
    %v2970 = vunpack.c.l.b16 %v2450
    %v2971 = vunpack.c.h.b16 %v2450
    %v2972 = vunpack.c.l.b16 %v2451
    %v2973 = vunpack.c.l.b16 %v2452
    %v2974 = vunpack.c.h.b16 %v2452
    %v2975 = vunpack.c.l.b16 %v2453
    %v2976 = vunpack.c.h.b16 %v2453
    %v2977 = vunpack.c.l.b16 %v2454
    %v2978 = vunpack.c.h.b16 %v2454
    %v2979 = vunpack.c.l.b16 %v2455
    %v2980 = vunpack.c.l.b16 %v2456
    %v2981 = vunpack.c.h.b16 %v2456
    %v2982 = vunpack.c.l.b16 %v2457
    %v2983 = vunpack.c.h.b16 %v2457
    %v2984 = vunpack.c.l.b16 %v2458
    %v2985 = vunpack.c.h.b16 %v2458
    %v2986 = vunpack.c.l.b16 %v2459
    %v2987 = vunpack.c.l.b16 %v2460
    %v2988 = vunpack.c.h.b16 %v2460
    %v2989 = vunpack.c.l.b16 %v2461
    %v2990 = vunpack.c.h.b16 %v2461
    %v2991 = vunpack.c.l.b16 %v2462
    %v2992 = vunpack.c.h.b16 %v2462
    %v2993 = vunpack.c.l.b16 %v2463
    %v2994 = vunpack.c.l.b16 %v2464
    %v2995 = vunpack.c.h.b16 %v2464
    %v2996 = vunpack.c.l.b16 %v2465
    %v2997 = vunpack.c.h.b16 %v2465
    %v2998 = vunpack.c.l.b16 %v2466
    %v2999 = vunpack.c.h.b16 %v2466
    %v3000 = vunpack.c.l.b16 %v2467
    %v3001 = vunpack.c.l.b16 %v2468
    %v3002 = vunpack.c.h.b16 %v2468
    %v3003 = vunpack.c.l.b16 %v2469
    %v3004 = vunpack.c.h.b16 %v2469
    %v3005 = vunpack.c.l.b16 %v2470
    %v3006 = vunpack.c.h.b16 %v2470
    %v3007 = vunpack.c.l.b16 %v2471
    %v3008 = vunpack.c.l.b16 %v2472
    %v3009 = vunpack.c.h.b16 %v2472
    %v3010 = vunpack.c.l.b16 %v2473
    %v3011 = vunpack.c.h.b16 %v2473
    %v3012 = vunpack.c.l.b16 %v2474
    %v3013 = vunpack.c.h.b16 %v2474
    %v3014 = vunpack.c.l.b16 %v2475
    %v3015 = vunpack.c.l.b16 %v2476
    %v3016 = vunpack.c.h.b16 %v2476
    %v3017 = vunpack.c.l.b16 %v2477
    %v3018 = vunpack.c.h.b16 %v2477
    %v3019 = vunpack.c.l.b16 %v2478
    %v3020 = vunpack.c.h.b16 %v2478
    %v3021 = vunpack.c.l.b16 %v2479
    %v3022 = vunpack.c.l.b16 %v2480
    %v3023 = vunpack.c.h.b16 %v2480
    %v3024 = vunpack.c.l.b16 %v2481
    %v3025 = vunpack.c.h.b16 %v2481
    %v3026 = vunpack.c.l.b16 %v2482
    %v3027 = vunpack.c.h.b16 %v2482
    %v3028 = vunpack.c.l.b16 %v2483
    %v3029 = vunpack.c.l.b16 %v2484
    %v3030 = vunpack.c.h.b16 %v2484
    %v3031 = vunpack.c.l.b16 %v2485
    %v3032 = vunpack.c.h.b16 %v2485
    %v3033 = vunpack.c.l.b16 %v2486
    %v3034 = vunpack.c.h.b16 %v2486
    %v3035 = vunpack.c.l.b16 %v2487
    %v3036 = vunpack.c.l.b16 %v2488
    %v3037 = vunpack.c.h.b16 %v2488
    %v3038 = vunpack.c.l.b16 %v2489
    %v3039 = vunpack.c.h.b16 %v2489
    %v3040 = vunpack.c.l.b16 %v2490
    %v3041 = vunpack.c.h.b16 %v2490
    %v3042 = vunpack.c.l.b16 %v2491
    %v3043 = vunpack.c.l.b16 %v2492
    %v3044 = vunpack.c.h.b16 %v2492
    %v3045 = vunpack.c.l.b16 %v2493
    %v3046 = vunpack.c.h.b16 %v2493
    %v3047 = vunpack.c.l.b16 %v2494
    %v3048 = vunpack.c.h.b16 %v2494
    %v3049 = vunpack.c.l.b16 %v2495
    %v3050 = vunpack.c.l.b16 %v2496
    %v3051 = vunpack.c.h.b16 %v2496
    %v3052 = vunpack.c.l.b16 %v2497
    %v3053 = vunpack.c.h.b16 %v2497
    %v3054 = vunpack.c.l.b16 %v2498
    %v3055 = vunpack.c.h.b16 %v2498
    %v3056 = vunpack.c.l.b16 %v2499
    %v3057 = vunpack.c.l.b16 %v2500
    %v3058 = vunpack.c.h.b16 %v2500
    %v3059 = vunpack.c.l.b16 %v2501
    %v3060 = vunpack.c.h.b16 %v2501
    %v3061 = vunpack.c.l.b16 %v2502
    %v3062 = vunpack.c.h.b16 %v2502
    %v3063 = vunpack.c.l.b16 %v2503
    %v3064 = vunpack.c.l.b16 %v2504
    %v3065 = vunpack.c.h.b16 %v2504
    %v3066 = vunpack.c.l.b16 %v2505
    %v3067 = vunpack.c.h.b16 %v2505
    %v3068 = vunpack.c.l.b16 %v2506
    %v3069 = vunpack.c.h.b16 %v2506
    %v3070 = vunpack.c.l.b16 %v2507
    %v3071 = vunpack.c.l.b16 %v2508
    %v3072 = vunpack.c.h.b16 %v2508
    %v3073 = vunpack.c.l.b16 %v2509
    %v3074 = vunpack.c.h.b16 %v2509
    %v3075 = vunpack.c.l.b16 %v2510
    %v3076 = vunpack.c.h.b16 %v2510
    %v3077 = vunpack.c.l.b16 %v2511
    %v3078 = vpack.c.b16 %v2735, %v2728
    %v3079 = vpack.c.b16 %v2736, %v2729
    %v3080 = vpack.c.b16 %v2737, %v2730
    %v3081 = vpack.c.b16 %v2738, %v2731
    %v3082 = vpack.c.b16 %v2739, %v2732
    %v3083 = vpack.c.b16 %v2740, %v2733
    %v3084 = vpack.c.b16 %v2741, %v2734
    %v3085 = vpack.c.b16 %v2749, %v2742
    %v3086 = vpack.c.b16 %v2750, %v2743
    %v3087 = vpack.c.b16 %v2751, %v2744
    %v3088 = vpack.c.b16 %v2752, %v2745
    %v3089 = vpack.c.b16 %v2753, %v2746
    %v3090 = vpack.c.b16 %v2754, %v2747
    %v3091 = vpack.c.b16 %v2755, %v2748
    %v3092 = vpack.c.b16 %v2763, %v2756
    %v3093 = vpack.c.b16 %v2764, %v2757
    %v3094 = vpack.c.b16 %v2765, %v2758
    %v3095 = vpack.c.b16 %v2766, %v2759
    %v3096 = vpack.c.b16 %v2767, %v2760
    %v3097 = vpack.c.b16 %v2768, %v2761
    %v3098 = vpack.c.b16 %v2769, %v2762
    %v3099 = vpack.c.b16 %v2777, %v2770
    %v3100 = vpack.c.b16 %v2778, %v2771
    %v3101 = vpack.c.b16 %v2779, %v2772
    %v3102 = vpack.c.b16 %v2780, %v2773
    %v3103 = vpack.c.b16 %v2781, %v2774
    %v3104 = vpack.c.b16 %v2782, %v2775
    %v3105 = vpack.c.b16 %v2783, %v2776
    %v3106 = vpack.c.b16 %v2791, %v2784
    %v3107 = vpack.c.b16 %v2792, %v2785
    %v3108 = vpack.c.b16 %v2793, %v2786
    %v3109 = vpack.c.b16 %v2794, %v2787
    %v3110 = vpack.c.b16 %v2795, %v2788
    %v3111 = vpack.c.b16 %v2796, %v2789
    %v3112 = vpack.c.b16 %v2797, %v2790
    %v3113 = vpack.c.b16 %v2805, %v2798
    %v3114 = vpack.c.b16 %v2806, %v2799
    %v3115 = vpack.c.b16 %v2807, %v2800
    %v3116 = vpack.c.b16 %v2808, %v2801
    %v3117 = vpack.c.b16 %v2809, %v2802
    %v3118 = vpack.c.b16 %v2810, %v2803
    %v3119 = vpack.c.b16 %v2811, %v2804
    %v3120 = vpack.c.b16 %v2819, %v2812
    %v3121 = vpack.c.b16 %v2820, %v2813
    %v3122 = vpack.c.b16 %v2821, %v2814
    %v3123 = vpack.c.b16 %v2822, %v2815
    %v3124 = vpack.c.b16 %v2823, %v2816
    %v3125 = vpack.c.b16 %v2824, %v2817
    %v3126 = vpack.c.b16 %v2825, %v2818
    %v3127 = vpack.c.b16 %v2833, %v2826
    %v3128 = vpack.c.b16 %v2834, %v2827
    %v3129 = vpack.c.b16 %v2835, %v2828
    %v3130 = vpack.c.b16 %v2836, %v2829
    %v3131 = vpack.c.b16 %v2837, %v2830
    %v3132 = vpack.c.b16 %v2838, %v2831
    %v3133 = vpack.c.b16 %v2839, %v2832
    %v3134 = vpack.c.b16 %v2847, %v2840
    %v3135 = vpack.c.b16 %v2848, %v2841
    %v3136 = vpack.c.b16 %v2849, %v2842
    %v3137 = vpack.c.b16 %v2850, %v2843
    %v3138 = vpack.c.b16 %v2851, %v2844
    %v3139 = vpack.c.b16 %v2852, %v2845
    %v3140 = vpack.c.b16 %v2853, %v2846
    %v3141 = vpack.c.b16 %v2861, %v2854
    %v3142 = vpack.c.b16 %v2862, %v2855
    %v3143 = vpack.c.b16 %v2863, %v2856
    %v3144 = vpack.c.b16 %v2864, %v2857
    %v3145 = vpack.c.b16 %v2865, %v2858
    %v3146 = vpack.c.b16 %v2866, %v2859
    %v3147 = vpack.c.b16 %v2867, %v2860
    %v3148 = vpack.c.b16 %v2875, %v2868
    %v3149 = vpack.c.b16 %v2876, %v2869
    %v3150 = vpack.c.b16 %v2877, %v2870
    %v3151 = vpack.c.b16 %v2878, %v2871
    %v3152 = vpack.c.b16 %v2879, %v2872
    %v3153 = vpack.c.b16 %v2880, %v2873
    %v3154 = vpack.c.b16 %v2881, %v2874
    %v3155 = vpack.c.b16 %v2889, %v2882
    %v3156 = vpack.c.b16 %v2890, %v2883
    %v3157 = vpack.c.b16 %v2891, %v2884
    %v3158 = vpack.c.b16 %v2892, %v2885
    %v3159 = vpack.c.b16 %v2893, %v2886
    %v3160 = vpack.c.b16 %v2894, %v2887
    %v3161 = vpack.c.b16 %v2895, %v2888
    %v3162 = vpack.c.b16 %v2903, %v2896
    %v3163 = vpack.c.b16 %v2904, %v2897
    %v3164 = vpack.c.b16 %v2905, %v2898
    %v3165 = vpack.c.b16 %v2906, %v2899
    %v3166 = vpack.c.b16 %v2907, %v2900
    %v3167 = vpack.c.b16 %v2908, %v2901
    %v3168 = vpack.c.b16 %v2909, %v2902
    %v3169 = vpack.c.b16 %v2917, %v2910
    %v3170 = vpack.c.b16 %v2918, %v2911
    %v3171 = vpack.c.b16 %v2919, %v2912
    %v3172 = vpack.c.b16 %v2920, %v2913
    %v3173 = vpack.c.b16 %v2921, %v2914
    %v3174 = vpack.c.b16 %v2922, %v2915
    %v3175 = vpack.c.b16 %v2923, %v2916
    %v3176 = vpack.c.b16 %v2931, %v2924
    %v3177 = vpack.c.b16 %v2932, %v2925
    %v3178 = vpack.c.b16 %v2933, %v2926
    %v3179 = vpack.c.b16 %v2934, %v2927
    %v3180 = vpack.c.b16 %v2935, %v2928
    %v3181 = vpack.c.b16 %v2936, %v2929
    %v3182 = vpack.c.b16 %v2937, %v2930
    %v3183 = vpack.c.b16 %v2945, %v2938
    %v3184 = vpack.c.b16 %v2946, %v2939
    %v3185 = vpack.c.b16 %v2947, %v2940
    %v3186 = vpack.c.b16 %v2948, %v2941
    %v3187 = vpack.c.b16 %v2949, %v2942
    %v3188 = vpack.c.b16 %v2950, %v2943
    %v3189 = vpack.c.b16 %v2951, %v2944
    %v3190 = vpack.c.b16 %v2959, %v2952
    %v3191 = vpack.c.b16 %v2960, %v2953
    %v3192 = vpack.c.b16 %v2961, %v2954
    %v3193 = vpack.c.b16 %v2962, %v2955
    %v3194 = vpack.c.b16 %v2963, %v2956
    %v3195 = vpack.c.b16 %v2964, %v2957
    %v3196 = vpack.c.b16 %v2965, %v2958
    %v3197 = vpack.c.b16 %v2973, %v2966
    %v3198 = vpack.c.b16 %v2974, %v2967
    %v3199 = vpack.c.b16 %v2975, %v2968
    %v3200 = vpack.c.b16 %v2976, %v2969
    %v3201 = vpack.c.b16 %v2977, %v2970
    %v3202 = vpack.c.b16 %v2978, %v2971
    %v3203 = vpack.c.b16 %v2979, %v2972
    %v3204 = vpack.c.b16 %v2987, %v2980
    %v3205 = vpack.c.b16 %v2988, %v2981
    %v3206 = vpack.c.b16 %v2989, %v2982
    %v3207 = vpack.c.b16 %v2990, %v2983
    %v3208 = vpack.c.b16 %v2991, %v2984
    %v3209 = vpack.c.b16 %v2992, %v2985
    %v3210 = vpack.c.b16 %v2993, %v2986
    %v3211 = vpack.c.b16 %v3001, %v2994
    %v3212 = vpack.c.b16 %v3002, %v2995
    %v3213 = vpack.c.b16 %v3003, %v2996
    %v3214 = vpack.c.b16 %v3004, %v2997
    %v3215 = vpack.c.b16 %v3005, %v2998
    %v3216 = vpack.c.b16 %v3006, %v2999
    %v3217 = vpack.c.b16 %v3007, %v3000
    %v3218 = vpack.c.b16 %v3015, %v3008
    %v3219 = vpack.c.b16 %v3016, %v3009
    %v3220 = vpack.c.b16 %v3017, %v3010
    %v3221 = vpack.c.b16 %v3018, %v3011
    %v3222 = vpack.c.b16 %v3019, %v3012
    %v3223 = vpack.c.b16 %v3020, %v3013
    %v3224 = vpack.c.b16 %v3021, %v3014
    %v3225 = vpack.c.b16 %v3029, %v3022
    %v3226 = vpack.c.b16 %v3030, %v3023
    %v3227 = vpack.c.b16 %v3031, %v3024
    %v3228 = vpack.c.b16 %v3032, %v3025
    %v3229 = vpack.c.b16 %v3033, %v3026
    %v3230 = vpack.c.b16 %v3034, %v3027
    %v3231 = vpack.c.b16 %v3035, %v3028
    %v3232 = vpack.c.b16 %v3043, %v3036
    %v3233 = vpack.c.b16 %v3044, %v3037
    %v3234 = vpack.c.b16 %v3045, %v3038
    %v3235 = vpack.c.b16 %v3046, %v3039
    %v3236 = vpack.c.b16 %v3047, %v3040
    %v3237 = vpack.c.b16 %v3048, %v3041
    %v3238 = vpack.c.b16 %v3049, %v3042
    %v3239 = vpack.c.b16 %v3057, %v3050
    %v3240 = vpack.c.b16 %v3058, %v3051
    %v3241 = vpack.c.b16 %v3059, %v3052
    %v3242 = vpack.c.b16 %v3060, %v3053
    %v3243 = vpack.c.b16 %v3061, %v3054
    %v3244 = vpack.c.b16 %v3062, %v3055
    %v3245 = vpack.c.b16 %v3063, %v3056
    %v3246 = vpack.c.b16 %v3071, %v3064
    %v3247 = vpack.c.b16 %v3072, %v3065
    %v3248 = vpack.c.b16 %v3073, %v3066
    %v3249 = vpack.c.b16 %v3074, %v3067
    %v3250 = vpack.c.b16 %v3075, %v3068
    %v3251 = vpack.c.b16 %v3076, %v3069
    %v3252 = vpack.c.b16 %v3077, %v3070
    %v3429 = vsel %vm1254, %v2311, 0
    %3431 = vmatpush.bf16.msra.mxu0 %v3127
    %3432 = vmatpush.bf16.msra.mxu0 %v3120
    %3433 = vmatpush.bf16.msra.mxu0 %v3113
    %3434 = vmatpush.bf16.msra.mxu0 %v3106
    %3435 = vmatpush.bf16.msra.mxu0 %v3099
    %3436 = vmatpush.bf16.msra.mxu0 %v3092
    %3437 = vmatpush.bf16.msra.mxu0 %v3085
    %3438 = vmatpush.bf16.msra.mxu0 %v3078
    %3439 = vmatmul.bf16.gmra.mxu0 %v2308
    %v3440 = vpop.f32.mrf.mxu0
    %v3441 = vadd.f32 %v2514, %v3440
    %v3442 = vpop.f32.mrf.mxu0
    %3443 = vdwg.mxu0
    %3444 = vmatpush.bf16.msra.mxu0 %v3183
    %3445 = vmatpush.bf16.msra.mxu0 %v3176
    %3446 = vmatpush.bf16.msra.mxu0 %v3169
    %3447 = vmatpush.bf16.msra.mxu0 %v3162
    %3448 = vmatpush.bf16.msra.mxu0 %v3155
    %3449 = vmatpush.bf16.msra.mxu0 %v3148
    %3450 = vmatpush.bf16.msra.mxu0 %v3141
    %3451 = vmatpush.bf16.msra.mxu0 %v3134
    %3452 = vmatmul.bf16.gmra.mxu0 %v2309
    %v3453 = vpop.f32.mrf.mxu0
    %v3454 = vadd.f32 %v3441, %v3453
    %v3455 = vpop.f32.mrf.mxu0
    %3456 = vdwg.mxu0
    %3457 = vmatpush.bf16.msra.mxu0 %v3239
    %3458 = vmatpush.bf16.msra.mxu0 %v3232
    %3459 = vmatpush.bf16.msra.mxu0 %v3225
    %3460 = vmatpush.bf16.msra.mxu0 %v3218
    %3461 = vmatpush.bf16.msra.mxu0 %v3211
    %3462 = vmatpush.bf16.msra.mxu0 %v3204
    %3463 = vmatpush.bf16.msra.mxu0 %v3197
    %3464 = vmatpush.bf16.msra.mxu0 %v3190
    %3465 = vmatmul.bf16.gmra.mxu0 %v2310
    %v3466 = vpop.f32.mrf.mxu0
    %v3467 = vadd.f32 %v3454, %v3466
    %v3468 = vpop.f32.mrf.mxu0
    %3469 = vdwg.mxu0
    %3470 = vmatpush.bf16.msra.mxu0 0
    %3471 = vmatpush.bf16.msra.mxu0 0
    %3472 = vmatpush.bf16.msra.mxu0 0
    %3473 = vmatpush.bf16.msra.mxu0 0
    %3474 = vmatpush.bf16.msra.mxu0 0
    %3475 = vmatpush.bf16.msra.mxu0 0
    %3476 = vmatpush.bf16.msra.mxu0 0
    %3477 = vmatpush.bf16.msra.mxu0 %v3246
    %3478 = vmatmul.bf16.gmra.mxu0 %v3429
    %v3479 = vpop.f32.mrf.mxu0
    %v3480 = vadd.f32 %v3467, %v3479
    %v3481 = vpop.f32.mrf.mxu0
    %3482 = vdwg.mxu0
    %3483 = vmatpush.bf16.msra.mxu0 %v3128
    %3484 = vmatpush.bf16.msra.mxu0 %v3121
    %3485 = vmatpush.bf16.msra.mxu0 %v3114
    %3486 = vmatpush.bf16.msra.mxu0 %v3107
    %3487 = vmatpush.bf16.msra.mxu0 %v3100
    %3488 = vmatpush.bf16.msra.mxu0 %v3093
    %3489 = vmatpush.bf16.msra.mxu0 %v3086
    %3490 = vmatpush.bf16.msra.mxu0 %v3079
    %3491 = vmatmul.bf16.gmra.mxu0 %v2308
    %v3492 = vpop.f32.mrf.mxu0
    %v3493 = vadd.f32 %v2515, %v3492
    %v3494 = vpop.f32.mrf.mxu0
    %3495 = vdwg.mxu0
    %3496 = vmatpush.bf16.msra.mxu0 %v3184
    %3497 = vmatpush.bf16.msra.mxu0 %v3177
    %3498 = vmatpush.bf16.msra.mxu0 %v3170
    %3499 = vmatpush.bf16.msra.mxu0 %v3163
    %3500 = vmatpush.bf16.msra.mxu0 %v3156
    %3501 = vmatpush.bf16.msra.mxu0 %v3149
    %3502 = vmatpush.bf16.msra.mxu0 %v3142
    %3503 = vmatpush.bf16.msra.mxu0 %v3135
    %3504 = vmatmul.bf16.gmra.mxu0 %v2309
    %v3505 = vpop.f32.mrf.mxu0
    %v3506 = vadd.f32 %v3493, %v3505
    %v3507 = vpop.f32.mrf.mxu0
    %3508 = vdwg.mxu0
    %3509 = vmatpush.bf16.msra.mxu0 %v3240
    %3510 = vmatpush.bf16.msra.mxu0 %v3233
    %3511 = vmatpush.bf16.msra.mxu0 %v3226
    %3512 = vmatpush.bf16.msra.mxu0 %v3219
    %3513 = vmatpush.bf16.msra.mxu0 %v3212
    %3514 = vmatpush.bf16.msra.mxu0 %v3205
    %3515 = vmatpush.bf16.msra.mxu0 %v3198
    %3516 = vmatpush.bf16.msra.mxu0 %v3191
    %3517 = vmatmul.bf16.gmra.mxu0 %v2310
    %v3518 = vpop.f32.mrf.mxu0
    %v3519 = vadd.f32 %v3506, %v3518
    %v3520 = vpop.f32.mrf.mxu0
    %3521 = vdwg.mxu0
    %3522 = vmatpush.bf16.msra.mxu0 0
    %3523 = vmatpush.bf16.msra.mxu0 0
    %3524 = vmatpush.bf16.msra.mxu0 0
    %3525 = vmatpush.bf16.msra.mxu0 0
    %3526 = vmatpush.bf16.msra.mxu0 0
    %3527 = vmatpush.bf16.msra.mxu0 0
    %3528 = vmatpush.bf16.msra.mxu0 0
    %3529 = vmatpush.bf16.msra.mxu0 %v3247
    %3530 = vmatmul.bf16.gmra.mxu0 %v3429
    %v3531 = vpop.f32.mrf.mxu0
    %v3532 = vadd.f32 %v3519, %v3531
    %v3533 = vpop.f32.mrf.mxu0
    %3534 = vdwg.mxu0
    %3535 = vmatpush.bf16.msra.mxu0 %v3129
    %3536 = vmatpush.bf16.msra.mxu0 %v3122
    %3537 = vmatpush.bf16.msra.mxu0 %v3115
    %3538 = vmatpush.bf16.msra.mxu0 %v3108
    %3539 = vmatpush.bf16.msra.mxu0 %v3101
    %3540 = vmatpush.bf16.msra.mxu0 %v3094
    %3541 = vmatpush.bf16.msra.mxu0 %v3087
    %3542 = vmatpush.bf16.msra.mxu0 %v3080
    %3543 = vmatmul.bf16.gmra.mxu0 %v2308
    %v3544 = vpop.f32.mrf.mxu0
    %v3545 = vadd.f32 %v2516, %v3544
    %v3546 = vpop.f32.mrf.mxu0
    %3547 = vdwg.mxu0
    %3548 = vmatpush.bf16.msra.mxu0 %v3185
    %3549 = vmatpush.bf16.msra.mxu0 %v3178
    %3550 = vmatpush.bf16.msra.mxu0 %v3171
    %3551 = vmatpush.bf16.msra.mxu0 %v3164
    %3552 = vmatpush.bf16.msra.mxu0 %v3157
    %3553 = vmatpush.bf16.msra.mxu0 %v3150
    %3554 = vmatpush.bf16.msra.mxu0 %v3143
    %3555 = vmatpush.bf16.msra.mxu0 %v3136
    %3556 = vmatmul.bf16.gmra.mxu0 %v2309
    %v3557 = vpop.f32.mrf.mxu0
    %v3558 = vadd.f32 %v3545, %v3557
    %v3559 = vpop.f32.mrf.mxu0
    %3560 = vdwg.mxu0
    %3561 = vmatpush.bf16.msra.mxu0 %v3241
    %3562 = vmatpush.bf16.msra.mxu0 %v3234
    %3563 = vmatpush.bf16.msra.mxu0 %v3227
    %3564 = vmatpush.bf16.msra.mxu0 %v3220
    %3565 = vmatpush.bf16.msra.mxu0 %v3213
    %3566 = vmatpush.bf16.msra.mxu0 %v3206
    %3567 = vmatpush.bf16.msra.mxu0 %v3199
    %3568 = vmatpush.bf16.msra.mxu0 %v3192
    %3569 = vmatmul.bf16.gmra.mxu0 %v2310
    %v3570 = vpop.f32.mrf.mxu0
    %v3571 = vadd.f32 %v3558, %v3570
    %v3572 = vpop.f32.mrf.mxu0
    %3573 = vdwg.mxu0
    %3574 = vmatpush.bf16.msra.mxu0 0
    %3575 = vmatpush.bf16.msra.mxu0 0
    %3576 = vmatpush.bf16.msra.mxu0 0
    %3577 = vmatpush.bf16.msra.mxu0 0
    %3578 = vmatpush.bf16.msra.mxu0 0
    %3579 = vmatpush.bf16.msra.mxu0 0
    %3580 = vmatpush.bf16.msra.mxu0 0
    %3581 = vmatpush.bf16.msra.mxu0 %v3248
    %3582 = vmatmul.bf16.gmra.mxu0 %v3429
    %v3583 = vpop.f32.mrf.mxu0
    %v3584 = vadd.f32 %v3571, %v3583
    %v3585 = vpop.f32.mrf.mxu0
    %3586 = vdwg.mxu0
    %3587 = vmatpush.bf16.msra.mxu0 %v3130
    %3588 = vmatpush.bf16.msra.mxu0 %v3123
    %3589 = vmatpush.bf16.msra.mxu0 %v3116
    %3590 = vmatpush.bf16.msra.mxu0 %v3109
    %3591 = vmatpush.bf16.msra.mxu0 %v3102
    %3592 = vmatpush.bf16.msra.mxu0 %v3095
    %3593 = vmatpush.bf16.msra.mxu0 %v3088
    %3594 = vmatpush.bf16.msra.mxu0 %v3081
    %3595 = vmatmul.bf16.gmra.mxu0 %v2308
    %v3596 = vpop.f32.mrf.mxu0
    %v3597 = vadd.f32 %v2517, %v3596
    %v3598 = vpop.f32.mrf.mxu0
    %3599 = vdwg.mxu0
    %3600 = vmatpush.bf16.msra.mxu0 %v3186
    %3601 = vmatpush.bf16.msra.mxu0 %v3179
    %3602 = vmatpush.bf16.msra.mxu0 %v3172
    %3603 = vmatpush.bf16.msra.mxu0 %v3165
    %3604 = vmatpush.bf16.msra.mxu0 %v3158
    %3605 = vmatpush.bf16.msra.mxu0 %v3151
    %3606 = vmatpush.bf16.msra.mxu0 %v3144
    %3607 = vmatpush.bf16.msra.mxu0 %v3137
    %3608 = vmatmul.bf16.gmra.mxu0 %v2309
    %v3609 = vpop.f32.mrf.mxu0
    %v3610 = vadd.f32 %v3597, %v3609
    %v3611 = vpop.f32.mrf.mxu0
    %3612 = vdwg.mxu0
    %3613 = vmatpush.bf16.msra.mxu0 %v3242
    %3614 = vmatpush.bf16.msra.mxu0 %v3235
    %3615 = vmatpush.bf16.msra.mxu0 %v3228
    %3616 = vmatpush.bf16.msra.mxu0 %v3221
    %3617 = vmatpush.bf16.msra.mxu0 %v3214
    %3618 = vmatpush.bf16.msra.mxu0 %v3207
    %3619 = vmatpush.bf16.msra.mxu0 %v3200
    %3620 = vmatpush.bf16.msra.mxu0 %v3193
    %3621 = vmatmul.bf16.gmra.mxu0 %v2310
    %v3622 = vpop.f32.mrf.mxu0
    %v3623 = vadd.f32 %v3610, %v3622
    %v3624 = vpop.f32.mrf.mxu0
    %3625 = vdwg.mxu0
    %3626 = vmatpush.bf16.msra.mxu0 0
    %3627 = vmatpush.bf16.msra.mxu0 0
    %3628 = vmatpush.bf16.msra.mxu0 0
    %3629 = vmatpush.bf16.msra.mxu0 0
    %3630 = vmatpush.bf16.msra.mxu0 0
    %3631 = vmatpush.bf16.msra.mxu0 0
    %3632 = vmatpush.bf16.msra.mxu0 0
    %3633 = vmatpush.bf16.msra.mxu0 %v3249
    %3634 = vmatmul.bf16.gmra.mxu0 %v3429
    %v3635 = vpop.f32.mrf.mxu0
    %v3636 = vadd.f32 %v3623, %v3635
    %v3637 = vpop.f32.mrf.mxu0
    %3638 = vdwg.mxu0
    %3639 = vmatpush.bf16.msra.mxu0 %v3131
    %3640 = vmatpush.bf16.msra.mxu0 %v3124
    %3641 = vmatpush.bf16.msra.mxu0 %v3117
    %3642 = vmatpush.bf16.msra.mxu0 %v3110
    %3643 = vmatpush.bf16.msra.mxu0 %v3103
    %3644 = vmatpush.bf16.msra.mxu0 %v3096
    %3645 = vmatpush.bf16.msra.mxu0 %v3089
    %3646 = vmatpush.bf16.msra.mxu0 %v3082
    %3647 = vmatmul.bf16.gmra.mxu0 %v2308
    %v3648 = vpop.f32.mrf.mxu0
    %v3649 = vadd.f32 %v2518, %v3648
    %v3650 = vpop.f32.mrf.mxu0
    %3651 = vdwg.mxu0
    %3652 = vmatpush.bf16.msra.mxu0 %v3187
    %3653 = vmatpush.bf16.msra.mxu0 %v3180
    %3654 = vmatpush.bf16.msra.mxu0 %v3173
    %3655 = vmatpush.bf16.msra.mxu0 %v3166
    %3656 = vmatpush.bf16.msra.mxu0 %v3159
    %3657 = vmatpush.bf16.msra.mxu0 %v3152
    %3658 = vmatpush.bf16.msra.mxu0 %v3145
    %3659 = vmatpush.bf16.msra.mxu0 %v3138
    %3660 = vmatmul.bf16.gmra.mxu0 %v2309
    %v3661 = vpop.f32.mrf.mxu0
    %v3662 = vadd.f32 %v3649, %v3661
    %v3663 = vpop.f32.mrf.mxu0
    %3664 = vdwg.mxu0
    %3665 = vmatpush.bf16.msra.mxu0 %v3243
    %3666 = vmatpush.bf16.msra.mxu0 %v3236
    %3667 = vmatpush.bf16.msra.mxu0 %v3229
    %3668 = vmatpush.bf16.msra.mxu0 %v3222
    %3669 = vmatpush.bf16.msra.mxu0 %v3215
    %3670 = vmatpush.bf16.msra.mxu0 %v3208
    %3671 = vmatpush.bf16.msra.mxu0 %v3201
    %3672 = vmatpush.bf16.msra.mxu0 %v3194
    %3673 = vmatmul.bf16.gmra.mxu0 %v2310
    %v3674 = vpop.f32.mrf.mxu0
    %v3675 = vadd.f32 %v3662, %v3674
    %v3676 = vpop.f32.mrf.mxu0
    %3677 = vdwg.mxu0
    %3678 = vmatpush.bf16.msra.mxu0 0
    %3679 = vmatpush.bf16.msra.mxu0 0
    %3680 = vmatpush.bf16.msra.mxu0 0
    %3681 = vmatpush.bf16.msra.mxu0 0
    %3682 = vmatpush.bf16.msra.mxu0 0
    %3683 = vmatpush.bf16.msra.mxu0 0
    %3684 = vmatpush.bf16.msra.mxu0 0
    %3685 = vmatpush.bf16.msra.mxu0 %v3250
    %3686 = vmatmul.bf16.gmra.mxu0 %v3429
    %v3687 = vpop.f32.mrf.mxu0
    %v3688 = vadd.f32 %v3675, %v3687
    %v3689 = vpop.f32.mrf.mxu0
    %3690 = vdwg.mxu0
    %3691 = vmatpush.bf16.msra.mxu0 %v3132
    %3692 = vmatpush.bf16.msra.mxu0 %v3125
    %3693 = vmatpush.bf16.msra.mxu0 %v3118
    %3694 = vmatpush.bf16.msra.mxu0 %v3111
    %3695 = vmatpush.bf16.msra.mxu0 %v3104
    %3696 = vmatpush.bf16.msra.mxu0 %v3097
    %3697 = vmatpush.bf16.msra.mxu0 %v3090
    %3698 = vmatpush.bf16.msra.mxu0 %v3083
    %3699 = vmatmul.bf16.gmra.mxu0 %v2308
    %v3700 = vpop.f32.mrf.mxu0
    %v3701 = vadd.f32 %v2519, %v3700
    %v3702 = vpop.f32.mrf.mxu0
    %3703 = vdwg.mxu0
    %3704 = vmatpush.bf16.msra.mxu0 %v3188
    %3705 = vmatpush.bf16.msra.mxu0 %v3181
    %3706 = vmatpush.bf16.msra.mxu0 %v3174
    %3707 = vmatpush.bf16.msra.mxu0 %v3167
    %3708 = vmatpush.bf16.msra.mxu0 %v3160
    %3709 = vmatpush.bf16.msra.mxu0 %v3153
    %3710 = vmatpush.bf16.msra.mxu0 %v3146
    %3711 = vmatpush.bf16.msra.mxu0 %v3139
    %3712 = vmatmul.bf16.gmra.mxu0 %v2309
    %v3713 = vpop.f32.mrf.mxu0
    %v3714 = vadd.f32 %v3701, %v3713
    %v3715 = vpop.f32.mrf.mxu0
    %3716 = vdwg.mxu0
    %3717 = vmatpush.bf16.msra.mxu0 %v3244
    %3718 = vmatpush.bf16.msra.mxu0 %v3237
    %3719 = vmatpush.bf16.msra.mxu0 %v3230
    %3720 = vmatpush.bf16.msra.mxu0 %v3223
    %3721 = vmatpush.bf16.msra.mxu0 %v3216
    %3722 = vmatpush.bf16.msra.mxu0 %v3209
    %3723 = vmatpush.bf16.msra.mxu0 %v3202
    %3724 = vmatpush.bf16.msra.mxu0 %v3195
    %3725 = vmatmul.bf16.gmra.mxu0 %v2310
    %v3726 = vpop.f32.mrf.mxu0
    %v3727 = vadd.f32 %v3714, %v3726
    %v3728 = vpop.f32.mrf.mxu0
    %3729 = vdwg.mxu0
    %3730 = vmatpush.bf16.msra.mxu0 0
    %3731 = vmatpush.bf16.msra.mxu0 0
    %3732 = vmatpush.bf16.msra.mxu0 0
    %3733 = vmatpush.bf16.msra.mxu0 0
    %3734 = vmatpush.bf16.msra.mxu0 0
    %3735 = vmatpush.bf16.msra.mxu0 0
    %3736 = vmatpush.bf16.msra.mxu0 0
    %3737 = vmatpush.bf16.msra.mxu0 %v3251
    %3738 = vmatmul.bf16.gmra.mxu0 %v3429
    %v3739 = vpop.f32.mrf.mxu0
    %v3740 = vadd.f32 %v3727, %v3739
    %v3741 = vpop.f32.mrf.mxu0
    %3742 = vdwg.mxu0
    %3743 = vmatpush.bf16.msra.mxu0 %v3133
    %3744 = vmatpush.bf16.msra.mxu0 %v3126
    %3745 = vmatpush.bf16.msra.mxu0 %v3119
    %3746 = vmatpush.bf16.msra.mxu0 %v3112
    %3747 = vmatpush.bf16.msra.mxu0 %v3105
    %3748 = vmatpush.bf16.msra.mxu0 %v3098
    %3749 = vmatpush.bf16.msra.mxu0 %v3091
    %3750 = vmatpush.bf16.msra.mxu0 %v3084
    %3751 = vmatmul.bf16.gmra.mxu0 %v2308
    %v3752 = vpop.f32.mrf.mxu0
    %v3753 = vadd.f32 %v2520, %v3752
    %v3754 = vpop.f32.mrf.mxu0
    %3755 = vdwg.mxu0
    %3756 = vmatpush.bf16.msra.mxu0 %v3189
    %3757 = vmatpush.bf16.msra.mxu0 %v3182
    %3758 = vmatpush.bf16.msra.mxu0 %v3175
    %3759 = vmatpush.bf16.msra.mxu0 %v3168
    %3760 = vmatpush.bf16.msra.mxu0 %v3161
    %3761 = vmatpush.bf16.msra.mxu0 %v3154
    %3762 = vmatpush.bf16.msra.mxu0 %v3147
    %3763 = vmatpush.bf16.msra.mxu0 %v3140
    %3764 = vmatmul.bf16.gmra.mxu0 %v2309
    %v3765 = vpop.f32.mrf.mxu0
    %v3766 = vadd.f32 %v3753, %v3765
    %v3767 = vpop.f32.mrf.mxu0
    %3768 = vdwg.mxu0
    %3769 = vmatpush.bf16.msra.mxu0 %v3245
    %3770 = vmatpush.bf16.msra.mxu0 %v3238
    %3771 = vmatpush.bf16.msra.mxu0 %v3231
    %3772 = vmatpush.bf16.msra.mxu0 %v3224
    %3773 = vmatpush.bf16.msra.mxu0 %v3217
    %3774 = vmatpush.bf16.msra.mxu0 %v3210
    %3775 = vmatpush.bf16.msra.mxu0 %v3203
    %3776 = vmatpush.bf16.msra.mxu0 %v3196
    %3777 = vmatmul.bf16.gmra.mxu0 %v2310
    %v3778 = vpop.f32.mrf.mxu0
    %v3779 = vadd.f32 %v3766, %v3778
    %v3780 = vpop.f32.mrf.mxu0
    %3781 = vdwg.mxu0
    %3782 = vmatpush.bf16.msra.mxu0 0
    %3783 = vmatpush.bf16.msra.mxu0 0
    %3784 = vmatpush.bf16.msra.mxu0 0
    %3785 = vmatpush.bf16.msra.mxu0 0
    %3786 = vmatpush.bf16.msra.mxu0 0
    %3787 = vmatpush.bf16.msra.mxu0 0
    %3788 = vmatpush.bf16.msra.mxu0 0
    %3789 = vmatpush.bf16.msra.mxu0 %v3252
    %3790 = vmatmul.bf16.gmra.mxu0 %v3429
    %v3791 = vpop.f32.mrf.mxu0
    %v3792 = vadd.f32 %v3779, %v3791
    %v3793 = vpop.f32.mrf.mxu0
    %3794 = vdwg.mxu0
    %v3795 = vsub.f32 0.0, %v3480
    %v3796 = vsub.f32 0.0, %v3532
    %v3797 = vsub.f32 0.0, %v3584
    %v3798 = vsub.f32 0.0, %v3636
    %v3799 = vsub.f32 0.0, %v3688
    %v3800 = vsub.f32 0.0, %v3740
    %v3801 = vsub.f32 0.0, %v3792
    %v3802 = vmul.f32 %v3795, 1.442695
    %v3803 = vpow.pop %v3802
    %v3804 = vmul.f32 %v3796, 1.442695
    %v3805 = vpow.pop %v3804
    %v3806 = vmul.f32 %v3797, 1.442695
    %v3807 = vpow.pop %v3806
    %v3808 = vmul.f32 %v3798, 1.442695
    %v3809 = vpow.pop %v3808
    %v3810 = vmul.f32 %v3799, 1.442695
    %v3811 = vpow.pop %v3810
    %v3812 = vmul.f32 %v3800, 1.442695
    %v3813 = vpow.pop %v3812
    %v3814 = vmul.f32 %v3801, 1.442695
    %v3815 = vpow.pop %v3814
    %v3816 = vadd.f32 %v3803, 1.0
    %v3817 = vadd.f32 %v3805, 1.0
    %v3818 = vadd.f32 %v3807, 1.0
    %v3819 = vadd.f32 %v3809, 1.0
    %v3820 = vadd.f32 %v3811, 1.0
    %v3821 = vadd.f32 %v3813, 1.0
    %v3822 = vadd.f32 %v3815, 1.0
    %v3823 = vrcp.pop %v3816
    %v3824 = vrcp.pop %v3817
    %v3825 = vrcp.pop %v3818
    %v3826 = vrcp.pop %v3819
    %v3827 = vrcp.pop %v3820
    %v3828 = vrcp.pop %v3821
    %v3829 = vrcp.pop %v3822
    %3830 = vst [vmem:[#allocation2] sm:$0xff] %v3823
    %3831 = vst [vmem:[#allocation2 + $0x8] sm:$0xff] %v3824
    %3832 = vst [vmem:[#allocation2 + $0x10] sm:$0xff] %v3825
    %3833 = vst [vmem:[#allocation2 + $0x18] sm:$0xff] %v3826
    %3834 = vst [vmem:[#allocation2 + $0x20] sm:$0xff] %v3827
    %3835 = vst [vmem:[#allocation2 + $0x28] sm:$0xff] %v3828
    %3836 = vst [vmem:[#allocation2 + $0x30] sm:$0xff] %v3829
    %3837 = vst [vmem:[#allocation4] sm:$0xff] %v1988
    %3838 = vst [vmem:[#allocation4 + $0x8] sm:$0xff] %v2040
    // Predicated region
    $region42: #{tpu_custom_call.1} parent=1 // pred_check
      _
    $region43: #{tpu_custom_call.1} parent=1 // pred_check_branch
      %3840 = sbr.rel (0) target = $region45
    $region44: #{tpu_custom_call.1} parent=1 // pred_region
      %3842 = vsyncadd [#allocation3], 0
      %s3844 = sshll.u32 [#allocation2], 4
      %s3845 = int_to_ptr.vmem [resolvable:$true] %s3844
      %s3846 = sshll.u32 %s10, 4
      %s3847 = int_to_ptr.hbm [resolvable:$true] %s3846
      %3849 = dma.vmem_to_hbm [thread:$0]  %s3845, 896, %s3847, [#allocation3]
    $region45: #{tpu_custom_call.1} parent=1 // pred_fallthru
      _
    // Predicated region
    $region46: #{tpu_custom_call.1} parent=1 // pred_check
      _
    $region47: #{tpu_custom_call.1} parent=1 // pred_check_branch
      %3851 = sbr.rel (0) target = $region49
    $region48: #{tpu_custom_call.1} parent=1 // pred_region
      %3853 = vsyncadd [#allocation5], 0
      %s3855 = sshll.u32 [#allocation4], 4
      %s3856 = int_to_ptr.vmem [resolvable:$true] %s3855
      %s3857 = sshll.u32 %s11, 4
      %s3858 = int_to_ptr.hbm [resolvable:$true] %s3857
      %3860 = dma.vmem_to_hbm [thread:$0]  %s3856, 256, %s3858, [#allocation5]
    $region49: #{tpu_custom_call.1} parent=1 // pred_fallthru
      _
    // Predicated region
    $region50: #{tpu_custom_call.1} parent=1 // pred_check
      _
    $region51: #{tpu_custom_call.1} parent=1 // pred_check_branch
      %3862 = sbr.rel (0) target = $region53
    $region52: #{tpu_custom_call.1} parent=1 // pred_region
      %3864 = dma.done [#allocation3], 896
    $region53: #{tpu_custom_call.1} parent=1 // pred_fallthru
      _
    // Predicated region
    $region54: #{tpu_custom_call.1} parent=1 // pred_check
      _
    $region55: #{tpu_custom_call.1} parent=1 // pred_check_branch
      %3866 = sbr.rel (0) target = $region57
    $region56: #{tpu_custom_call.1} parent=1 // pred_region
      %3868 = dma.done [#allocation5], 256
    $region57: #{tpu_custom_call.1} parent=1 // pred_fallthru
      _
    %3869 = vsyncpa [#allocation3], 1
    %3870 = vsyncpa [#allocation5], 1

</llo_original>
